<compile_context>
chip_gen: v7x
topology: tpu7x:2x2x1
jax: 0.10.0
libtpu: 0.0.40
codegen_flags: <defaults>
</compile_context>

<pallas_src>
import math
from typing import NamedTuple

import numpy as np
import jax
import jax.numpy as jnp
from jax import lax
from jax.experimental import pallas as pl
from jax.experimental.pallas import tpu as pltpu

# ----------------------- synthetic "neurochem constants" -----------------------
NUM_SPECIES = 4            # e.g. H, C, N, O
C, A = 2, 8                # conformers, atoms per conformer (padded with species = -1)

RCR, ETAR = 5.2, 16.0
SHFR = [float(v) for v in np.linspace(0.9, 4.6, 8)]
RCA, ETAA = 3.5, 8.0
ZETA = 8                   # integer zeta -> power by repeated squaring inside the kernel
SHFA = [float(v) for v in np.linspace(0.9, 2.2, 2)]
SHFZ = [float(v) for v in (np.linspace(0.0, math.pi, 4, endpoint=False) + math.pi / 8.0)]
COSZ = [math.cos(t) for t in SHFZ]
SINZ = [math.sin(t) for t in SHFZ]

N_SHFR, N_SHFA, N_SHFZ = len(SHFR), len(SHFA), len(SHFZ)
N_ANG_NM = N_SHFA * N_SHFZ
SPECIES_PAIRS = [(a, b) for a in range(NUM_SPECIES) for b in range(a, NUM_SPECIES)]
NUM_PAIRS = len(SPECIES_PAIRS)
RADIAL_LEN = N_SHFR * NUM_SPECIES
ANGULAR_LEN = N_ANG_NM * NUM_PAIRS
AEV_DIM = RADIAL_LEN + ANGULAR_LEN          # 32 + 80 = 112
AEV_PAD = 128                               # lane-dense padded AEV width (one unmasked store)

H1, H2 = 64, 32
CELU_ALPHA = 0.1

# ----------------------------- small math helpers ------------------------------
_COS_COEFFS = [(-1.0) ** n / math.factorial(2 * n) for n in range(8, -1, -1)]


def _cos_approx(x):
    """cos(x) for |x| <= pi via an even Horner polynomial (|err| < 5e-6)."""
    u = x * x
    p = _COS_COEFFS[0]
    for a in _COS_COEFFS[1:]:
        p = p * u + a
    return p


def _cutoff(r, rc):
    return jnp.where(r <= rc, 0.5 * _cos_approx((math.pi / rc) * r) + 0.5, 0.0)


def _pow_zeta(x):          # x ** ZETA with ZETA == 8
    x2 = x * x
    x4 = x2 * x2
    return x4 * x4


def _celu(x):
    return jnp.maximum(x, 0.0) + CELU_ALPHA * (jnp.exp(jnp.minimum(x, 0.0) / CELU_ALPHA) - 1.0)


def _build_pair_mix() -> np.ndarray:
    """cmat[s, a, p]: coefficient of [species_k == s] in the per-k mixing matrix B_k[a, p]."""
    cmat = np.zeros((NUM_SPECIES, NUM_SPECIES, NUM_PAIRS), np.float32)
    for p, (a, b) in enumerate(SPECIES_PAIRS):
        if a == b:
            cmat[a, a, p] = 0.5
        else:
            cmat[b, a, p] = 0.5
            cmat[a, b, p] = 0.5
    return cmat


_PAIR_MIX = _build_pair_mix()


# ======================= fused AEV + NN + shifter Pallas kernel =======================
def _fused_kernel(species_ref, coords_ref, oh_ref, cmat_ref,
                  w1_ref, b1_ref, w2_ref, b2_ref, w3_ref, b3_ref,
                  aev_ref, energy_ref):
    conf = pl.program_id(0)
    f32 = jnp.float32
    c = coords_ref[0]                        # (A, 3)
    oh = oh_ref[0]                           # (A, S) one-hot species (all-zero row = padding)
    a_n = c.shape[0]

    def outer(u, v):                         # contracts the last axis: u @ v.T
        return lax.dot_general(u, v, (((1,), (1,)), ((), ())),
                               preferred_element_type=f32)

    ones = jnp.ones((a_n, 1), f32)
    # pairwise squared distances from one Gram matrix (K=3) instead of 3 K=1 outer products
    gram = outer(c, c)                                            # (A, A)
    sq = jnp.sum(c * c, axis=1, keepdims=True)                    # (A, 1)
    r2 = jnp.maximum(sq + outer(ones, sq) - 2.0 * gram, 0.0)      # [i,j] = |x_i - x_j|^2
    r = jnp.sqrt(r2)

    rows = lax.broadcasted_iota(jnp.int32, (a_n, a_n), 0)
    cols = lax.broadcasted_iota(jnp.int32, (a_n, a_n), 1)
    neq = (rows != cols).astype(f32)
    valid = jnp.sum(oh, axis=1, keepdims=True)                    # 1 real atom, 0 padding
    pmask = neq * outer(valid, valid)                             # i != j, both real

    fcr = _cutoff(r, RCR)
    fca = _cutoff(r, RCA)

    # ---- radial: all ShfR terms row-stacked -> one (N_SHFR*A, A) x (A, S) matmul ----
    wrad = 0.25 * fcr * pmask
    t_stack = jnp.concatenate(
        [jnp.exp(-ETAR * (r - shfr) ** 2) * wrad for shfr in SHFR], axis=0)   # (N_SHFR*A, A)
    rad_rows = jnp.dot(t_stack, oh, preferred_element_type=f32)              # (N_SHFR*A, S)

    # ---- angular: per third atom k, one stacked matmul against the pair-mixed one-hot ----
    acc = jnp.zeros((N_ANG_NM * a_n, NUM_PAIRS), f32)
    for k in range(a_n):
        sk = species_ref[conf, k]                                  # SMEM scalar
        valid_k = (sk >= 0).astype(f32)
        bk = cmat_ref[jnp.maximum(sk, 0)]                          # (S, P) clamped dynamic row
        ohk = jnp.dot(oh, bk, preferred_element_type=f32)          # (A, P): species mixing hoisted

        r_ik = r[:, k:k + 1]
        # rij . rik via the law of cosines: (|rij|^2 + |rik|^2 - |rjk|^2) / 2
        dotp = 0.5 * (r2 + r2[:, k:k + 1] - r2[k:k + 1, :])
        den = r * r_ik + 1e-10
        inv = pl.reciprocal(den, approx=True)
        inv = inv * (2.0 - den * inv)                              # one Newton step (fp32-safe)
        cos_t = 0.95 * dotp * inv
        sin_t = jnp.sqrt(jnp.maximum(1.0 - cos_t * cos_t, 0.0))
        ravg = 0.5 * (r + r_ik)
        mask = pmask * neq[:, k:k + 1] * neq[k:k + 1, :] * valid_k  # i != j != k, all real
        base = 2.0 * (fca * fca[:, k:k + 1]) * mask

        f2 = [jnp.exp(-ETAA * (ravg - shfa) ** 2) for shfa in SHFA]
        pu = [_pow_zeta((1.0 + cos_t * cz + sin_t * sz) * 0.5) for cz, sz in zip(COSZ, SINZ)]
        term = jnp.concatenate(
            [base * pu[m] * f2[n] for n in range(N_SHFA) for m in range(N_SHFZ)],
            axis=0)                                                # (N_ANG_NM*A, A)
        acc = acc + jnp.dot(term, ohk, preferred_element_type=f32)  # (N_ANG_NM*A, P)

    # ---- single lane-dense AEV in final [radial | angular | pad] layout, written once ----
    pieces = [rad_rows[m * a_n:(m + 1) * a_n, :] for m in range(N_SHFR)]
    pieces += [acc[idx * a_n:(idx + 1) * a_n, :] for idx in range(N_ANG_NM)]
    pieces += [jnp.zeros((a_n, AEV_PAD - AEV_DIM), f32)]
    aev = jnp.concatenate(pieces, axis=1)                          # (A, 128)
    aev_ref[0] = aev

    # ---- fused per-species MLP (concatenated / block-diagonal weights) + EnergyShifter ----
    h1 = _celu(jnp.dot(aev, w1_ref[...], preferred_element_type=jnp.float32) + b1_ref[...])
    h2 = _celu(jnp.dot(h1, w2_ref[...], preferred_element_type=jnp.float32) + b2_ref[...])
    e_all = jnp.dot(h2, w3_ref[...], preferred_element_type=jnp.float32) + b3_ref[...]   # (A, S)
    # one-hot selects the right species network; padding atoms (all-zero row) contribute 0.
    atom_e = jnp.sum(e_all * oh, axis=1, keepdims=True)                                  # (A, 1)
    energy_ref[0] = jnp.sum(atom_e, axis=0, keepdims=True)                               # (1, 1)


def _rep_spec(shape):
    zeros = (0,) * len(shape)
    return pl.BlockSpec(shape, lambda i, sp: zeros)


def fused_forward(species, coordinates, onehot, net):
    """One pallas_call: AEVComputer + ANIModel + EnergyShifter, one grid step per conformer."""
    c_n, a_n = species.shape
    grid_spec = pltpu.PrefetchScalarGridSpec(
        num_scalar_prefetch=1,
        grid=(c_n,),
        in_specs=[
            pl.BlockSpec((1, a_n, 3), lambda i, sp: (i, 0, 0)),
            pl.BlockSpec((1, a_n, NUM_SPECIES), lambda i, sp: (i, 0, 0)),
            _rep_spec((NUM_SPECIES, NUM_SPECIES, NUM_PAIRS)),
            _rep_spec((AEV_PAD, NUM_SPECIES * H1)),
            _rep_spec((1, NUM_SPECIES * H1)),
            _rep_spec((NUM_SPECIES * H1, NUM_SPECIES * H2)),
            _rep_spec((1, NUM_SPECIES * H2)),
            _rep_spec((NUM_SPECIES * H2, NUM_SPECIES)),
            _rep_spec((1, NUM_SPECIES)),
        ],
        out_specs=(
            pl.BlockSpec((1, a_n, AEV_PAD), lambda i, sp: (i, 0, 0)),
            pl.BlockSpec((1, 1, 1), lambda i, sp: (i, 0, 0)),
        ),
    )
    aev_pad, energy = pl.pallas_call(
        _fused_kernel,
        grid_spec=grid_spec,
        out_shape=(
            jax.ShapeDtypeStruct((c_n, a_n, AEV_PAD), jnp.float32),
            jax.ShapeDtypeStruct((c_n, 1, 1), jnp.float32),
        ),
        compiler_params=pltpu.CompilerParams(dimension_semantics=("parallel",)),
    )(species, coordinates, onehot, jnp.asarray(_PAIR_MIX),
      net["w1"], net["b1"], net["w2"], net["b2"], net["w3"], net["b3"])
    return aev_pad, energy.reshape(c_n)


# ---------------- host-side (once per model) fusion of the per-species networks ----------------
def _block_diag(blocks):
    n = len(blocks)
    rows = []
    for i, b in enumerate(blocks):
        row = [b if j == i else jnp.zeros((b.shape[0], blocks[j].shape[1]), b.dtype)
               for j in range(n)]
        rows.append(jnp.concatenate(row, axis=1))
    return jnp.concatenate(rows, axis=0)


def fuse_network_params(params):
    s = NUM_SPECIES
    w1 = jnp.concatenate([params["w1"][i] for i in range(s)], axis=1)       # (AEV_DIM, S*H1)
    w1 = jnp.pad(w1, ((0, AEV_PAD - AEV_DIM), (0, 0)))                       # zero rows for AEV pad lanes
    b1 = jnp.concatenate([params["b1"][i] for i in range(s)], axis=1)        # (1, S*H1)
    w2 = _block_diag([params["w2"][i] for i in range(s)])                    # (S*H1, S*H2)
    b2 = jnp.concatenate([params["b2"][i] for i in range(s)], axis=1)        # (1, S*H2)
    w3 = _block_diag([params["w3"][i] for i in range(s)])                    # (S*H2, S)
    # EnergyShifter: per-species self energies folded into the last bias; the one-hot select
    # in-kernel zeroes both NN energy and self energy for padding atoms (torchani semantics).
    b3 = jnp.concatenate([params["b3"][i] for i in range(s)], axis=1) + params["sae"].T   # (1, S)
    return {"w1": w1, "b1": b1, "w2": w2, "b2": b2, "w3": w3, "b3": b3}


# =============================== BuiltinModel.forward ==============================
class SpeciesEnergies(NamedTuple):
    species: jax.Array
    energies: jax.Array


def builtin_model_forward(species_coordinates, fused_net, cell=None, pbc=None):
    """JAX/Pallas analogue of BuiltinModel.forward (periodic_table_index=False)."""
    species, coordinates = species_coordinates
    if cell is not None or pbc is not None:
        raise NotImplementedError("PBC path not implemented")   # TODO(synk)
    if np.any(np.asarray(species) >= NUM_SPECIES):
        raise ValueError(f"Unknown species found in {species}")
    onehot = jax.nn.one_hot(species, NUM_SPECIES, dtype=jnp.float32)
    _, energies = fused_forward(species.astype(jnp.int32),
                                coordinates.astype(jnp.float32), onehot, fused_net)
    return SpeciesEnergies(species, energies)


# ================================ plain-JAX reference ==============================
def reference_aev(species, coords):
    oh = jax.nn.one_hot(species, NUM_SPECIES, dtype=jnp.float32)
    valid = (species >= 0).astype(jnp.float32)
    c_n, a_n = species.shape
    diff = coords[:, None, :, :] - coords[:, :, None, :]         # [c,i,j] = x_j - x_i
    r2 = jnp.sum(diff * diff, axis=-1)
    r = jnp.sqrt(r2)
    neq = 1.0 - jnp.eye(a_n, dtype=jnp.float32)
    pmask = neq[None] * valid[:, :, None] * valid[:, None, :]
    fcr = _cutoff(r, RCR)
    fca = _cutoff(r, RCA)

    shfr = jnp.asarray(SHFR, jnp.float32)
    rad_t = 0.25 * jnp.exp(-ETAR * (r[..., None] - shfr) ** 2) * (fcr * pmask)[..., None]
    radial = jnp.sum(rad_t[..., None] * oh[:, None, :, None, :], axis=2)      # (C,A,M,S)
    radial = radial.reshape(c_n, a_n, RADIAL_LEN)

    rij = r[:, :, :, None]
    rik = r[:, :, None, :]
    dotp = 0.5 * (r2[:, :, :, None] + r2[:, :, None, :] - r2[:, None, :, :])
    cos_t = 0.95 * dotp / (rij * rik + 1e-10)
    sin_t = jnp.sqrt(jnp.maximum(1.0 - cos_t * cos_t, 0.0))
    ravg = 0.5 * (rij + rik)
    mask3 = pmask[:, :, :, None] * pmask[:, :, None, :] * neq[None, None, :, :]
    base = 2.0 * fca[:, :, :, None] * fca[:, :, None, :] * mask3
    shfa = jnp.asarray(SHFA, jnp.float32)
    cz = jnp.asarray(COSZ, jnp.float32)
    sz = jnp.asarray(SINZ, jnp.float32)
    f2 = jnp.exp(-ETAA * (ravg[..., None] - shfa) ** 2)                        # (C,A,A,A,NA)
    f1 = _pow_zeta((1.0 + cos_t[..., None] * cz + sin_t[..., None] * sz) * 0.5)  # (C,A,A,A,NZ)
    term = base[..., None, None] * f2[..., :, None] * f1[..., None, :]
    pair_feats = []
    for a, b in SPECIES_PAIRS:
        w = oh[:, :, a][:, :, None] * oh[:, :, b][:, None, :]
        if a != b:
            w = w + oh[:, :, b][:, :, None] * oh[:, :, a][:, None, :]
        pair_feats.append(0.5 * jnp.sum(term * w[:, None, :, :, None, None], axis=(2, 3)))
    angular = jnp.stack(pair_feats, axis=-1).reshape(c_n, a_n, ANGULAR_LEN)
    return jnp.concatenate([radial, angular], axis=-1)


def reference_forward(species, coords, params):
    oh = jax.nn.one_hot(species, NUM_SPECIES, dtype=jnp.float32)
    aev = reference_aev(species, coords)
    with jax.default_matmul_precision("float32"):
        e_atomic = jnp.zeros(species.shape, jnp.float32)
        for s in range(NUM_SPECIES):
            h = _celu(aev @ params["w1"][s] + params["b1"][s])
            h = _celu(h @ params["w2"][s] + params["b2"][s])
            e = (h @ params["w3"][s] + params["b3"][s])[..., 0]
            e_atomic = e_atomic + e * oh[:, :, s]
        self_e = (oh @ params["sae"])[..., 0]
    return jnp.sum(e_atomic + self_e, axis=1)


# ======================================= main =====================================
if __name__ == "__main__":
    key = jax.random.PRNGKey(0)
    ks = jax.random.split(key, 7)
    params = {
        "w1": jax.random.normal(ks[0], (NUM_SPECIES, AEV_DIM, H1), jnp.float32) / math.sqrt(AEV_DIM),
        "b1": 0.05 * jax.random.normal(ks[1], (NUM_SPECIES, 1, H1), jnp.float32),
        "w2": jax.random.normal(ks[2], (NUM_SPECIES, H1, H2), jnp.float32) / math.sqrt(H1),
        "b2": 0.05 * jax.random.normal(ks[3], (NUM_SPECIES, 1, H2), jnp.float32),
        "w3": jax.random.normal(ks[4], (NUM_SPECIES, H2, 1), jnp.float32) / math.sqrt(H2),
        "b3": 0.05 * jax.random.normal(ks[5], (NUM_SPECIES, 1, 1), jnp.float32),
        # per-species self (atomic) energies: the EnergyShifter / sae_dict analogue
        "sae": jnp.array([[-0.60], [-0.55], [-0.50], [-0.45]], jnp.float32),
    }
    species = jnp.array([[0, 1, 2, 3, 0, 1, -1, -1],
                         [2, 2, 1, 0, 3, 1, 0, -1]], dtype=jnp.int32)
    coordinates = 1.5 * jax.random.normal(ks[6], (C, A, 3), jnp.float32)

    fused_net = fuse_network_params(params)
    result = builtin_model_forward((species, coordinates), fused_net)
    energies = jax.block_until_ready(result.energies)

    # cross-check against a plain-JAX reference of the same forward pass
    onehot = jax.nn.one_hot(species, NUM_SPECIES, dtype=jnp.float32)
    aev_pad, _ = fused_forward(species, coordinates, onehot, fused_net)
    aev_pad = np.asarray(jax.block_until_ready(aev_pad))
    aev_kernel_out = aev_pad[..., :AEV_DIM]
    aev_ref = np.asarray(reference_aev(species, coordinates))
    e_ref = np.asarray(reference_forward(species, coordinates, params))

    assert energies.shape == (C,)
    assert np.all(np.isfinite(np.asarray(energies)))
    assert np.all(aev_pad[..., AEV_DIM:] == 0.0)           # padding lanes stay zero
    assert np.allclose(aev_kernel_out, aev_ref, rtol=2e-2, atol=2e-2)
    assert np.allclose(np.asarray(energies), e_ref, rtol=5e-2, atol=5e-2)
    print("KERNEL_OK")
</pallas_src>

<mosaic_0001>
module attributes {stable_mosaic.version = 11 : i64} {
  func.func @_fused_kernel(%arg0: i32, %arg1: memref<2x8xi32, #tpu.memory_space<smem>>, %arg2: memref<1x8x3xf32, #tpu.memory_space<vmem>>, %arg3: memref<1x8x4xf32, #tpu.memory_space<vmem>>, %arg4: memref<4x4x10xf32, #tpu.memory_space<vmem>>, %arg5: memref<128x256xf32, #tpu.memory_space<vmem>>, %arg6: memref<1x256xf32, #tpu.memory_space<vmem>>, %arg7: memref<256x128xf32, #tpu.memory_space<vmem>>, %arg8: memref<1x128xf32, #tpu.memory_space<vmem>>, %arg9: memref<128x4xf32, #tpu.memory_space<vmem>>, %arg10: memref<1x4xf32, #tpu.memory_space<vmem>>, %arg11: memref<1x8x128xf32, #tpu.memory_space<vmem>>, %arg12: memref<1x1x1xf32, #tpu.memory_space<vmem>>) attributes {dimension_semantics = [#tpu.dimension_semantics<parallel>], iteration_bounds = array<i64: 2>, scalar_prefetch = 1 : i64, scratch_operands = 0 : i64, tpu.core_type = #tpu.core_type<tc>, window_params = [{transform_indices = @transform_0, window_bounds = array<i64: 1, 8, 3>}, {transform_indices = @transform_1, window_bounds = array<i64: 1, 8, 4>}, {pipeline_mode = #tpu.pipeline_mode<synchronous>, transform_indices = @transform_2, window_bounds = array<i64: 4, 4, 10>}, {pipeline_mode = #tpu.pipeline_mode<synchronous>, transform_indices = @transform_3, window_bounds = array<i64: 128, 256>}, {pipeline_mode = #tpu.pipeline_mode<synchronous>, transform_indices = @transform_4, window_bounds = array<i64: 1, 256>}, {pipeline_mode = #tpu.pipeline_mode<synchronous>, transform_indices = @transform_5, window_bounds = array<i64: 256, 128>}, {pipeline_mode = #tpu.pipeline_mode<synchronous>, transform_indices = @transform_6, window_bounds = array<i64: 1, 128>}, {pipeline_mode = #tpu.pipeline_mode<synchronous>, transform_indices = @transform_7, window_bounds = array<i64: 128, 4>}, {pipeline_mode = #tpu.pipeline_mode<synchronous>, transform_indices = @transform_8, window_bounds = array<i64: 1, 4>}, {transform_indices = @transform_9, window_bounds = array<i64: 1, 8, 128>}, {transform_indices = @transform_10, window_bounds = array<i64: 1, 1, 1>}]} {
    %c0 = arith.constant 0 : index
    %c0_0 = arith.constant 0 : index
    %c0_1 = arith.constant 0 : index
    %0 = vector.load %arg2[%c0, %c0_0, %c0_1] : memref<1x8x3xf32, #tpu.memory_space<vmem>>, vector<1x8x3xf32>
    %1 = vector.shape_cast %0 : vector<1x8x3xf32> to vector<8x3xf32>
    %c0_2 = arith.constant 0 : index
    %c0_3 = arith.constant 0 : index
    %c0_4 = arith.constant 0 : index
    %2 = vector.load %arg3[%c0_2, %c0_3, %c0_4] : memref<1x8x4xf32, #tpu.memory_space<vmem>>, vector<1x8x4xf32>
    %3 = vector.shape_cast %2 : vector<1x8x4xf32> to vector<8x4xf32>
    %cst = arith.constant 1.000000e+00 : f32
    %4 = vector.broadcast %cst : f32 to vector<8x1xf32>
    %cst_5 = arith.constant dense<0.000000e+00> : vector<8x8xf32>
    %5 = tpu.matmul %1, %1, %cst_5 {dimension_numbers = #tpu.dot_dimension_numbers<[1], [1], [0], [0], [0, 0, 1, 0], [], []>} : vector<8x3xf32>, vector<8x3xf32>, vector<8x8xf32> -> vector<8x8xf32>
    %6 = arith.mulf %1, %1 : vector<8x3xf32>
    %cst_6 = arith.constant dense<0.000000e+00> : vector<8xf32>
    %7 = vector.multi_reduction <add>, %6, %cst_6 [1] : vector<8x3xf32> to vector<8xf32>
    %8 = vector.shape_cast %7 : vector<8xf32> to vector<8x1xf32>
    %cst_7 = arith.constant dense<0.000000e+00> : vector<8x8xf32>
    %9 = tpu.matmul %4, %8, %cst_7 {dimension_numbers = #tpu.dot_dimension_numbers<[1], [1], [0], [0], [0, 0, 1, 0], [], []>} : vector<8x1xf32>, vector<8x1xf32>, vector<8x8xf32> -> vector<8x8xf32>
    %10 = vector.broadcast %8 : vector<8x1xf32> to vector<8x8xf32>
    %11 = arith.addf %10, %9 : vector<8x8xf32>
    %cst_8 = arith.constant 2.000000e+00 : f32
    %12 = vector.broadcast %cst_8 : f32 to vector<8x8xf32>
    %13 = arith.mulf %12, %5 : vector<8x8xf32>
    %14 = arith.subf %11, %13 : vector<8x8xf32>
    %cst_9 = arith.constant 0.000000e+00 : f32
    %15 = vector.broadcast %cst_9 : f32 to vector<8x8xf32>
    %16 = arith.maximumf %14, %15 : vector<8x8xf32>
    %17 = math.sqrt %16 : vector<8x8xf32>
    %18 = tpu.iota {dimensions = array<i32: 0>} : vector<8x8xi32>
    %19 = tpu.iota {dimensions = array<i32: 1>} : vector<8x8xi32>
    %20 = arith.cmpi ne, %18, %19 : vector<8x8xi32>
    %21 = arith.extui %20 : vector<8x8xi1> to vector<8x8xi32>
    %22 = arith.sitofp %21 : vector<8x8xi32> to vector<8x8xf32>
    %cst_10 = arith.constant dense<0.000000e+00> : vector<8xf32>
    %23 = vector.multi_reduction <add>, %3, %cst_10 [1] : vector<8x4xf32> to vector<8xf32>
    %24 = vector.shape_cast %23 : vector<8xf32> to vector<8x1xf32>
    %cst_11 = arith.constant dense<0.000000e+00> : vector<8x8xf32>
    %25 = tpu.matmul %24, %24, %cst_11 {dimension_numbers = #tpu.dot_dimension_numbers<[1], [1], [0], [0], [0, 0, 1, 0], [], []>} : vector<8x1xf32>, vector<8x1xf32>, vector<8x8xf32> -> vector<8x8xf32>
    %26 = arith.mulf %22, %25 : vector<8x8xf32>
    %cst_12 = arith.constant 5.200000e+00 : f32
    %27 = vector.broadcast %cst_12 : f32 to vector<8x8xf32>
    %28 = arith.cmpf ole, %17, %27 : vector<8x8xf32>
    %cst_13 = arith.constant 0.604152441 : f32
    %29 = vector.broadcast %cst_13 : f32 to vector<8x8xf32>
    %30 = arith.mulf %29, %17 : vector<8x8xf32>
    %31 = arith.mulf %30, %30 : vector<8x8xf32>
    %cst_14 = arith.constant 4.77947726E-14 : f32
    %32 = vector.broadcast %cst_14 : f32 to vector<8x8xf32>
    %33 = arith.mulf %32, %31 : vector<8x8xf32>
    %cst_15 = arith.constant -1.14707454E-11 : f32
    %34 = vector.broadcast %cst_15 : f32 to vector<8x8xf32>
    %35 = arith.addf %33, %34 : vector<8x8xf32>
    %36 = arith.mulf %35, %31 : vector<8x8xf32>
    %cst_16 = arith.constant 2.08767559E-9 : f32
    %37 = vector.broadcast %cst_16 : f32 to vector<8x8xf32>
    %38 = arith.addf %36, %37 : vector<8x8xf32>
    %39 = arith.mulf %38, %31 : vector<8x8xf32>
    %cst_17 = arith.constant -2.755732E-7 : f32
    %40 = vector.broadcast %cst_17 : f32 to vector<8x8xf32>
    %41 = arith.addf %39, %40 : vector<8x8xf32>
    %42 = arith.mulf %41, %31 : vector<8x8xf32>
    %cst_18 = arith.constant 2.48015876E-5 : f32
    %43 = vector.broadcast %cst_18 : f32 to vector<8x8xf32>
    %44 = arith.addf %42, %43 : vector<8x8xf32>
    %45 = arith.mulf %44, %31 : vector<8x8xf32>
    %cst_19 = arith.constant -0.00138888892 : f32
    %46 = vector.broadcast %cst_19 : f32 to vector<8x8xf32>
    %47 = arith.addf %45, %46 : vector<8x8xf32>
    %48 = arith.mulf %47, %31 : vector<8x8xf32>
    %cst_20 = arith.constant 0.0416666679 : f32
    %49 = vector.broadcast %cst_20 : f32 to vector<8x8xf32>
    %50 = arith.addf %48, %49 : vector<8x8xf32>
    %51 = arith.mulf %50, %31 : vector<8x8xf32>
    %cst_21 = arith.constant -5.000000e-01 : f32
    %52 = vector.broadcast %cst_21 : f32 to vector<8x8xf32>
    %53 = arith.addf %51, %52 : vector<8x8xf32>
    %54 = arith.mulf %53, %31 : vector<8x8xf32>
    %cst_22 = arith.constant 1.000000e+00 : f32
    %55 = vector.broadcast %cst_22 : f32 to vector<8x8xf32>
    %56 = arith.addf %54, %55 : vector<8x8xf32>
    %cst_23 = arith.constant 5.000000e-01 : f32
    %57 = vector.broadcast %cst_23 : f32 to vector<8x8xf32>
    %58 = arith.mulf %57, %56 : vector<8x8xf32>
    %cst_24 = arith.constant 5.000000e-01 : f32
    %59 = vector.broadcast %cst_24 : f32 to vector<8x8xf32>
    %60 = arith.addf %58, %59 : vector<8x8xf32>
    %cst_25 = arith.constant 0.000000e+00 : f32
    %61 = vector.broadcast %cst_25 : f32 to vector<8x8xf32>
    %62 = arith.select %28, %60, %61 : vector<8x8xi1>, vector<8x8xf32>
    %cst_26 = arith.constant 3.500000e+00 : f32
    %63 = vector.broadcast %cst_26 : f32 to vector<8x8xf32>
    %64 = arith.cmpf ole, %17, %63 : vector<8x8xf32>
    %cst_27 = arith.constant 0.897597908 : f32
    %65 = vector.broadcast %cst_27 : f32 to vector<8x8xf32>
    %66 = arith.mulf %65, %17 : vector<8x8xf32>
    %67 = arith.mulf %66, %66 : vector<8x8xf32>
    %cst_28 = arith.constant 4.77947726E-14 : f32
    %68 = vector.broadcast %cst_28 : f32 to vector<8x8xf32>
    %69 = arith.mulf %68, %67 : vector<8x8xf32>
    %cst_29 = arith.constant -1.14707454E-11 : f32
    %70 = vector.broadcast %cst_29 : f32 to vector<8x8xf32>
    %71 = arith.addf %69, %70 : vector<8x8xf32>
    %72 = arith.mulf %71, %67 : vector<8x8xf32>
    %cst_30 = arith.constant 2.08767559E-9 : f32
    %73 = vector.broadcast %cst_30 : f32 to vector<8x8xf32>
    %74 = arith.addf %72, %73 : vector<8x8xf32>
    %75 = arith.mulf %74, %67 : vector<8x8xf32>
    %cst_31 = arith.constant -2.755732E-7 : f32
    %76 = vector.broadcast %cst_31 : f32 to vector<8x8xf32>
    %77 = arith.addf %75, %76 : vector<8x8xf32>
    %78 = arith.mulf %77, %67 : vector<8x8xf32>
    %cst_32 = arith.constant 2.48015876E-5 : f32
    %79 = vector.broadcast %cst_32 : f32 to vector<8x8xf32>
    %80 = arith.addf %78, %79 : vector<8x8xf32>
    %81 = arith.mulf %80, %67 : vector<8x8xf32>
    %cst_33 = arith.constant -0.00138888892 : f32
    %82 = vector.broadcast %cst_33 : f32 to vector<8x8xf32>
    %83 = arith.addf %81, %82 : vector<8x8xf32>
    %84 = arith.mulf %83, %67 : vector<8x8xf32>
    %cst_34 = arith.constant 0.0416666679 : f32
    %85 = vector.broadcast %cst_34 : f32 to vector<8x8xf32>
    %86 = arith.addf %84, %85 : vector<8x8xf32>
    %87 = arith.mulf %86, %67 : vector<8x8xf32>
    %cst_35 = arith.constant -5.000000e-01 : f32
    %88 = vector.broadcast %cst_35 : f32 to vector<8x8xf32>
    %89 = arith.addf %87, %88 : vector<8x8xf32>
    %90 = arith.mulf %89, %67 : vector<8x8xf32>
    %cst_36 = arith.constant 1.000000e+00 : f32
    %91 = vector.broadcast %cst_36 : f32 to vector<8x8xf32>
    %92 = arith.addf %90, %91 : vector<8x8xf32>
    %cst_37 = arith.constant 5.000000e-01 : f32
    %93 = vector.broadcast %cst_37 : f32 to vector<8x8xf32>
    %94 = arith.mulf %93, %92 : vector<8x8xf32>
    %cst_38 = arith.constant 5.000000e-01 : f32
    %95 = vector.broadcast %cst_38 : f32 to vector<8x8xf32>
    %96 = arith.addf %94, %95 : vector<8x8xf32>
    %cst_39 = arith.constant 0.000000e+00 : f32
    %97 = vector.broadcast %cst_39 : f32 to vector<8x8xf32>
    %98 = arith.select %64, %96, %97 : vector<8x8xi1>, vector<8x8xf32>
    %cst_40 = arith.constant 2.500000e-01 : f32
    %99 = vector.broadcast %cst_40 : f32 to vector<8x8xf32>
    %100 = arith.mulf %99, %62 : vector<8x8xf32>
    %101 = arith.mulf %100, %26 : vector<8x8xf32>
    %cst_41 = arith.constant 0.899999976 : f32
    %102 = vector.broadcast %cst_41 : f32 to vector<8x8xf32>
    %103 = arith.subf %17, %102 : vector<8x8xf32>
    %104 = arith.mulf %103, %103 : vector<8x8xf32>
    %cst_42 = arith.constant -1.600000e+01 : f32
    %105 = vector.broadcast %cst_42 : f32 to vector<8x8xf32>
    %106 = arith.mulf %105, %104 : vector<8x8xf32>
    %107 = math.exp %106 : vector<8x8xf32>
    %108 = arith.mulf %107, %101 : vector<8x8xf32>
    %cst_43 = arith.constant 1.42857146 : f32
    %109 = vector.broadcast %cst_43 : f32 to vector<8x8xf32>
    %110 = arith.subf %17, %109 : vector<8x8xf32>
    %111 = arith.mulf %110, %110 : vector<8x8xf32>
    %cst_44 = arith.constant -1.600000e+01 : f32
    %112 = vector.broadcast %cst_44 : f32 to vector<8x8xf32>
    %113 = arith.mulf %112, %111 : vector<8x8xf32>
    %114 = math.exp %113 : vector<8x8xf32>
    %115 = arith.mulf %114, %101 : vector<8x8xf32>
    %cst_45 = arith.constant 1.95714283 : f32
    %116 = vector.broadcast %cst_45 : f32 to vector<8x8xf32>
    %117 = arith.subf %17, %116 : vector<8x8xf32>
    %118 = arith.mulf %117, %117 : vector<8x8xf32>
    %cst_46 = arith.constant -1.600000e+01 : f32
    %119 = vector.broadcast %cst_46 : f32 to vector<8x8xf32>
    %120 = arith.mulf %119, %118 : vector<8x8xf32>
    %121 = math.exp %120 : vector<8x8xf32>
    %122 = arith.mulf %121, %101 : vector<8x8xf32>
    %cst_47 = arith.constant 2.4857142 : f32
    %123 = vector.broadcast %cst_47 : f32 to vector<8x8xf32>
    %124 = arith.subf %17, %123 : vector<8x8xf32>
    %125 = arith.mulf %124, %124 : vector<8x8xf32>
    %cst_48 = arith.constant -1.600000e+01 : f32
    %126 = vector.broadcast %cst_48 : f32 to vector<8x8xf32>
    %127 = arith.mulf %126, %125 : vector<8x8xf32>
    %128 = math.exp %127 : vector<8x8xf32>
    %129 = arith.mulf %128, %101 : vector<8x8xf32>
    %cst_49 = arith.constant 3.0142858 : f32
    %130 = vector.broadcast %cst_49 : f32 to vector<8x8xf32>
    %131 = arith.subf %17, %130 : vector<8x8xf32>
    %132 = arith.mulf %131, %131 : vector<8x8xf32>
    %cst_50 = arith.constant -1.600000e+01 : f32
    %133 = vector.broadcast %cst_50 : f32 to vector<8x8xf32>
    %134 = arith.mulf %133, %132 : vector<8x8xf32>
    %135 = math.exp %134 : vector<8x8xf32>
    %136 = arith.mulf %135, %101 : vector<8x8xf32>
    %cst_51 = arith.constant 3.54285717 : f32
    %137 = vector.broadcast %cst_51 : f32 to vector<8x8xf32>
    %138 = arith.subf %17, %137 : vector<8x8xf32>
    %139 = arith.mulf %138, %138 : vector<8x8xf32>
    %cst_52 = arith.constant -1.600000e+01 : f32
    %140 = vector.broadcast %cst_52 : f32 to vector<8x8xf32>
    %141 = arith.mulf %140, %139 : vector<8x8xf32>
    %142 = math.exp %141 : vector<8x8xf32>
    %143 = arith.mulf %142, %101 : vector<8x8xf32>
    %cst_53 = arith.constant 4.07142878 : f32
    %144 = vector.broadcast %cst_53 : f32 to vector<8x8xf32>
    %145 = arith.subf %17, %144 : vector<8x8xf32>
    %146 = arith.mulf %145, %145 : vector<8x8xf32>
    %cst_54 = arith.constant -1.600000e+01 : f32
    %147 = vector.broadcast %cst_54 : f32 to vector<8x8xf32>
    %148 = arith.mulf %147, %146 : vector<8x8xf32>
    %149 = math.exp %148 : vector<8x8xf32>
    %150 = arith.mulf %149, %101 : vector<8x8xf32>
    %cst_55 = arith.constant 4.600000e+00 : f32
    %151 = vector.broadcast %cst_55 : f32 to vector<8x8xf32>
    %152 = arith.subf %17, %151 : vector<8x8xf32>
    %153 = arith.mulf %152, %152 : vector<8x8xf32>
    %cst_56 = arith.constant -1.600000e+01 : f32
    %154 = vector.broadcast %cst_56 : f32 to vector<8x8xf32>
    %155 = arith.mulf %154, %153 : vector<8x8xf32>
    %156 = math.exp %155 : vector<8x8xf32>
    %157 = arith.mulf %156, %101 : vector<8x8xf32>
    %158 = tpu.concatenate %108, %115, %122, %129, %136, %143, %150, %157 in 0 : vector<8x8xf32>, vector<8x8xf32>, vector<8x8xf32>, vector<8x8xf32>, vector<8x8xf32>, vector<8x8xf32>, vector<8x8xf32>, vector<8x8xf32> -> vector<64x8xf32>
    %cst_57 = arith.constant dense<0.000000e+00> : vector<64x4xf32>
    %159 = tpu.matmul %158, %3, %cst_57 {dimension_numbers = #tpu.dot_dimension_numbers<[1], [0], [0], [1], [0, 0, 1, 1], [], []>} : vector<64x8xf32>, vector<8x4xf32>, vector<64x4xf32> -> vector<64x4xf32>
    %cst_58 = arith.constant 0.000000e+00 : f32
    %160 = vector.broadcast %cst_58 : f32 to vector<64x10xf32>
    %161 = arith.index_cast %arg0 : i32 to index
    %c0_59 = arith.constant 0 : index
    %162 = memref.load %arg1[%161, %c0_59] : memref<2x8xi32, #tpu.memory_space<smem>>
    %c0_i32 = arith.constant 0 : i32
    %163 = arith.cmpi sge, %162, %c0_i32 : i32
    %164 = arith.extui %163 : i1 to i32
    %165 = arith.sitofp %164 : i32 to f32
    %c0_i32_60 = arith.constant 0 : i32
    %166 = arith.maxsi %162, %c0_i32_60 : i32
    %167 = arith.index_cast %166 : i32 to index
    %c0_61 = arith.constant 0 : index
    %c0_62 = arith.constant 0 : index
    %168 = vector.load %arg4[%167, %c0_61, %c0_62] : memref<4x4x10xf32, #tpu.memory_space<vmem>>, vector<1x4x10xf32>
    %169 = vector.shape_cast %168 : vector<1x4x10xf32> to vector<4x10xf32>
    %cst_63 = arith.constant dense<0.000000e+00> : vector<8x10xf32>
    %170 = tpu.matmul %3, %169, %cst_63 {dimension_numbers = #tpu.dot_dimension_numbers<[1], [0], [0], [1], [0, 0, 1, 1], [], []>} : vector<8x4xf32>, vector<4x10xf32>, vector<8x10xf32> -> vector<8x10xf32>
    %171 = vector.extract_strided_slice %17 {offsets = [0, 0], sizes = [8, 1], strides = [1, 1]} : vector<8x8xf32> to vector<8x1xf32>
    %172 = vector.extract_strided_slice %16 {offsets = [0, 0], sizes = [8, 1], strides = [1, 1]} : vector<8x8xf32> to vector<8x1xf32>
    %173 = vector.broadcast %172 : vector<8x1xf32> to vector<8x8xf32>
    %174 = arith.addf %16, %173 : vector<8x8xf32>
    %175 = vector.extract_strided_slice %16 {offsets = [0, 0], sizes = [1, 8], strides = [1, 1]} : vector<8x8xf32> to vector<1x8xf32>
    %176 = vector.broadcast %175 : vector<1x8xf32> to vector<8x8xf32>
    %177 = arith.subf %174, %176 : vector<8x8xf32>
    %cst_64 = arith.constant 5.000000e-01 : f32
    %178 = vector.broadcast %cst_64 : f32 to vector<8x8xf32>
    %179 = arith.mulf %178, %177 : vector<8x8xf32>
    %180 = vector.broadcast %171 : vector<8x1xf32> to vector<8x8xf32>
    %181 = arith.mulf %17, %180 : vector<8x8xf32>
    %cst_65 = arith.constant 1.000000e-10 : f32
    %182 = vector.broadcast %cst_65 : f32 to vector<8x8xf32>
    %183 = arith.addf %181, %182 : vector<8x8xf32>
    %184 = tpu.reciprocal %183 {approx = true} : vector<8x8xf32> -> vector<8x8xf32>
    %185 = arith.mulf %183, %184 : vector<8x8xf32>
    %cst_66 = arith.constant 2.000000e+00 : f32
    %186 = vector.broadcast %cst_66 : f32 to vector<8x8xf32>
    %187 = arith.subf %186, %185 : vector<8x8xf32>
    %188 = arith.mulf %184, %187 : vector<8x8xf32>
    %cst_67 = arith.constant 0.949999988 : f32
    %189 = vector.broadcast %cst_67 : f32 to vector<8x8xf32>
    %190 = arith.mulf %189, %179 : vector<8x8xf32>
    %191 = arith.mulf %190, %188 : vector<8x8xf32>
    %192 = arith.mulf %191, %191 : vector<8x8xf32>
    %cst_68 = arith.constant 1.000000e+00 : f32
    %193 = vector.broadcast %cst_68 : f32 to vector<8x8xf32>
    %194 = arith.subf %193, %192 : vector<8x8xf32>
    %cst_69 = arith.constant 0.000000e+00 : f32
    %195 = vector.broadcast %cst_69 : f32 to vector<8x8xf32>
    %196 = arith.maximumf %194, %195 : vector<8x8xf32>
    %197 = math.sqrt %196 : vector<8x8xf32>
    %198 = vector.broadcast %171 : vector<8x1xf32> to vector<8x8xf32>
    %199 = arith.addf %17, %198 : vector<8x8xf32>
    %cst_70 = arith.constant 5.000000e-01 : f32
    %200 = vector.broadcast %cst_70 : f32 to vector<8x8xf32>
    %201 = arith.mulf %200, %199 : vector<8x8xf32>
    %202 = vector.extract_strided_slice %22 {offsets = [0, 0], sizes = [8, 1], strides = [1, 1]} : vector<8x8xf32> to vector<8x1xf32>
    %203 = vector.broadcast %202 : vector<8x1xf32> to vector<8x8xf32>
    %204 = arith.mulf %26, %203 : vector<8x8xf32>
    %205 = vector.extract_strided_slice %22 {offsets = [0, 0], sizes = [1, 8], strides = [1, 1]} : vector<8x8xf32> to vector<1x8xf32>
    %206 = vector.broadcast %205 : vector<1x8xf32> to vector<8x8xf32>
    %207 = arith.mulf %204, %206 : vector<8x8xf32>
    %208 = vector.broadcast %165 : f32 to vector<8x8xf32>
    %209 = arith.mulf %207, %208 : vector<8x8xf32>
    %210 = vector.extract_strided_slice %98 {offsets = [0, 0], sizes = [8, 1], strides = [1, 1]} : vector<8x8xf32> to vector<8x1xf32>
    %211 = vector.broadcast %210 : vector<8x1xf32> to vector<8x8xf32>
    %212 = arith.mulf %98, %211 : vector<8x8xf32>
    %cst_71 = arith.constant 2.000000e+00 : f32
    %213 = vector.broadcast %cst_71 : f32 to vector<8x8xf32>
    %214 = arith.mulf %213, %212 : vector<8x8xf32>
    %215 = arith.mulf %214, %209 : vector<8x8xf32>
    %cst_72 = arith.constant 0.899999976 : f32
    %216 = vector.broadcast %cst_72 : f32 to vector<8x8xf32>
    %217 = arith.subf %201, %216 : vector<8x8xf32>
    %218 = arith.mulf %217, %217 : vector<8x8xf32>
    %cst_73 = arith.constant -8.000000e+00 : f32
    %219 = vector.broadcast %cst_73 : f32 to vector<8x8xf32>
    %220 = arith.mulf %219, %218 : vector<8x8xf32>
    %221 = math.exp %220 : vector<8x8xf32>
    %cst_74 = arith.constant 2.200000e+00 : f32
    %222 = vector.broadcast %cst_74 : f32 to vector<8x8xf32>
    %223 = arith.subf %201, %222 : vector<8x8xf32>
    %224 = arith.mulf %223, %223 : vector<8x8xf32>
    %cst_75 = arith.constant -8.000000e+00 : f32
    %225 = vector.broadcast %cst_75 : f32 to vector<8x8xf32>
    %226 = arith.mulf %225, %224 : vector<8x8xf32>
    %227 = math.exp %226 : vector<8x8xf32>
    %cst_76 = arith.constant 0.923879504 : f32
    %228 = vector.broadcast %cst_76 : f32 to vector<8x8xf32>
    %229 = arith.mulf %191, %228 : vector<8x8xf32>
    %cst_77 = arith.constant 1.000000e+00 : f32
    %230 = vector.broadcast %cst_77 : f32 to vector<8x8xf32>
    %231 = arith.addf %230, %229 : vector<8x8xf32>
    %cst_78 = arith.constant 0.382683426 : f32
    %232 = vector.broadcast %cst_78 : f32 to vector<8x8xf32>
    %233 = arith.mulf %197, %232 : vector<8x8xf32>
    %234 = arith.addf %231, %233 : vector<8x8xf32>
    %cst_79 = arith.constant 5.000000e-01 : f32
    %235 = vector.broadcast %cst_79 : f32 to vector<8x8xf32>
    %236 = arith.mulf %234, %235 : vector<8x8xf32>
    %237 = arith.mulf %236, %236 : vector<8x8xf32>
    %238 = arith.mulf %237, %237 : vector<8x8xf32>
    %239 = arith.mulf %238, %238 : vector<8x8xf32>
    %cst_80 = arith.constant 0.382683426 : f32
    %240 = vector.broadcast %cst_80 : f32 to vector<8x8xf32>
    %241 = arith.mulf %191, %240 : vector<8x8xf32>
    %cst_81 = arith.constant 1.000000e+00 : f32
    %242 = vector.broadcast %cst_81 : f32 to vector<8x8xf32>
    %243 = arith.addf %242, %241 : vector<8x8xf32>
    %cst_82 = arith.constant 0.923879504 : f32
    %244 = vector.broadcast %cst_82 : f32 to vector<8x8xf32>
    %245 = arith.mulf %197, %244 : vector<8x8xf32>
    %246 = arith.addf %243, %245 : vector<8x8xf32>
    %cst_83 = arith.constant 5.000000e-01 : f32
    %247 = vector.broadcast %cst_83 : f32 to vector<8x8xf32>
    %248 = arith.mulf %246, %247 : vector<8x8xf32>
    %249 = arith.mulf %248, %248 : vector<8x8xf32>
    %250 = arith.mulf %249, %249 : vector<8x8xf32>
    %251 = arith.mulf %250, %250 : vector<8x8xf32>
    %cst_84 = arith.constant -0.382683426 : f32
    %252 = vector.broadcast %cst_84 : f32 to vector<8x8xf32>
    %253 = arith.mulf %191, %252 : vector<8x8xf32>
    %cst_85 = arith.constant 1.000000e+00 : f32
    %254 = vector.broadcast %cst_85 : f32 to vector<8x8xf32>
    %255 = arith.addf %254, %253 : vector<8x8xf32>
    %cst_86 = arith.constant 0.923879504 : f32
    %256 = vector.broadcast %cst_86 : f32 to vector<8x8xf32>
    %257 = arith.mulf %197, %256 : vector<8x8xf32>
    %258 = arith.addf %255, %257 : vector<8x8xf32>
    %cst_87 = arith.constant 5.000000e-01 : f32
    %259 = vector.broadcast %cst_87 : f32 to vector<8x8xf32>
    %260 = arith.mulf %258, %259 : vector<8x8xf32>
    %261 = arith.mulf %260, %260 : vector<8x8xf32>
    %262 = arith.mulf %261, %261 : vector<8x8xf32>
    %263 = arith.mulf %262, %262 : vector<8x8xf32>
    %cst_88 = arith.constant -0.923879504 : f32
    %264 = vector.broadcast %cst_88 : f32 to vector<8x8xf32>
    %265 = arith.mulf %191, %264 : vector<8x8xf32>
    %cst_89 = arith.constant 1.000000e+00 : f32
    %266 = vector.broadcast %cst_89 : f32 to vector<8x8xf32>
    %267 = arith.addf %266, %265 : vector<8x8xf32>
    %cst_90 = arith.constant 0.382683426 : f32
    %268 = vector.broadcast %cst_90 : f32 to vector<8x8xf32>
    %269 = arith.mulf %197, %268 : vector<8x8xf32>
    %270 = arith.addf %267, %269 : vector<8x8xf32>
    %cst_91 = arith.constant 5.000000e-01 : f32
    %271 = vector.broadcast %cst_91 : f32 to vector<8x8xf32>
    %272 = arith.mulf %270, %271 : vector<8x8xf32>
    %273 = arith.mulf %272, %272 : vector<8x8xf32>
    %274 = arith.mulf %273, %273 : vector<8x8xf32>
    %275 = arith.mulf %274, %274 : vector<8x8xf32>
    %276 = arith.mulf %215, %239 : vector<8x8xf32>
    %277 = arith.mulf %276, %221 : vector<8x8xf32>
    %278 = arith.mulf %215, %251 : vector<8x8xf32>
    %279 = arith.mulf %278, %221 : vector<8x8xf32>
    %280 = arith.mulf %215, %263 : vector<8x8xf32>
    %281 = arith.mulf %280, %221 : vector<8x8xf32>
    %282 = arith.mulf %215, %275 : vector<8x8xf32>
    %283 = arith.mulf %282, %221 : vector<8x8xf32>
    %284 = arith.mulf %215, %239 : vector<8x8xf32>
    %285 = arith.mulf %284, %227 : vector<8x8xf32>
    %286 = arith.mulf %215, %251 : vector<8x8xf32>
    %287 = arith.mulf %286, %227 : vector<8x8xf32>
    %288 = arith.mulf %215, %263 : vector<8x8xf32>
    %289 = arith.mulf %288, %227 : vector<8x8xf32>
    %290 = arith.mulf %215, %275 : vector<8x8xf32>
    %291 = arith.mulf %290, %227 : vector<8x8xf32>
    %292 = tpu.concatenate %277, %279, %281, %283, %285, %287, %289, %291 in 0 : vector<8x8xf32>, vector<8x8xf32>, vector<8x8xf32>, vector<8x8xf32>, vector<8x8xf32>, vector<8x8xf32>, vector<8x8xf32>, vector<8x8xf32> -> vector<64x8xf32>
    %cst_92 = arith.constant dense<0.000000e+00> : vector<64x10xf32>
    %293 = tpu.matmul %292, %170, %cst_92 {dimension_numbers = #tpu.dot_dimension_numbers<[1], [0], [0], [1], [0, 0, 1, 1], [], []>} : vector<64x8xf32>, vector<8x10xf32>, vector<64x10xf32> -> vector<64x10xf32>
    %294 = arith.addf %160, %293 : vector<64x10xf32>
    %295 = arith.index_cast %arg0 : i32 to index
    %c1 = arith.constant 1 : index
    %296 = memref.load %arg1[%295, %c1] : memref<2x8xi32, #tpu.memory_space<smem>>
    %c0_i32_93 = arith.constant 0 : i32
    %297 = arith.cmpi sge, %296, %c0_i32_93 : i32
    %298 = arith.extui %297 : i1 to i32
    %299 = arith.sitofp %298 : i32 to f32
    %c0_i32_94 = arith.constant 0 : i32
    %300 = arith.maxsi %296, %c0_i32_94 : i32
    %301 = arith.index_cast %300 : i32 to index
    %c0_95 = arith.constant 0 : index
    %c0_96 = arith.constant 0 : index
    %302 = vector.load %arg4[%301, %c0_95, %c0_96] : memref<4x4x10xf32, #tpu.memory_space<vmem>>, vector<1x4x10xf32>
    %303 = vector.shape_cast %302 : vector<1x4x10xf32> to vector<4x10xf32>
    %cst_97 = arith.constant dense<0.000000e+00> : vector<8x10xf32>
    %304 = tpu.matmul %3, %303, %cst_97 {dimension_numbers = #tpu.dot_dimension_numbers<[1], [0], [0], [1], [0, 0, 1, 1], [], []>} : vector<8x4xf32>, vector<4x10xf32>, vector<8x10xf32> -> vector<8x10xf32>
    %305 = vector.extract_strided_slice %17 {offsets = [0, 1], sizes = [8, 1], strides = [1, 1]} : vector<8x8xf32> to vector<8x1xf32>
    %306 = vector.extract_strided_slice %16 {offsets = [0, 1], sizes = [8, 1], strides = [1, 1]} : vector<8x8xf32> to vector<8x1xf32>
    %307 = vector.broadcast %306 : vector<8x1xf32> to vector<8x8xf32>
    %308 = arith.addf %16, %307 : vector<8x8xf32>
    %309 = vector.extract_strided_slice %16 {offsets = [1, 0], sizes = [1, 8], strides = [1, 1]} : vector<8x8xf32> to vector<1x8xf32>
    %310 = vector.broadcast %309 : vector<1x8xf32> to vector<8x8xf32>
    %311 = arith.subf %308, %310 : vector<8x8xf32>
    %cst_98 = arith.constant 5.000000e-01 : f32
    %312 = vector.broadcast %cst_98 : f32 to vector<8x8xf32>
    %313 = arith.mulf %312, %311 : vector<8x8xf32>
    %314 = vector.broadcast %305 : vector<8x1xf32> to vector<8x8xf32>
    %315 = arith.mulf %17, %314 : vector<8x8xf32>
    %cst_99 = arith.constant 1.000000e-10 : f32
    %316 = vector.broadcast %cst_99 : f32 to vector<8x8xf32>
    %317 = arith.addf %315, %316 : vector<8x8xf32>
    %318 = tpu.reciprocal %317 {approx = true} : vector<8x8xf32> -> vector<8x8xf32>
    %319 = arith.mulf %317, %318 : vector<8x8xf32>
    %cst_100 = arith.constant 2.000000e+00 : f32
    %320 = vector.broadcast %cst_100 : f32 to vector<8x8xf32>
    %321 = arith.subf %320, %319 : vector<8x8xf32>
    %322 = arith.mulf %318, %321 : vector<8x8xf32>
    %cst_101 = arith.constant 0.949999988 : f32
    %323 = vector.broadcast %cst_101 : f32 to vector<8x8xf32>
    %324 = arith.mulf %323, %313 : vector<8x8xf32>
    %325 = arith.mulf %324, %322 : vector<8x8xf32>
    %326 = arith.mulf %325, %325 : vector<8x8xf32>
    %cst_102 = arith.constant 1.000000e+00 : f32
    %327 = vector.broadcast %cst_102 : f32 to vector<8x8xf32>
    %328 = arith.subf %327, %326 : vector<8x8xf32>
    %cst_103 = arith.constant 0.000000e+00 : f32
    %329 = vector.broadcast %cst_103 : f32 to vector<8x8xf32>
    %330 = arith.maximumf %328, %329 : vector<8x8xf32>
    %331 = math.sqrt %330 : vector<8x8xf32>
    %332 = vector.broadcast %305 : vector<8x1xf32> to vector<8x8xf32>
    %333 = arith.addf %17, %332 : vector<8x8xf32>
    %cst_104 = arith.constant 5.000000e-01 : f32
    %334 = vector.broadcast %cst_104 : f32 to vector<8x8xf32>
    %335 = arith.mulf %334, %333 : vector<8x8xf32>
    %336 = vector.extract_strided_slice %22 {offsets = [0, 1], sizes = [8, 1], strides = [1, 1]} : vector<8x8xf32> to vector<8x1xf32>
    %337 = vector.broadcast %336 : vector<8x1xf32> to vector<8x8xf32>
    %338 = arith.mulf %26, %337 : vector<8x8xf32>
    %339 = vector.extract_strided_slice %22 {offsets = [1, 0], sizes = [1, 8], strides = [1, 1]} : vector<8x8xf32> to vector<1x8xf32>
    %340 = vector.broadcast %339 : vector<1x8xf32> to vector<8x8xf32>
    %341 = arith.mulf %338, %340 : vector<8x8xf32>
    %342 = vector.broadcast %299 : f32 to vector<8x8xf32>
    %343 = arith.mulf %341, %342 : vector<8x8xf32>
    %344 = vector.extract_strided_slice %98 {offsets = [0, 1], sizes = [8, 1], strides = [1, 1]} : vector<8x8xf32> to vector<8x1xf32>
    %345 = vector.broadcast %344 : vector<8x1xf32> to vector<8x8xf32>
    %346 = arith.mulf %98, %345 : vector<8x8xf32>
    %cst_105 = arith.constant 2.000000e+00 : f32
    %347 = vector.broadcast %cst_105 : f32 to vector<8x8xf32>
    %348 = arith.mulf %347, %346 : vector<8x8xf32>
    %349 = arith.mulf %348, %343 : vector<8x8xf32>
    %cst_106 = arith.constant 0.899999976 : f32
    %350 = vector.broadcast %cst_106 : f32 to vector<8x8xf32>
    %351 = arith.subf %335, %350 : vector<8x8xf32>
    %352 = arith.mulf %351, %351 : vector<8x8xf32>
    %cst_107 = arith.constant -8.000000e+00 : f32
    %353 = vector.broadcast %cst_107 : f32 to vector<8x8xf32>
    %354 = arith.mulf %353, %352 : vector<8x8xf32>
    %355 = math.exp %354 : vector<8x8xf32>
    %cst_108 = arith.constant 2.200000e+00 : f32
    %356 = vector.broadcast %cst_108 : f32 to vector<8x8xf32>
    %357 = arith.subf %335, %356 : vector<8x8xf32>
    %358 = arith.mulf %357, %357 : vector<8x8xf32>
    %cst_109 = arith.constant -8.000000e+00 : f32
    %359 = vector.broadcast %cst_109 : f32 to vector<8x8xf32>
    %360 = arith.mulf %359, %358 : vector<8x8xf32>
    %361 = math.exp %360 : vector<8x8xf32>
    %cst_110 = arith.constant 0.923879504 : f32
    %362 = vector.broadcast %cst_110 : f32 to vector<8x8xf32>
    %363 = arith.mulf %325, %362 : vector<8x8xf32>
    %cst_111 = arith.constant 1.000000e+00 : f32
    %364 = vector.broadcast %cst_111 : f32 to vector<8x8xf32>
    %365 = arith.addf %364, %363 : vector<8x8xf32>
    %cst_112 = arith.constant 0.382683426 : f32
    %366 = vector.broadcast %cst_112 : f32 to vector<8x8xf32>
    %367 = arith.mulf %331, %366 : vector<8x8xf32>
    %368 = arith.addf %365, %367 : vector<8x8xf32>
    %cst_113 = arith.constant 5.000000e-01 : f32
    %369 = vector.broadcast %cst_113 : f32 to vector<8x8xf32>
    %370 = arith.mulf %368, %369 : vector<8x8xf32>
    %371 = arith.mulf %370, %370 : vector<8x8xf32>
    %372 = arith.mulf %371, %371 : vector<8x8xf32>
    %373 = arith.mulf %372, %372 : vector<8x8xf32>
    %cst_114 = arith.constant 0.382683426 : f32
    %374 = vector.broadcast %cst_114 : f32 to vector<8x8xf32>
    %375 = arith.mulf %325, %374 : vector<8x8xf32>
    %cst_115 = arith.constant 1.000000e+00 : f32
    %376 = vector.broadcast %cst_115 : f32 to vector<8x8xf32>
    %377 = arith.addf %376, %375 : vector<8x8xf32>
    %cst_116 = arith.constant 0.923879504 : f32
    %378 = vector.broadcast %cst_116 : f32 to vector<8x8xf32>
    %379 = arith.mulf %331, %378 : vector<8x8xf32>
    %380 = arith.addf %377, %379 : vector<8x8xf32>
    %cst_117 = arith.constant 5.000000e-01 : f32
    %381 = vector.broadcast %cst_117 : f32 to vector<8x8xf32>
    %382 = arith.mulf %380, %381 : vector<8x8xf32>
    %383 = arith.mulf %382, %382 : vector<8x8xf32>
    %384 = arith.mulf %383, %383 : vector<8x8xf32>
    %385 = arith.mulf %384, %384 : vector<8x8xf32>
    %cst_118 = arith.constant -0.382683426 : f32
    %386 = vector.broadcast %cst_118 : f32 to vector<8x8xf32>
    %387 = arith.mulf %325, %386 : vector<8x8xf32>
    %cst_119 = arith.constant 1.000000e+00 : f32
    %388 = vector.broadcast %cst_119 : f32 to vector<8x8xf32>
    %389 = arith.addf %388, %387 : vector<8x8xf32>
    %cst_120 = arith.constant 0.923879504 : f32
    %390 = vector.broadcast %cst_120 : f32 to vector<8x8xf32>
    %391 = arith.mulf %331, %390 : vector<8x8xf32>
    %392 = arith.addf %389, %391 : vector<8x8xf32>
    %cst_121 = arith.constant 5.000000e-01 : f32
    %393 = vector.broadcast %cst_121 : f32 to vector<8x8xf32>
    %394 = arith.mulf %392, %393 : vector<8x8xf32>
    %395 = arith.mulf %394, %394 : vector<8x8xf32>
    %396 = arith.mulf %395, %395 : vector<8x8xf32>
    %397 = arith.mulf %396, %396 : vector<8x8xf32>
    %cst_122 = arith.constant -0.923879504 : f32
    %398 = vector.broadcast %cst_122 : f32 to vector<8x8xf32>
    %399 = arith.mulf %325, %398 : vector<8x8xf32>
    %cst_123 = arith.constant 1.000000e+00 : f32
    %400 = vector.broadcast %cst_123 : f32 to vector<8x8xf32>
    %401 = arith.addf %400, %399 : vector<8x8xf32>
    %cst_124 = arith.constant 0.382683426 : f32
    %402 = vector.broadcast %cst_124 : f32 to vector<8x8xf32>
    %403 = arith.mulf %331, %402 : vector<8x8xf32>
    %404 = arith.addf %401, %403 : vector<8x8xf32>
    %cst_125 = arith.constant 5.000000e-01 : f32
    %405 = vector.broadcast %cst_125 : f32 to vector<8x8xf32>
    %406 = arith.mulf %404, %405 : vector<8x8xf32>
    %407 = arith.mulf %406, %406 : vector<8x8xf32>
    %408 = arith.mulf %407, %407 : vector<8x8xf32>
    %409 = arith.mulf %408, %408 : vector<8x8xf32>
    %410 = arith.mulf %349, %373 : vector<8x8xf32>
    %411 = arith.mulf %410, %355 : vector<8x8xf32>
    %412 = arith.mulf %349, %385 : vector<8x8xf32>
    %413 = arith.mulf %412, %355 : vector<8x8xf32>
    %414 = arith.mulf %349, %397 : vector<8x8xf32>
    %415 = arith.mulf %414, %355 : vector<8x8xf32>
    %416 = arith.mulf %349, %409 : vector<8x8xf32>
    %417 = arith.mulf %416, %355 : vector<8x8xf32>
    %418 = arith.mulf %349, %373 : vector<8x8xf32>
    %419 = arith.mulf %418, %361 : vector<8x8xf32>
    %420 = arith.mulf %349, %385 : vector<8x8xf32>
    %421 = arith.mulf %420, %361 : vector<8x8xf32>
    %422 = arith.mulf %349, %397 : vector<8x8xf32>
    %423 = arith.mulf %422, %361 : vector<8x8xf32>
    %424 = arith.mulf %349, %409 : vector<8x8xf32>
    %425 = arith.mulf %424, %361 : vector<8x8xf32>
    %426 = tpu.concatenate %411, %413, %415, %417, %419, %421, %423, %425 in 0 : vector<8x8xf32>, vector<8x8xf32>, vector<8x8xf32>, vector<8x8xf32>, vector<8x8xf32>, vector<8x8xf32>, vector<8x8xf32>, vector<8x8xf32> -> vector<64x8xf32>
    %cst_126 = arith.constant dense<0.000000e+00> : vector<64x10xf32>
    %427 = tpu.matmul %426, %304, %cst_126 {dimension_numbers = #tpu.dot_dimension_numbers<[1], [0], [0], [1], [0, 0, 1, 1], [], []>} : vector<64x8xf32>, vector<8x10xf32>, vector<64x10xf32> -> vector<64x10xf32>
    %428 = arith.addf %294, %427 : vector<64x10xf32>
    %429 = arith.index_cast %arg0 : i32 to index
    %c2 = arith.constant 2 : index
    %430 = memref.load %arg1[%429, %c2] : memref<2x8xi32, #tpu.memory_space<smem>>
    %c0_i32_127 = arith.constant 0 : i32
    %431 = arith.cmpi sge, %430, %c0_i32_127 : i32
    %432 = arith.extui %431 : i1 to i32
    %433 = arith.sitofp %432 : i32 to f32
    %c0_i32_128 = arith.constant 0 : i32
    %434 = arith.maxsi %430, %c0_i32_128 : i32
    %435 = arith.index_cast %434 : i32 to index
    %c0_129 = arith.constant 0 : index
    %c0_130 = arith.constant 0 : index
    %436 = vector.load %arg4[%435, %c0_129, %c0_130] : memref<4x4x10xf32, #tpu.memory_space<vmem>>, vector<1x4x10xf32>
    %437 = vector.shape_cast %436 : vector<1x4x10xf32> to vector<4x10xf32>
    %cst_131 = arith.constant dense<0.000000e+00> : vector<8x10xf32>
    %438 = tpu.matmul %3, %437, %cst_131 {dimension_numbers = #tpu.dot_dimension_numbers<[1], [0], [0], [1], [0, 0, 1, 1], [], []>} : vector<8x4xf32>, vector<4x10xf32>, vector<8x10xf32> -> vector<8x10xf32>
    %439 = vector.extract_strided_slice %17 {offsets = [0, 2], sizes = [8, 1], strides = [1, 1]} : vector<8x8xf32> to vector<8x1xf32>
    %440 = vector.extract_strided_slice %16 {offsets = [0, 2], sizes = [8, 1], strides = [1, 1]} : vector<8x8xf32> to vector<8x1xf32>
    %441 = vector.broadcast %440 : vector<8x1xf32> to vector<8x8xf32>
    %442 = arith.addf %16, %441 : vector<8x8xf32>
    %443 = vector.extract_strided_slice %16 {offsets = [2, 0], sizes = [1, 8], strides = [1, 1]} : vector<8x8xf32> to vector<1x8xf32>
    %444 = vector.broadcast %443 : vector<1x8xf32> to vector<8x8xf32>
    %445 = arith.subf %442, %444 : vector<8x8xf32>
    %cst_132 = arith.constant 5.000000e-01 : f32
    %446 = vector.broadcast %cst_132 : f32 to vector<8x8xf32>
    %447 = arith.mulf %446, %445 : vector<8x8xf32>
    %448 = vector.broadcast %439 : vector<8x1xf32> to vector<8x8xf32>
    %449 = arith.mulf %17, %448 : vector<8x8xf32>
    %cst_133 = arith.constant 1.000000e-10 : f32
    %450 = vector.broadcast %cst_133 : f32 to vector<8x8xf32>
    %451 = arith.addf %449, %450 : vector<8x8xf32>
    %452 = tpu.reciprocal %451 {approx = true} : vector<8x8xf32> -> vector<8x8xf32>
    %453 = arith.mulf %451, %452 : vector<8x8xf32>
    %cst_134 = arith.constant 2.000000e+00 : f32
    %454 = vector.broadcast %cst_134 : f32 to vector<8x8xf32>
    %455 = arith.subf %454, %453 : vector<8x8xf32>
    %456 = arith.mulf %452, %455 : vector<8x8xf32>
    %cst_135 = arith.constant 0.949999988 : f32
    %457 = vector.broadcast %cst_135 : f32 to vector<8x8xf32>
    %458 = arith.mulf %457, %447 : vector<8x8xf32>
    %459 = arith.mulf %458, %456 : vector<8x8xf32>
    %460 = arith.mulf %459, %459 : vector<8x8xf32>
    %cst_136 = arith.constant 1.000000e+00 : f32
    %461 = vector.broadcast %cst_136 : f32 to vector<8x8xf32>
    %462 = arith.subf %461, %460 : vector<8x8xf32>
    %cst_137 = arith.constant 0.000000e+00 : f32
    %463 = vector.broadcast %cst_137 : f32 to vector<8x8xf32>
    %464 = arith.maximumf %462, %463 : vector<8x8xf32>
    %465 = math.sqrt %464 : vector<8x8xf32>
    %466 = vector.broadcast %439 : vector<8x1xf32> to vector<8x8xf32>
    %467 = arith.addf %17, %466 : vector<8x8xf32>
    %cst_138 = arith.constant 5.000000e-01 : f32
    %468 = vector.broadcast %cst_138 : f32 to vector<8x8xf32>
    %469 = arith.mulf %468, %467 : vector<8x8xf32>
    %470 = vector.extract_strided_slice %22 {offsets = [0, 2], sizes = [8, 1], strides = [1, 1]} : vector<8x8xf32> to vector<8x1xf32>
    %471 = vector.broadcast %470 : vector<8x1xf32> to vector<8x8xf32>
    %472 = arith.mulf %26, %471 : vector<8x8xf32>
    %473 = vector.extract_strided_slice %22 {offsets = [2, 0], sizes = [1, 8], strides = [1, 1]} : vector<8x8xf32> to vector<1x8xf32>
    %474 = vector.broadcast %473 : vector<1x8xf32> to vector<8x8xf32>
    %475 = arith.mulf %472, %474 : vector<8x8xf32>
    %476 = vector.broadcast %433 : f32 to vector<8x8xf32>
    %477 = arith.mulf %475, %476 : vector<8x8xf32>
    %478 = vector.extract_strided_slice %98 {offsets = [0, 2], sizes = [8, 1], strides = [1, 1]} : vector<8x8xf32> to vector<8x1xf32>
    %479 = vector.broadcast %478 : vector<8x1xf32> to vector<8x8xf32>
    %480 = arith.mulf %98, %479 : vector<8x8xf32>
    %cst_139 = arith.constant 2.000000e+00 : f32
    %481 = vector.broadcast %cst_139 : f32 to vector<8x8xf32>
    %482 = arith.mulf %481, %480 : vector<8x8xf32>
    %483 = arith.mulf %482, %477 : vector<8x8xf32>
    %cst_140 = arith.constant 0.899999976 : f32
    %484 = vector.broadcast %cst_140 : f32 to vector<8x8xf32>
    %485 = arith.subf %469, %484 : vector<8x8xf32>
    %486 = arith.mulf %485, %485 : vector<8x8xf32>
    %cst_141 = arith.constant -8.000000e+00 : f32
    %487 = vector.broadcast %cst_141 : f32 to vector<8x8xf32>
    %488 = arith.mulf %487, %486 : vector<8x8xf32>
    %489 = math.exp %488 : vector<8x8xf32>
    %cst_142 = arith.constant 2.200000e+00 : f32
    %490 = vector.broadcast %cst_142 : f32 to vector<8x8xf32>
    %491 = arith.subf %469, %490 : vector<8x8xf32>
    %492 = arith.mulf %491, %491 : vector<8x8xf32>
    %cst_143 = arith.constant -8.000000e+00 : f32
    %493 = vector.broadcast %cst_143 : f32 to vector<8x8xf32>
    %494 = arith.mulf %493, %492 : vector<8x8xf32>
    %495 = math.exp %494 : vector<8x8xf32>
    %cst_144 = arith.constant 0.923879504 : f32
    %496 = vector.broadcast %cst_144 : f32 to vector<8x8xf32>
    %497 = arith.mulf %459, %496 : vector<8x8xf32>
    %cst_145 = arith.constant 1.000000e+00 : f32
    %498 = vector.broadcast %cst_145 : f32 to vector<8x8xf32>
    %499 = arith.addf %498, %497 : vector<8x8xf32>
    %cst_146 = arith.constant 0.382683426 : f32
    %500 = vector.broadcast %cst_146 : f32 to vector<8x8xf32>
    %501 = arith.mulf %465, %500 : vector<8x8xf32>
    %502 = arith.addf %499, %501 : vector<8x8xf32>
    %cst_147 = arith.constant 5.000000e-01 : f32
    %503 = vector.broadcast %cst_147 : f32 to vector<8x8xf32>
    %504 = arith.mulf %502, %503 : vector<8x8xf32>
    %505 = arith.mulf %504, %504 : vector<8x8xf32>
    %506 = arith.mulf %505, %505 : vector<8x8xf32>
    %507 = arith.mulf %506, %506 : vector<8x8xf32>
    %cst_148 = arith.constant 0.382683426 : f32
    %508 = vector.broadcast %cst_148 : f32 to vector<8x8xf32>
    %509 = arith.mulf %459, %508 : vector<8x8xf32>
    %cst_149 = arith.constant 1.000000e+00 : f32
    %510 = vector.broadcast %cst_149 : f32 to vector<8x8xf32>
    %511 = arith.addf %510, %509 : vector<8x8xf32>
    %cst_150 = arith.constant 0.923879504 : f32
    %512 = vector.broadcast %cst_150 : f32 to vector<8x8xf32>
    %513 = arith.mulf %465, %512 : vector<8x8xf32>
    %514 = arith.addf %511, %513 : vector<8x8xf32>
    %cst_151 = arith.constant 5.000000e-01 : f32
    %515 = vector.broadcast %cst_151 : f32 to vector<8x8xf32>
    %516 = arith.mulf %514, %515 : vector<8x8xf32>
    %517 = arith.mulf %516, %516 : vector<8x8xf32>
    %518 = arith.mulf %517, %517 : vector<8x8xf32>
    %519 = arith.mulf %518, %518 : vector<8x8xf32>
    %cst_152 = arith.constant -0.382683426 : f32
    %520 = vector.broadcast %cst_152 : f32 to vector<8x8xf32>
    %521 = arith.mulf %459, %520 : vector<8x8xf32>
    %cst_153 = arith.constant 1.000000e+00 : f32
    %522 = vector.broadcast %cst_153 : f32 to vector<8x8xf32>
    %523 = arith.addf %522, %521 : vector<8x8xf32>
    %cst_154 = arith.constant 0.923879504 : f32
    %524 = vector.broadcast %cst_154 : f32 to vector<8x8xf32>
    %525 = arith.mulf %465, %524 : vector<8x8xf32>
    %526 = arith.addf %523, %525 : vector<8x8xf32>
    %cst_155 = arith.constant 5.000000e-01 : f32
    %527 = vector.broadcast %cst_155 : f32 to vector<8x8xf32>
    %528 = arith.mulf %526, %527 : vector<8x8xf32>
    %529 = arith.mulf %528, %528 : vector<8x8xf32>
    %530 = arith.mulf %529, %529 : vector<8x8xf32>
    %531 = arith.mulf %530, %530 : vector<8x8xf32>
    %cst_156 = arith.constant -0.923879504 : f32
    %532 = vector.broadcast %cst_156 : f32 to vector<8x8xf32>
    %533 = arith.mulf %459, %532 : vector<8x8xf32>
    %cst_157 = arith.constant 1.000000e+00 : f32
    %534 = vector.broadcast %cst_157 : f32 to vector<8x8xf32>
    %535 = arith.addf %534, %533 : vector<8x8xf32>
    %cst_158 = arith.constant 0.382683426 : f32
    %536 = vector.broadcast %cst_158 : f32 to vector<8x8xf32>
    %537 = arith.mulf %465, %536 : vector<8x8xf32>
    %538 = arith.addf %535, %537 : vector<8x8xf32>
    %cst_159 = arith.constant 5.000000e-01 : f32
    %539 = vector.broadcast %cst_159 : f32 to vector<8x8xf32>
    %540 = arith.mulf %538, %539 : vector<8x8xf32>
    %541 = arith.mulf %540, %540 : vector<8x8xf32>
    %542 = arith.mulf %541, %541 : vector<8x8xf32>
    %543 = arith.mulf %542, %542 : vector<8x8xf32>
    %544 = arith.mulf %483, %507 : vector<8x8xf32>
    %545 = arith.mulf %544, %489 : vector<8x8xf32>
    %546 = arith.mulf %483, %519 : vector<8x8xf32>
    %547 = arith.mulf %546, %489 : vector<8x8xf32>
    %548 = arith.mulf %483, %531 : vector<8x8xf32>
    %549 = arith.mulf %548, %489 : vector<8x8xf32>
    %550 = arith.mulf %483, %543 : vector<8x8xf32>
    %551 = arith.mulf %550, %489 : vector<8x8xf32>
    %552 = arith.mulf %483, %507 : vector<8x8xf32>
    %553 = arith.mulf %552, %495 : vector<8x8xf32>
    %554 = arith.mulf %483, %519 : vector<8x8xf32>
    %555 = arith.mulf %554, %495 : vector<8x8xf32>
    %556 = arith.mulf %483, %531 : vector<8x8xf32>
    %557 = arith.mulf %556, %495 : vector<8x8xf32>
    %558 = arith.mulf %483, %543 : vector<8x8xf32>
    %559 = arith.mulf %558, %495 : vector<8x8xf32>
    %560 = tpu.concatenate %545, %547, %549, %551, %553, %555, %557, %559 in 0 : vector<8x8xf32>, vector<8x8xf32>, vector<8x8xf32>, vector<8x8xf32>, vector<8x8xf32>, vector<8x8xf32>, vector<8x8xf32>, vector<8x8xf32> -> vector<64x8xf32>
    %cst_160 = arith.constant dense<0.000000e+00> : vector<64x10xf32>
    %561 = tpu.matmul %560, %438, %cst_160 {dimension_numbers = #tpu.dot_dimension_numbers<[1], [0], [0], [1], [0, 0, 1, 1], [], []>} : vector<64x8xf32>, vector<8x10xf32>, vector<64x10xf32> -> vector<64x10xf32>
    %562 = arith.addf %428, %561 : vector<64x10xf32>
    %563 = arith.index_cast %arg0 : i32 to index
    %c3 = arith.constant 3 : index
    %564 = memref.load %arg1[%563, %c3] : memref<2x8xi32, #tpu.memory_space<smem>>
    %c0_i32_161 = arith.constant 0 : i32
    %565 = arith.cmpi sge, %564, %c0_i32_161 : i32
    %566 = arith.extui %565 : i1 to i32
    %567 = arith.sitofp %566 : i32 to f32
    %c0_i32_162 = arith.constant 0 : i32
    %568 = arith.maxsi %564, %c0_i32_162 : i32
    %569 = arith.index_cast %568 : i32 to index
    %c0_163 = arith.constant 0 : index
    %c0_164 = arith.constant 0 : index
    %570 = vector.load %arg4[%569, %c0_163, %c0_164] : memref<4x4x10xf32, #tpu.memory_space<vmem>>, vector<1x4x10xf32>
    %571 = vector.shape_cast %570 : vector<1x4x10xf32> to vector<4x10xf32>
    %cst_165 = arith.constant dense<0.000000e+00> : vector<8x10xf32>
    %572 = tpu.matmul %3, %571, %cst_165 {dimension_numbers = #tpu.dot_dimension_numbers<[1], [0], [0], [1], [0, 0, 1, 1], [], []>} : vector<8x4xf32>, vector<4x10xf32>, vector<8x10xf32> -> vector<8x10xf32>
    %573 = vector.extract_strided_slice %17 {offsets = [0, 3], sizes = [8, 1], strides = [1, 1]} : vector<8x8xf32> to vector<8x1xf32>
    %574 = vector.extract_strided_slice %16 {offsets = [0, 3], sizes = [8, 1], strides = [1, 1]} : vector<8x8xf32> to vector<8x1xf32>
    %575 = vector.broadcast %574 : vector<8x1xf32> to vector<8x8xf32>
    %576 = arith.addf %16, %575 : vector<8x8xf32>
    %577 = vector.extract_strided_slice %16 {offsets = [3, 0], sizes = [1, 8], strides = [1, 1]} : vector<8x8xf32> to vector<1x8xf32>
    %578 = vector.broadcast %577 : vector<1x8xf32> to vector<8x8xf32>
    %579 = arith.subf %576, %578 : vector<8x8xf32>
    %cst_166 = arith.constant 5.000000e-01 : f32
    %580 = vector.broadcast %cst_166 : f32 to vector<8x8xf32>
    %581 = arith.mulf %580, %579 : vector<8x8xf32>
    %582 = vector.broadcast %573 : vector<8x1xf32> to vector<8x8xf32>
    %583 = arith.mulf %17, %582 : vector<8x8xf32>
    %cst_167 = arith.constant 1.000000e-10 : f32
    %584 = vector.broadcast %cst_167 : f32 to vector<8x8xf32>
    %585 = arith.addf %583, %584 : vector<8x8xf32>
    %586 = tpu.reciprocal %585 {approx = true} : vector<8x8xf32> -> vector<8x8xf32>
    %587 = arith.mulf %585, %586 : vector<8x8xf32>
    %cst_168 = arith.constant 2.000000e+00 : f32
    %588 = vector.broadcast %cst_168 : f32 to vector<8x8xf32>
    %589 = arith.subf %588, %587 : vector<8x8xf32>
    %590 = arith.mulf %586, %589 : vector<8x8xf32>
    %cst_169 = arith.constant 0.949999988 : f32
    %591 = vector.broadcast %cst_169 : f32 to vector<8x8xf32>
    %592 = arith.mulf %591, %581 : vector<8x8xf32>
    %593 = arith.mulf %592, %590 : vector<8x8xf32>
    %594 = arith.mulf %593, %593 : vector<8x8xf32>
    %cst_170 = arith.constant 1.000000e+00 : f32
    %595 = vector.broadcast %cst_170 : f32 to vector<8x8xf32>
    %596 = arith.subf %595, %594 : vector<8x8xf32>
    %cst_171 = arith.constant 0.000000e+00 : f32
    %597 = vector.broadcast %cst_171 : f32 to vector<8x8xf32>
    %598 = arith.maximumf %596, %597 : vector<8x8xf32>
    %599 = math.sqrt %598 : vector<8x8xf32>
    %600 = vector.broadcast %573 : vector<8x1xf32> to vector<8x8xf32>
    %601 = arith.addf %17, %600 : vector<8x8xf32>
    %cst_172 = arith.constant 5.000000e-01 : f32
    %602 = vector.broadcast %cst_172 : f32 to vector<8x8xf32>
    %603 = arith.mulf %602, %601 : vector<8x8xf32>
    %604 = vector.extract_strided_slice %22 {offsets = [0, 3], sizes = [8, 1], strides = [1, 1]} : vector<8x8xf32> to vector<8x1xf32>
    %605 = vector.broadcast %604 : vector<8x1xf32> to vector<8x8xf32>
    %606 = arith.mulf %26, %605 : vector<8x8xf32>
    %607 = vector.extract_strided_slice %22 {offsets = [3, 0], sizes = [1, 8], strides = [1, 1]} : vector<8x8xf32> to vector<1x8xf32>
    %608 = vector.broadcast %607 : vector<1x8xf32> to vector<8x8xf32>
    %609 = arith.mulf %606, %608 : vector<8x8xf32>
    %610 = vector.broadcast %567 : f32 to vector<8x8xf32>
    %611 = arith.mulf %609, %610 : vector<8x8xf32>
    %612 = vector.extract_strided_slice %98 {offsets = [0, 3], sizes = [8, 1], strides = [1, 1]} : vector<8x8xf32> to vector<8x1xf32>
    %613 = vector.broadcast %612 : vector<8x1xf32> to vector<8x8xf32>
    %614 = arith.mulf %98, %613 : vector<8x8xf32>
    %cst_173 = arith.constant 2.000000e+00 : f32
    %615 = vector.broadcast %cst_173 : f32 to vector<8x8xf32>
    %616 = arith.mulf %615, %614 : vector<8x8xf32>
    %617 = arith.mulf %616, %611 : vector<8x8xf32>
    %cst_174 = arith.constant 0.899999976 : f32
    %618 = vector.broadcast %cst_174 : f32 to vector<8x8xf32>
    %619 = arith.subf %603, %618 : vector<8x8xf32>
    %620 = arith.mulf %619, %619 : vector<8x8xf32>
    %cst_175 = arith.constant -8.000000e+00 : f32
    %621 = vector.broadcast %cst_175 : f32 to vector<8x8xf32>
    %622 = arith.mulf %621, %620 : vector<8x8xf32>
    %623 = math.exp %622 : vector<8x8xf32>
    %cst_176 = arith.constant 2.200000e+00 : f32
    %624 = vector.broadcast %cst_176 : f32 to vector<8x8xf32>
    %625 = arith.subf %603, %624 : vector<8x8xf32>
    %626 = arith.mulf %625, %625 : vector<8x8xf32>
    %cst_177 = arith.constant -8.000000e+00 : f32
    %627 = vector.broadcast %cst_177 : f32 to vector<8x8xf32>
    %628 = arith.mulf %627, %626 : vector<8x8xf32>
    %629 = math.exp %628 : vector<8x8xf32>
    %cst_178 = arith.constant 0.923879504 : f32
    %630 = vector.broadcast %cst_178 : f32 to vector<8x8xf32>
    %631 = arith.mulf %593, %630 : vector<8x8xf32>
    %cst_179 = arith.constant 1.000000e+00 : f32
    %632 = vector.broadcast %cst_179 : f32 to vector<8x8xf32>
    %633 = arith.addf %632, %631 : vector<8x8xf32>
    %cst_180 = arith.constant 0.382683426 : f32
    %634 = vector.broadcast %cst_180 : f32 to vector<8x8xf32>
    %635 = arith.mulf %599, %634 : vector<8x8xf32>
    %636 = arith.addf %633, %635 : vector<8x8xf32>
    %cst_181 = arith.constant 5.000000e-01 : f32
    %637 = vector.broadcast %cst_181 : f32 to vector<8x8xf32>
    %638 = arith.mulf %636, %637 : vector<8x8xf32>
    %639 = arith.mulf %638, %638 : vector<8x8xf32>
    %640 = arith.mulf %639, %639 : vector<8x8xf32>
    %641 = arith.mulf %640, %640 : vector<8x8xf32>
    %cst_182 = arith.constant 0.382683426 : f32
    %642 = vector.broadcast %cst_182 : f32 to vector<8x8xf32>
    %643 = arith.mulf %593, %642 : vector<8x8xf32>
    %cst_183 = arith.constant 1.000000e+00 : f32
    %644 = vector.broadcast %cst_183 : f32 to vector<8x8xf32>
    %645 = arith.addf %644, %643 : vector<8x8xf32>
    %cst_184 = arith.constant 0.923879504 : f32
    %646 = vector.broadcast %cst_184 : f32 to vector<8x8xf32>
    %647 = arith.mulf %599, %646 : vector<8x8xf32>
    %648 = arith.addf %645, %647 : vector<8x8xf32>
    %cst_185 = arith.constant 5.000000e-01 : f32
    %649 = vector.broadcast %cst_185 : f32 to vector<8x8xf32>
    %650 = arith.mulf %648, %649 : vector<8x8xf32>
    %651 = arith.mulf %650, %650 : vector<8x8xf32>
    %652 = arith.mulf %651, %651 : vector<8x8xf32>
    %653 = arith.mulf %652, %652 : vector<8x8xf32>
    %cst_186 = arith.constant -0.382683426 : f32
    %654 = vector.broadcast %cst_186 : f32 to vector<8x8xf32>
    %655 = arith.mulf %593, %654 : vector<8x8xf32>
    %cst_187 = arith.constant 1.000000e+00 : f32
    %656 = vector.broadcast %cst_187 : f32 to vector<8x8xf32>
    %657 = arith.addf %656, %655 : vector<8x8xf32>
    %cst_188 = arith.constant 0.923879504 : f32
    %658 = vector.broadcast %cst_188 : f32 to vector<8x8xf32>
    %659 = arith.mulf %599, %658 : vector<8x8xf32>
    %660 = arith.addf %657, %659 : vector<8x8xf32>
    %cst_189 = arith.constant 5.000000e-01 : f32
    %661 = vector.broadcast %cst_189 : f32 to vector<8x8xf32>
    %662 = arith.mulf %660, %661 : vector<8x8xf32>
    %663 = arith.mulf %662, %662 : vector<8x8xf32>
    %664 = arith.mulf %663, %663 : vector<8x8xf32>
    %665 = arith.mulf %664, %664 : vector<8x8xf32>
    %cst_190 = arith.constant -0.923879504 : f32
    %666 = vector.broadcast %cst_190 : f32 to vector<8x8xf32>
    %667 = arith.mulf %593, %666 : vector<8x8xf32>
    %cst_191 = arith.constant 1.000000e+00 : f32
    %668 = vector.broadcast %cst_191 : f32 to vector<8x8xf32>
    %669 = arith.addf %668, %667 : vector<8x8xf32>
    %cst_192 = arith.constant 0.382683426 : f32
    %670 = vector.broadcast %cst_192 : f32 to vector<8x8xf32>
    %671 = arith.mulf %599, %670 : vector<8x8xf32>
    %672 = arith.addf %669, %671 : vector<8x8xf32>
    %cst_193 = arith.constant 5.000000e-01 : f32
    %673 = vector.broadcast %cst_193 : f32 to vector<8x8xf32>
    %674 = arith.mulf %672, %673 : vector<8x8xf32>
    %675 = arith.mulf %674, %674 : vector<8x8xf32>
    %676 = arith.mulf %675, %675 : vector<8x8xf32>
    %677 = arith.mulf %676, %676 : vector<8x8xf32>
    %678 = arith.mulf %617, %641 : vector<8x8xf32>
    %679 = arith.mulf %678, %623 : vector<8x8xf32>
    %680 = arith.mulf %617, %653 : vector<8x8xf32>
    %681 = arith.mulf %680, %623 : vector<8x8xf32>
    %682 = arith.mulf %617, %665 : vector<8x8xf32>
    %683 = arith.mulf %682, %623 : vector<8x8xf32>
    %684 = arith.mulf %617, %677 : vector<8x8xf32>
    %685 = arith.mulf %684, %623 : vector<8x8xf32>
    %686 = arith.mulf %617, %641 : vector<8x8xf32>
    %687 = arith.mulf %686, %629 : vector<8x8xf32>
    %688 = arith.mulf %617, %653 : vector<8x8xf32>
    %689 = arith.mulf %688, %629 : vector<8x8xf32>
    %690 = arith.mulf %617, %665 : vector<8x8xf32>
    %691 = arith.mulf %690, %629 : vector<8x8xf32>
    %692 = arith.mulf %617, %677 : vector<8x8xf32>
    %693 = arith.mulf %692, %629 : vector<8x8xf32>
    %694 = tpu.concatenate %679, %681, %683, %685, %687, %689, %691, %693 in 0 : vector<8x8xf32>, vector<8x8xf32>, vector<8x8xf32>, vector<8x8xf32>, vector<8x8xf32>, vector<8x8xf32>, vector<8x8xf32>, vector<8x8xf32> -> vector<64x8xf32>
    %cst_194 = arith.constant dense<0.000000e+00> : vector<64x10xf32>
    %695 = tpu.matmul %694, %572, %cst_194 {dimension_numbers = #tpu.dot_dimension_numbers<[1], [0], [0], [1], [0, 0, 1, 1], [], []>} : vector<64x8xf32>, vector<8x10xf32>, vector<64x10xf32> -> vector<64x10xf32>
    %696 = arith.addf %562, %695 : vector<64x10xf32>
    %697 = arith.index_cast %arg0 : i32 to index
    %c4 = arith.constant 4 : index
    %698 = memref.load %arg1[%697, %c4] : memref<2x8xi32, #tpu.memory_space<smem>>
    %c0_i32_195 = arith.constant 0 : i32
    %699 = arith.cmpi sge, %698, %c0_i32_195 : i32
    %700 = arith.extui %699 : i1 to i32
    %701 = arith.sitofp %700 : i32 to f32
    %c0_i32_196 = arith.constant 0 : i32
    %702 = arith.maxsi %698, %c0_i32_196 : i32
    %703 = arith.index_cast %702 : i32 to index
    %c0_197 = arith.constant 0 : index
    %c0_198 = arith.constant 0 : index
    %704 = vector.load %arg4[%703, %c0_197, %c0_198] : memref<4x4x10xf32, #tpu.memory_space<vmem>>, vector<1x4x10xf32>
    %705 = vector.shape_cast %704 : vector<1x4x10xf32> to vector<4x10xf32>
    %cst_199 = arith.constant dense<0.000000e+00> : vector<8x10xf32>
    %706 = tpu.matmul %3, %705, %cst_199 {dimension_numbers = #tpu.dot_dimension_numbers<[1], [0], [0], [1], [0, 0, 1, 1], [], []>} : vector<8x4xf32>, vector<4x10xf32>, vector<8x10xf32> -> vector<8x10xf32>
    %707 = vector.extract_strided_slice %17 {offsets = [0, 4], sizes = [8, 1], strides = [1, 1]} : vector<8x8xf32> to vector<8x1xf32>
    %708 = vector.extract_strided_slice %16 {offsets = [0, 4], sizes = [8, 1], strides = [1, 1]} : vector<8x8xf32> to vector<8x1xf32>
    %709 = vector.broadcast %708 : vector<8x1xf32> to vector<8x8xf32>
    %710 = arith.addf %16, %709 : vector<8x8xf32>
    %711 = vector.extract_strided_slice %16 {offsets = [4, 0], sizes = [1, 8], strides = [1, 1]} : vector<8x8xf32> to vector<1x8xf32>
    %712 = vector.broadcast %711 : vector<1x8xf32> to vector<8x8xf32>
    %713 = arith.subf %710, %712 : vector<8x8xf32>
    %cst_200 = arith.constant 5.000000e-01 : f32
    %714 = vector.broadcast %cst_200 : f32 to vector<8x8xf32>
    %715 = arith.mulf %714, %713 : vector<8x8xf32>
    %716 = vector.broadcast %707 : vector<8x1xf32> to vector<8x8xf32>
    %717 = arith.mulf %17, %716 : vector<8x8xf32>
    %cst_201 = arith.constant 1.000000e-10 : f32
    %718 = vector.broadcast %cst_201 : f32 to vector<8x8xf32>
    %719 = arith.addf %717, %718 : vector<8x8xf32>
    %720 = tpu.reciprocal %719 {approx = true} : vector<8x8xf32> -> vector<8x8xf32>
    %721 = arith.mulf %719, %720 : vector<8x8xf32>
    %cst_202 = arith.constant 2.000000e+00 : f32
    %722 = vector.broadcast %cst_202 : f32 to vector<8x8xf32>
    %723 = arith.subf %722, %721 : vector<8x8xf32>
    %724 = arith.mulf %720, %723 : vector<8x8xf32>
    %cst_203 = arith.constant 0.949999988 : f32
    %725 = vector.broadcast %cst_203 : f32 to vector<8x8xf32>
    %726 = arith.mulf %725, %715 : vector<8x8xf32>
    %727 = arith.mulf %726, %724 : vector<8x8xf32>
    %728 = arith.mulf %727, %727 : vector<8x8xf32>
    %cst_204 = arith.constant 1.000000e+00 : f32
    %729 = vector.broadcast %cst_204 : f32 to vector<8x8xf32>
    %730 = arith.subf %729, %728 : vector<8x8xf32>
    %cst_205 = arith.constant 0.000000e+00 : f32
    %731 = vector.broadcast %cst_205 : f32 to vector<8x8xf32>
    %732 = arith.maximumf %730, %731 : vector<8x8xf32>
    %733 = math.sqrt %732 : vector<8x8xf32>
    %734 = vector.broadcast %707 : vector<8x1xf32> to vector<8x8xf32>
    %735 = arith.addf %17, %734 : vector<8x8xf32>
    %cst_206 = arith.constant 5.000000e-01 : f32
    %736 = vector.broadcast %cst_206 : f32 to vector<8x8xf32>
    %737 = arith.mulf %736, %735 : vector<8x8xf32>
    %738 = vector.extract_strided_slice %22 {offsets = [0, 4], sizes = [8, 1], strides = [1, 1]} : vector<8x8xf32> to vector<8x1xf32>
    %739 = vector.broadcast %738 : vector<8x1xf32> to vector<8x8xf32>
    %740 = arith.mulf %26, %739 : vector<8x8xf32>
    %741 = vector.extract_strided_slice %22 {offsets = [4, 0], sizes = [1, 8], strides = [1, 1]} : vector<8x8xf32> to vector<1x8xf32>
    %742 = vector.broadcast %741 : vector<1x8xf32> to vector<8x8xf32>
    %743 = arith.mulf %740, %742 : vector<8x8xf32>
    %744 = vector.broadcast %701 : f32 to vector<8x8xf32>
    %745 = arith.mulf %743, %744 : vector<8x8xf32>
    %746 = vector.extract_strided_slice %98 {offsets = [0, 4], sizes = [8, 1], strides = [1, 1]} : vector<8x8xf32> to vector<8x1xf32>
    %747 = vector.broadcast %746 : vector<8x1xf32> to vector<8x8xf32>
    %748 = arith.mulf %98, %747 : vector<8x8xf32>
    %cst_207 = arith.constant 2.000000e+00 : f32
    %749 = vector.broadcast %cst_207 : f32 to vector<8x8xf32>
    %750 = arith.mulf %749, %748 : vector<8x8xf32>
    %751 = arith.mulf %750, %745 : vector<8x8xf32>
    %cst_208 = arith.constant 0.899999976 : f32
    %752 = vector.broadcast %cst_208 : f32 to vector<8x8xf32>
    %753 = arith.subf %737, %752 : vector<8x8xf32>
    %754 = arith.mulf %753, %753 : vector<8x8xf32>
    %cst_209 = arith.constant -8.000000e+00 : f32
    %755 = vector.broadcast %cst_209 : f32 to vector<8x8xf32>
    %756 = arith.mulf %755, %754 : vector<8x8xf32>
    %757 = math.exp %756 : vector<8x8xf32>
    %cst_210 = arith.constant 2.200000e+00 : f32
    %758 = vector.broadcast %cst_210 : f32 to vector<8x8xf32>
    %759 = arith.subf %737, %758 : vector<8x8xf32>
    %760 = arith.mulf %759, %759 : vector<8x8xf32>
    %cst_211 = arith.constant -8.000000e+00 : f32
    %761 = vector.broadcast %cst_211 : f32 to vector<8x8xf32>
    %762 = arith.mulf %761, %760 : vector<8x8xf32>
    %763 = math.exp %762 : vector<8x8xf32>
    %cst_212 = arith.constant 0.923879504 : f32
    %764 = vector.broadcast %cst_212 : f32 to vector<8x8xf32>
    %765 = arith.mulf %727, %764 : vector<8x8xf32>
    %cst_213 = arith.constant 1.000000e+00 : f32
    %766 = vector.broadcast %cst_213 : f32 to vector<8x8xf32>
    %767 = arith.addf %766, %765 : vector<8x8xf32>
    %cst_214 = arith.constant 0.382683426 : f32
    %768 = vector.broadcast %cst_214 : f32 to vector<8x8xf32>
    %769 = arith.mulf %733, %768 : vector<8x8xf32>
    %770 = arith.addf %767, %769 : vector<8x8xf32>
    %cst_215 = arith.constant 5.000000e-01 : f32
    %771 = vector.broadcast %cst_215 : f32 to vector<8x8xf32>
    %772 = arith.mulf %770, %771 : vector<8x8xf32>
    %773 = arith.mulf %772, %772 : vector<8x8xf32>
    %774 = arith.mulf %773, %773 : vector<8x8xf32>
    %775 = arith.mulf %774, %774 : vector<8x8xf32>
    %cst_216 = arith.constant 0.382683426 : f32
    %776 = vector.broadcast %cst_216 : f32 to vector<8x8xf32>
    %777 = arith.mulf %727, %776 : vector<8x8xf32>
    %cst_217 = arith.constant 1.000000e+00 : f32
    %778 = vector.broadcast %cst_217 : f32 to vector<8x8xf32>
    %779 = arith.addf %778, %777 : vector<8x8xf32>
    %cst_218 = arith.constant 0.923879504 : f32
    %780 = vector.broadcast %cst_218 : f32 to vector<8x8xf32>
    %781 = arith.mulf %733, %780 : vector<8x8xf32>
    %782 = arith.addf %779, %781 : vector<8x8xf32>
    %cst_219 = arith.constant 5.000000e-01 : f32
    %783 = vector.broadcast %cst_219 : f32 to vector<8x8xf32>
    %784 = arith.mulf %782, %783 : vector<8x8xf32>
    %785 = arith.mulf %784, %784 : vector<8x8xf32>
    %786 = arith.mulf %785, %785 : vector<8x8xf32>
    %787 = arith.mulf %786, %786 : vector<8x8xf32>
    %cst_220 = arith.constant -0.382683426 : f32
    %788 = vector.broadcast %cst_220 : f32 to vector<8x8xf32>
    %789 = arith.mulf %727, %788 : vector<8x8xf32>
    %cst_221 = arith.constant 1.000000e+00 : f32
    %790 = vector.broadcast %cst_221 : f32 to vector<8x8xf32>
    %791 = arith.addf %790, %789 : vector<8x8xf32>
    %cst_222 = arith.constant 0.923879504 : f32
    %792 = vector.broadcast %cst_222 : f32 to vector<8x8xf32>
    %793 = arith.mulf %733, %792 : vector<8x8xf32>
    %794 = arith.addf %791, %793 : vector<8x8xf32>
    %cst_223 = arith.constant 5.000000e-01 : f32
    %795 = vector.broadcast %cst_223 : f32 to vector<8x8xf32>
    %796 = arith.mulf %794, %795 : vector<8x8xf32>
    %797 = arith.mulf %796, %796 : vector<8x8xf32>
    %798 = arith.mulf %797, %797 : vector<8x8xf32>
    %799 = arith.mulf %798, %798 : vector<8x8xf32>
    %cst_224 = arith.constant -0.923879504 : f32
    %800 = vector.broadcast %cst_224 : f32 to vector<8x8xf32>
    %801 = arith.mulf %727, %800 : vector<8x8xf32>
    %cst_225 = arith.constant 1.000000e+00 : f32
    %802 = vector.broadcast %cst_225 : f32 to vector<8x8xf32>
    %803 = arith.addf %802, %801 : vector<8x8xf32>
    %cst_226 = arith.constant 0.382683426 : f32
    %804 = vector.broadcast %cst_226 : f32 to vector<8x8xf32>
    %805 = arith.mulf %733, %804 : vector<8x8xf32>
    %806 = arith.addf %803, %805 : vector<8x8xf32>
    %cst_227 = arith.constant 5.000000e-01 : f32
    %807 = vector.broadcast %cst_227 : f32 to vector<8x8xf32>
    %808 = arith.mulf %806, %807 : vector<8x8xf32>
    %809 = arith.mulf %808, %808 : vector<8x8xf32>
    %810 = arith.mulf %809, %809 : vector<8x8xf32>
    %811 = arith.mulf %810, %810 : vector<8x8xf32>
    %812 = arith.mulf %751, %775 : vector<8x8xf32>
    %813 = arith.mulf %812, %757 : vector<8x8xf32>
    %814 = arith.mulf %751, %787 : vector<8x8xf32>
    %815 = arith.mulf %814, %757 : vector<8x8xf32>
    %816 = arith.mulf %751, %799 : vector<8x8xf32>
    %817 = arith.mulf %816, %757 : vector<8x8xf32>
    %818 = arith.mulf %751, %811 : vector<8x8xf32>
    %819 = arith.mulf %818, %757 : vector<8x8xf32>
    %820 = arith.mulf %751, %775 : vector<8x8xf32>
    %821 = arith.mulf %820, %763 : vector<8x8xf32>
    %822 = arith.mulf %751, %787 : vector<8x8xf32>
    %823 = arith.mulf %822, %763 : vector<8x8xf32>
    %824 = arith.mulf %751, %799 : vector<8x8xf32>
    %825 = arith.mulf %824, %763 : vector<8x8xf32>
    %826 = arith.mulf %751, %811 : vector<8x8xf32>
    %827 = arith.mulf %826, %763 : vector<8x8xf32>
    %828 = tpu.concatenate %813, %815, %817, %819, %821, %823, %825, %827 in 0 : vector<8x8xf32>, vector<8x8xf32>, vector<8x8xf32>, vector<8x8xf32>, vector<8x8xf32>, vector<8x8xf32>, vector<8x8xf32>, vector<8x8xf32> -> vector<64x8xf32>
    %cst_228 = arith.constant dense<0.000000e+00> : vector<64x10xf32>
    %829 = tpu.matmul %828, %706, %cst_228 {dimension_numbers = #tpu.dot_dimension_numbers<[1], [0], [0], [1], [0, 0, 1, 1], [], []>} : vector<64x8xf32>, vector<8x10xf32>, vector<64x10xf32> -> vector<64x10xf32>
    %830 = arith.addf %696, %829 : vector<64x10xf32>
    %831 = arith.index_cast %arg0 : i32 to index
    %c5 = arith.constant 5 : index
    %832 = memref.load %arg1[%831, %c5] : memref<2x8xi32, #tpu.memory_space<smem>>
    %c0_i32_229 = arith.constant 0 : i32
    %833 = arith.cmpi sge, %832, %c0_i32_229 : i32
    %834 = arith.extui %833 : i1 to i32
    %835 = arith.sitofp %834 : i32 to f32
    %c0_i32_230 = arith.constant 0 : i32
    %836 = arith.maxsi %832, %c0_i32_230 : i32
    %837 = arith.index_cast %836 : i32 to index
    %c0_231 = arith.constant 0 : index
    %c0_232 = arith.constant 0 : index
    %838 = vector.load %arg4[%837, %c0_231, %c0_232] : memref<4x4x10xf32, #tpu.memory_space<vmem>>, vector<1x4x10xf32>
    %839 = vector.shape_cast %838 : vector<1x4x10xf32> to vector<4x10xf32>
    %cst_233 = arith.constant dense<0.000000e+00> : vector<8x10xf32>
    %840 = tpu.matmul %3, %839, %cst_233 {dimension_numbers = #tpu.dot_dimension_numbers<[1], [0], [0], [1], [0, 0, 1, 1], [], []>} : vector<8x4xf32>, vector<4x10xf32>, vector<8x10xf32> -> vector<8x10xf32>
    %841 = vector.extract_strided_slice %17 {offsets = [0, 5], sizes = [8, 1], strides = [1, 1]} : vector<8x8xf32> to vector<8x1xf32>
    %842 = vector.extract_strided_slice %16 {offsets = [0, 5], sizes = [8, 1], strides = [1, 1]} : vector<8x8xf32> to vector<8x1xf32>
    %843 = vector.broadcast %842 : vector<8x1xf32> to vector<8x8xf32>
    %844 = arith.addf %16, %843 : vector<8x8xf32>
    %845 = vector.extract_strided_slice %16 {offsets = [5, 0], sizes = [1, 8], strides = [1, 1]} : vector<8x8xf32> to vector<1x8xf32>
    %846 = vector.broadcast %845 : vector<1x8xf32> to vector<8x8xf32>
    %847 = arith.subf %844, %846 : vector<8x8xf32>
    %cst_234 = arith.constant 5.000000e-01 : f32
    %848 = vector.broadcast %cst_234 : f32 to vector<8x8xf32>
    %849 = arith.mulf %848, %847 : vector<8x8xf32>
    %850 = vector.broadcast %841 : vector<8x1xf32> to vector<8x8xf32>
    %851 = arith.mulf %17, %850 : vector<8x8xf32>
    %cst_235 = arith.constant 1.000000e-10 : f32
    %852 = vector.broadcast %cst_235 : f32 to vector<8x8xf32>
    %853 = arith.addf %851, %852 : vector<8x8xf32>
    %854 = tpu.reciprocal %853 {approx = true} : vector<8x8xf32> -> vector<8x8xf32>
    %855 = arith.mulf %853, %854 : vector<8x8xf32>
    %cst_236 = arith.constant 2.000000e+00 : f32
    %856 = vector.broadcast %cst_236 : f32 to vector<8x8xf32>
    %857 = arith.subf %856, %855 : vector<8x8xf32>
    %858 = arith.mulf %854, %857 : vector<8x8xf32>
    %cst_237 = arith.constant 0.949999988 : f32
    %859 = vector.broadcast %cst_237 : f32 to vector<8x8xf32>
    %860 = arith.mulf %859, %849 : vector<8x8xf32>
    %861 = arith.mulf %860, %858 : vector<8x8xf32>
    %862 = arith.mulf %861, %861 : vector<8x8xf32>
    %cst_238 = arith.constant 1.000000e+00 : f32
    %863 = vector.broadcast %cst_238 : f32 to vector<8x8xf32>
    %864 = arith.subf %863, %862 : vector<8x8xf32>
    %cst_239 = arith.constant 0.000000e+00 : f32
    %865 = vector.broadcast %cst_239 : f32 to vector<8x8xf32>
    %866 = arith.maximumf %864, %865 : vector<8x8xf32>
    %867 = math.sqrt %866 : vector<8x8xf32>
    %868 = vector.broadcast %841 : vector<8x1xf32> to vector<8x8xf32>
    %869 = arith.addf %17, %868 : vector<8x8xf32>
    %cst_240 = arith.constant 5.000000e-01 : f32
    %870 = vector.broadcast %cst_240 : f32 to vector<8x8xf32>
    %871 = arith.mulf %870, %869 : vector<8x8xf32>
    %872 = vector.extract_strided_slice %22 {offsets = [0, 5], sizes = [8, 1], strides = [1, 1]} : vector<8x8xf32> to vector<8x1xf32>
    %873 = vector.broadcast %872 : vector<8x1xf32> to vector<8x8xf32>
    %874 = arith.mulf %26, %873 : vector<8x8xf32>
    %875 = vector.extract_strided_slice %22 {offsets = [5, 0], sizes = [1, 8], strides = [1, 1]} : vector<8x8xf32> to vector<1x8xf32>
    %876 = vector.broadcast %875 : vector<1x8xf32> to vector<8x8xf32>
    %877 = arith.mulf %874, %876 : vector<8x8xf32>
    %878 = vector.broadcast %835 : f32 to vector<8x8xf32>
    %879 = arith.mulf %877, %878 : vector<8x8xf32>
    %880 = vector.extract_strided_slice %98 {offsets = [0, 5], sizes = [8, 1], strides = [1, 1]} : vector<8x8xf32> to vector<8x1xf32>
    %881 = vector.broadcast %880 : vector<8x1xf32> to vector<8x8xf32>
    %882 = arith.mulf %98, %881 : vector<8x8xf32>
    %cst_241 = arith.constant 2.000000e+00 : f32
    %883 = vector.broadcast %cst_241 : f32 to vector<8x8xf32>
    %884 = arith.mulf %883, %882 : vector<8x8xf32>
    %885 = arith.mulf %884, %879 : vector<8x8xf32>
    %cst_242 = arith.constant 0.899999976 : f32
    %886 = vector.broadcast %cst_242 : f32 to vector<8x8xf32>
    %887 = arith.subf %871, %886 : vector<8x8xf32>
    %888 = arith.mulf %887, %887 : vector<8x8xf32>
    %cst_243 = arith.constant -8.000000e+00 : f32
    %889 = vector.broadcast %cst_243 : f32 to vector<8x8xf32>
    %890 = arith.mulf %889, %888 : vector<8x8xf32>
    %891 = math.exp %890 : vector<8x8xf32>
    %cst_244 = arith.constant 2.200000e+00 : f32
    %892 = vector.broadcast %cst_244 : f32 to vector<8x8xf32>
    %893 = arith.subf %871, %892 : vector<8x8xf32>
    %894 = arith.mulf %893, %893 : vector<8x8xf32>
    %cst_245 = arith.constant -8.000000e+00 : f32
    %895 = vector.broadcast %cst_245 : f32 to vector<8x8xf32>
    %896 = arith.mulf %895, %894 : vector<8x8xf32>
    %897 = math.exp %896 : vector<8x8xf32>
    %cst_246 = arith.constant 0.923879504 : f32
    %898 = vector.broadcast %cst_246 : f32 to vector<8x8xf32>
    %899 = arith.mulf %861, %898 : vector<8x8xf32>
    %cst_247 = arith.constant 1.000000e+00 : f32
    %900 = vector.broadcast %cst_247 : f32 to vector<8x8xf32>
    %901 = arith.addf %900, %899 : vector<8x8xf32>
    %cst_248 = arith.constant 0.382683426 : f32
    %902 = vector.broadcast %cst_248 : f32 to vector<8x8xf32>
    %903 = arith.mulf %867, %902 : vector<8x8xf32>
    %904 = arith.addf %901, %903 : vector<8x8xf32>
    %cst_249 = arith.constant 5.000000e-01 : f32
    %905 = vector.broadcast %cst_249 : f32 to vector<8x8xf32>
    %906 = arith.mulf %904, %905 : vector<8x8xf32>
    %907 = arith.mulf %906, %906 : vector<8x8xf32>
    %908 = arith.mulf %907, %907 : vector<8x8xf32>
    %909 = arith.mulf %908, %908 : vector<8x8xf32>
    %cst_250 = arith.constant 0.382683426 : f32
    %910 = vector.broadcast %cst_250 : f32 to vector<8x8xf32>
    %911 = arith.mulf %861, %910 : vector<8x8xf32>
    %cst_251 = arith.constant 1.000000e+00 : f32
    %912 = vector.broadcast %cst_251 : f32 to vector<8x8xf32>
    %913 = arith.addf %912, %911 : vector<8x8xf32>
    %cst_252 = arith.constant 0.923879504 : f32
    %914 = vector.broadcast %cst_252 : f32 to vector<8x8xf32>
    %915 = arith.mulf %867, %914 : vector<8x8xf32>
    %916 = arith.addf %913, %915 : vector<8x8xf32>
    %cst_253 = arith.constant 5.000000e-01 : f32
    %917 = vector.broadcast %cst_253 : f32 to vector<8x8xf32>
    %918 = arith.mulf %916, %917 : vector<8x8xf32>
    %919 = arith.mulf %918, %918 : vector<8x8xf32>
    %920 = arith.mulf %919, %919 : vector<8x8xf32>
    %921 = arith.mulf %920, %920 : vector<8x8xf32>
    %cst_254 = arith.constant -0.382683426 : f32
    %922 = vector.broadcast %cst_254 : f32 to vector<8x8xf32>
    %923 = arith.mulf %861, %922 : vector<8x8xf32>
    %cst_255 = arith.constant 1.000000e+00 : f32
    %924 = vector.broadcast %cst_255 : f32 to vector<8x8xf32>
    %925 = arith.addf %924, %923 : vector<8x8xf32>
    %cst_256 = arith.constant 0.923879504 : f32
    %926 = vector.broadcast %cst_256 : f32 to vector<8x8xf32>
    %927 = arith.mulf %867, %926 : vector<8x8xf32>
    %928 = arith.addf %925, %927 : vector<8x8xf32>
    %cst_257 = arith.constant 5.000000e-01 : f32
    %929 = vector.broadcast %cst_257 : f32 to vector<8x8xf32>
    %930 = arith.mulf %928, %929 : vector<8x8xf32>
    %931 = arith.mulf %930, %930 : vector<8x8xf32>
    %932 = arith.mulf %931, %931 : vector<8x8xf32>
    %933 = arith.mulf %932, %932 : vector<8x8xf32>
    %cst_258 = arith.constant -0.923879504 : f32
    %934 = vector.broadcast %cst_258 : f32 to vector<8x8xf32>
    %935 = arith.mulf %861, %934 : vector<8x8xf32>
    %cst_259 = arith.constant 1.000000e+00 : f32
    %936 = vector.broadcast %cst_259 : f32 to vector<8x8xf32>
    %937 = arith.addf %936, %935 : vector<8x8xf32>
    %cst_260 = arith.constant 0.382683426 : f32
    %938 = vector.broadcast %cst_260 : f32 to vector<8x8xf32>
    %939 = arith.mulf %867, %938 : vector<8x8xf32>
    %940 = arith.addf %937, %939 : vector<8x8xf32>
    %cst_261 = arith.constant 5.000000e-01 : f32
    %941 = vector.broadcast %cst_261 : f32 to vector<8x8xf32>
    %942 = arith.mulf %940, %941 : vector<8x8xf32>
    %943 = arith.mulf %942, %942 : vector<8x8xf32>
    %944 = arith.mulf %943, %943 : vector<8x8xf32>
    %945 = arith.mulf %944, %944 : vector<8x8xf32>
    %946 = arith.mulf %885, %909 : vector<8x8xf32>
    %947 = arith.mulf %946, %891 : vector<8x8xf32>
    %948 = arith.mulf %885, %921 : vector<8x8xf32>
    %949 = arith.mulf %948, %891 : vector<8x8xf32>
    %950 = arith.mulf %885, %933 : vector<8x8xf32>
    %951 = arith.mulf %950, %891 : vector<8x8xf32>
    %952 = arith.mulf %885, %945 : vector<8x8xf32>
    %953 = arith.mulf %952, %891 : vector<8x8xf32>
    %954 = arith.mulf %885, %909 : vector<8x8xf32>
    %955 = arith.mulf %954, %897 : vector<8x8xf32>
    %956 = arith.mulf %885, %921 : vector<8x8xf32>
    %957 = arith.mulf %956, %897 : vector<8x8xf32>
    %958 = arith.mulf %885, %933 : vector<8x8xf32>
    %959 = arith.mulf %958, %897 : vector<8x8xf32>
    %960 = arith.mulf %885, %945 : vector<8x8xf32>
    %961 = arith.mulf %960, %897 : vector<8x8xf32>
    %962 = tpu.concatenate %947, %949, %951, %953, %955, %957, %959, %961 in 0 : vector<8x8xf32>, vector<8x8xf32>, vector<8x8xf32>, vector<8x8xf32>, vector<8x8xf32>, vector<8x8xf32>, vector<8x8xf32>, vector<8x8xf32> -> vector<64x8xf32>
    %cst_262 = arith.constant dense<0.000000e+00> : vector<64x10xf32>
    %963 = tpu.matmul %962, %840, %cst_262 {dimension_numbers = #tpu.dot_dimension_numbers<[1], [0], [0], [1], [0, 0, 1, 1], [], []>} : vector<64x8xf32>, vector<8x10xf32>, vector<64x10xf32> -> vector<64x10xf32>
    %964 = arith.addf %830, %963 : vector<64x10xf32>
    %965 = arith.index_cast %arg0 : i32 to index
    %c6 = arith.constant 6 : index
    %966 = memref.load %arg1[%965, %c6] : memref<2x8xi32, #tpu.memory_space<smem>>
    %c0_i32_263 = arith.constant 0 : i32
    %967 = arith.cmpi sge, %966, %c0_i32_263 : i32
    %968 = arith.extui %967 : i1 to i32
    %969 = arith.sitofp %968 : i32 to f32
    %c0_i32_264 = arith.constant 0 : i32
    %970 = arith.maxsi %966, %c0_i32_264 : i32
    %971 = arith.index_cast %970 : i32 to index
    %c0_265 = arith.constant 0 : index
    %c0_266 = arith.constant 0 : index
    %972 = vector.load %arg4[%971, %c0_265, %c0_266] : memref<4x4x10xf32, #tpu.memory_space<vmem>>, vector<1x4x10xf32>
    %973 = vector.shape_cast %972 : vector<1x4x10xf32> to vector<4x10xf32>
    %cst_267 = arith.constant dense<0.000000e+00> : vector<8x10xf32>
    %974 = tpu.matmul %3, %973, %cst_267 {dimension_numbers = #tpu.dot_dimension_numbers<[1], [0], [0], [1], [0, 0, 1, 1], [], []>} : vector<8x4xf32>, vector<4x10xf32>, vector<8x10xf32> -> vector<8x10xf32>
    %975 = vector.extract_strided_slice %17 {offsets = [0, 6], sizes = [8, 1], strides = [1, 1]} : vector<8x8xf32> to vector<8x1xf32>
    %976 = vector.extract_strided_slice %16 {offsets = [0, 6], sizes = [8, 1], strides = [1, 1]} : vector<8x8xf32> to vector<8x1xf32>
    %977 = vector.broadcast %976 : vector<8x1xf32> to vector<8x8xf32>
    %978 = arith.addf %16, %977 : vector<8x8xf32>
    %979 = vector.extract_strided_slice %16 {offsets = [6, 0], sizes = [1, 8], strides = [1, 1]} : vector<8x8xf32> to vector<1x8xf32>
    %980 = vector.broadcast %979 : vector<1x8xf32> to vector<8x8xf32>
    %981 = arith.subf %978, %980 : vector<8x8xf32>
    %cst_268 = arith.constant 5.000000e-01 : f32
    %982 = vector.broadcast %cst_268 : f32 to vector<8x8xf32>
    %983 = arith.mulf %982, %981 : vector<8x8xf32>
    %984 = vector.broadcast %975 : vector<8x1xf32> to vector<8x8xf32>
    %985 = arith.mulf %17, %984 : vector<8x8xf32>
    %cst_269 = arith.constant 1.000000e-10 : f32
    %986 = vector.broadcast %cst_269 : f32 to vector<8x8xf32>
    %987 = arith.addf %985, %986 : vector<8x8xf32>
    %988 = tpu.reciprocal %987 {approx = true} : vector<8x8xf32> -> vector<8x8xf32>
    %989 = arith.mulf %987, %988 : vector<8x8xf32>
    %cst_270 = arith.constant 2.000000e+00 : f32
    %990 = vector.broadcast %cst_270 : f32 to vector<8x8xf32>
    %991 = arith.subf %990, %989 : vector<8x8xf32>
    %992 = arith.mulf %988, %991 : vector<8x8xf32>
    %cst_271 = arith.constant 0.949999988 : f32
    %993 = vector.broadcast %cst_271 : f32 to vector<8x8xf32>
    %994 = arith.mulf %993, %983 : vector<8x8xf32>
    %995 = arith.mulf %994, %992 : vector<8x8xf32>
    %996 = arith.mulf %995, %995 : vector<8x8xf32>
    %cst_272 = arith.constant 1.000000e+00 : f32
    %997 = vector.broadcast %cst_272 : f32 to vector<8x8xf32>
    %998 = arith.subf %997, %996 : vector<8x8xf32>
    %cst_273 = arith.constant 0.000000e+00 : f32
    %999 = vector.broadcast %cst_273 : f32 to vector<8x8xf32>
    %1000 = arith.maximumf %998, %999 : vector<8x8xf32>
    %1001 = math.sqrt %1000 : vector<8x8xf32>
    %1002 = vector.broadcast %975 : vector<8x1xf32> to vector<8x8xf32>
    %1003 = arith.addf %17, %1002 : vector<8x8xf32>
    %cst_274 = arith.constant 5.000000e-01 : f32
    %1004 = vector.broadcast %cst_274 : f32 to vector<8x8xf32>
    %1005 = arith.mulf %1004, %1003 : vector<8x8xf32>
    %1006 = vector.extract_strided_slice %22 {offsets = [0, 6], sizes = [8, 1], strides = [1, 1]} : vector<8x8xf32> to vector<8x1xf32>
    %1007 = vector.broadcast %1006 : vector<8x1xf32> to vector<8x8xf32>
    %1008 = arith.mulf %26, %1007 : vector<8x8xf32>
    %1009 = vector.extract_strided_slice %22 {offsets = [6, 0], sizes = [1, 8], strides = [1, 1]} : vector<8x8xf32> to vector<1x8xf32>
    %1010 = vector.broadcast %1009 : vector<1x8xf32> to vector<8x8xf32>
    %1011 = arith.mulf %1008, %1010 : vector<8x8xf32>
    %1012 = vector.broadcast %969 : f32 to vector<8x8xf32>
    %1013 = arith.mulf %1011, %1012 : vector<8x8xf32>
    %1014 = vector.extract_strided_slice %98 {offsets = [0, 6], sizes = [8, 1], strides = [1, 1]} : vector<8x8xf32> to vector<8x1xf32>
    %1015 = vector.broadcast %1014 : vector<8x1xf32> to vector<8x8xf32>
    %1016 = arith.mulf %98, %1015 : vector<8x8xf32>
    %cst_275 = arith.constant 2.000000e+00 : f32
    %1017 = vector.broadcast %cst_275 : f32 to vector<8x8xf32>
    %1018 = arith.mulf %1017, %1016 : vector<8x8xf32>
    %1019 = arith.mulf %1018, %1013 : vector<8x8xf32>
    %cst_276 = arith.constant 0.899999976 : f32
    %1020 = vector.broadcast %cst_276 : f32 to vector<8x8xf32>
    %1021 = arith.subf %1005, %1020 : vector<8x8xf32>
    %1022 = arith.mulf %1021, %1021 : vector<8x8xf32>
    %cst_277 = arith.constant -8.000000e+00 : f32
    %1023 = vector.broadcast %cst_277 : f32 to vector<8x8xf32>
    %1024 = arith.mulf %1023, %1022 : vector<8x8xf32>
    %1025 = math.exp %1024 : vector<8x8xf32>
    %cst_278 = arith.constant 2.200000e+00 : f32
    %1026 = vector.broadcast %cst_278 : f32 to vector<8x8xf32>
    %1027 = arith.subf %1005, %1026 : vector<8x8xf32>
    %1028 = arith.mulf %1027, %1027 : vector<8x8xf32>
    %cst_279 = arith.constant -8.000000e+00 : f32
    %1029 = vector.broadcast %cst_279 : f32 to vector<8x8xf32>
    %1030 = arith.mulf %1029, %1028 : vector<8x8xf32>
    %1031 = math.exp %1030 : vector<8x8xf32>
    %cst_280 = arith.constant 0.923879504 : f32
    %1032 = vector.broadcast %cst_280 : f32 to vector<8x8xf32>
    %1033 = arith.mulf %995, %1032 : vector<8x8xf32>
    %cst_281 = arith.constant 1.000000e+00 : f32
    %1034 = vector.broadcast %cst_281 : f32 to vector<8x8xf32>
    %1035 = arith.addf %1034, %1033 : vector<8x8xf32>
    %cst_282 = arith.constant 0.382683426 : f32
    %1036 = vector.broadcast %cst_282 : f32 to vector<8x8xf32>
    %1037 = arith.mulf %1001, %1036 : vector<8x8xf32>
    %1038 = arith.addf %1035, %1037 : vector<8x8xf32>
    %cst_283 = arith.constant 5.000000e-01 : f32
    %1039 = vector.broadcast %cst_283 : f32 to vector<8x8xf32>
    %1040 = arith.mulf %1038, %1039 : vector<8x8xf32>
    %1041 = arith.mulf %1040, %1040 : vector<8x8xf32>
    %1042 = arith.mulf %1041, %1041 : vector<8x8xf32>
    %1043 = arith.mulf %1042, %1042 : vector<8x8xf32>
    %cst_284 = arith.constant 0.382683426 : f32
    %1044 = vector.broadcast %cst_284 : f32 to vector<8x8xf32>
    %1045 = arith.mulf %995, %1044 : vector<8x8xf32>
    %cst_285 = arith.constant 1.000000e+00 : f32
    %1046 = vector.broadcast %cst_285 : f32 to vector<8x8xf32>
    %1047 = arith.addf %1046, %1045 : vector<8x8xf32>
    %cst_286 = arith.constant 0.923879504 : f32
    %1048 = vector.broadcast %cst_286 : f32 to vector<8x8xf32>
    %1049 = arith.mulf %1001, %1048 : vector<8x8xf32>
    %1050 = arith.addf %1047, %1049 : vector<8x8xf32>
    %cst_287 = arith.constant 5.000000e-01 : f32
    %1051 = vector.broadcast %cst_287 : f32 to vector<8x8xf32>
    %1052 = arith.mulf %1050, %1051 : vector<8x8xf32>
    %1053 = arith.mulf %1052, %1052 : vector<8x8xf32>
    %1054 = arith.mulf %1053, %1053 : vector<8x8xf32>
    %1055 = arith.mulf %1054, %1054 : vector<8x8xf32>
    %cst_288 = arith.constant -0.382683426 : f32
    %1056 = vector.broadcast %cst_288 : f32 to vector<8x8xf32>
    %1057 = arith.mulf %995, %1056 : vector<8x8xf32>
    %cst_289 = arith.constant 1.000000e+00 : f32
    %1058 = vector.broadcast %cst_289 : f32 to vector<8x8xf32>
    %1059 = arith.addf %1058, %1057 : vector<8x8xf32>
    %cst_290 = arith.constant 0.923879504 : f32
    %1060 = vector.broadcast %cst_290 : f32 to vector<8x8xf32>
    %1061 = arith.mulf %1001, %1060 : vector<8x8xf32>
    %1062 = arith.addf %1059, %1061 : vector<8x8xf32>
    %cst_291 = arith.constant 5.000000e-01 : f32
    %1063 = vector.broadcast %cst_291 : f32 to vector<8x8xf32>
    %1064 = arith.mulf %1062, %1063 : vector<8x8xf32>
    %1065 = arith.mulf %1064, %1064 : vector<8x8xf32>
    %1066 = arith.mulf %1065, %1065 : vector<8x8xf32>
    %1067 = arith.mulf %1066, %1066 : vector<8x8xf32>
    %cst_292 = arith.constant -0.923879504 : f32
    %1068 = vector.broadcast %cst_292 : f32 to vector<8x8xf32>
    %1069 = arith.mulf %995, %1068 : vector<8x8xf32>
    %cst_293 = arith.constant 1.000000e+00 : f32
    %1070 = vector.broadcast %cst_293 : f32 to vector<8x8xf32>
    %1071 = arith.addf %1070, %1069 : vector<8x8xf32>
    %cst_294 = arith.constant 0.382683426 : f32
    %1072 = vector.broadcast %cst_294 : f32 to vector<8x8xf32>
    %1073 = arith.mulf %1001, %1072 : vector<8x8xf32>
    %1074 = arith.addf %1071, %1073 : vector<8x8xf32>
    %cst_295 = arith.constant 5.000000e-01 : f32
    %1075 = vector.broadcast %cst_295 : f32 to vector<8x8xf32>
    %1076 = arith.mulf %1074, %1075 : vector<8x8xf32>
    %1077 = arith.mulf %1076, %1076 : vector<8x8xf32>
    %1078 = arith.mulf %1077, %1077 : vector<8x8xf32>
    %1079 = arith.mulf %1078, %1078 : vector<8x8xf32>
    %1080 = arith.mulf %1019, %1043 : vector<8x8xf32>
    %1081 = arith.mulf %1080, %1025 : vector<8x8xf32>
    %1082 = arith.mulf %1019, %1055 : vector<8x8xf32>
    %1083 = arith.mulf %1082, %1025 : vector<8x8xf32>
    %1084 = arith.mulf %1019, %1067 : vector<8x8xf32>
    %1085 = arith.mulf %1084, %1025 : vector<8x8xf32>
    %1086 = arith.mulf %1019, %1079 : vector<8x8xf32>
    %1087 = arith.mulf %1086, %1025 : vector<8x8xf32>
    %1088 = arith.mulf %1019, %1043 : vector<8x8xf32>
    %1089 = arith.mulf %1088, %1031 : vector<8x8xf32>
    %1090 = arith.mulf %1019, %1055 : vector<8x8xf32>
    %1091 = arith.mulf %1090, %1031 : vector<8x8xf32>
    %1092 = arith.mulf %1019, %1067 : vector<8x8xf32>
    %1093 = arith.mulf %1092, %1031 : vector<8x8xf32>
    %1094 = arith.mulf %1019, %1079 : vector<8x8xf32>
    %1095 = arith.mulf %1094, %1031 : vector<8x8xf32>
    %1096 = tpu.concatenate %1081, %1083, %1085, %1087, %1089, %1091, %1093, %1095 in 0 : vector<8x8xf32>, vector<8x8xf32>, vector<8x8xf32>, vector<8x8xf32>, vector<8x8xf32>, vector<8x8xf32>, vector<8x8xf32>, vector<8x8xf32> -> vector<64x8xf32>
    %cst_296 = arith.constant dense<0.000000e+00> : vector<64x10xf32>
    %1097 = tpu.matmul %1096, %974, %cst_296 {dimension_numbers = #tpu.dot_dimension_numbers<[1], [0], [0], [1], [0, 0, 1, 1], [], []>} : vector<64x8xf32>, vector<8x10xf32>, vector<64x10xf32> -> vector<64x10xf32>
    %1098 = arith.addf %964, %1097 : vector<64x10xf32>
    %1099 = arith.index_cast %arg0 : i32 to index
    %c7 = arith.constant 7 : index
    %1100 = memref.load %arg1[%1099, %c7] : memref<2x8xi32, #tpu.memory_space<smem>>
    %c0_i32_297 = arith.constant 0 : i32
    %1101 = arith.cmpi sge, %1100, %c0_i32_297 : i32
    %1102 = arith.extui %1101 : i1 to i32
    %1103 = arith.sitofp %1102 : i32 to f32
    %c0_i32_298 = arith.constant 0 : i32
    %1104 = arith.maxsi %1100, %c0_i32_298 : i32
    %1105 = arith.index_cast %1104 : i32 to index
    %c0_299 = arith.constant 0 : index
    %c0_300 = arith.constant 0 : index
    %1106 = vector.load %arg4[%1105, %c0_299, %c0_300] : memref<4x4x10xf32, #tpu.memory_space<vmem>>, vector<1x4x10xf32>
    %1107 = vector.shape_cast %1106 : vector<1x4x10xf32> to vector<4x10xf32>
    %cst_301 = arith.constant dense<0.000000e+00> : vector<8x10xf32>
    %1108 = tpu.matmul %3, %1107, %cst_301 {dimension_numbers = #tpu.dot_dimension_numbers<[1], [0], [0], [1], [0, 0, 1, 1], [], []>} : vector<8x4xf32>, vector<4x10xf32>, vector<8x10xf32> -> vector<8x10xf32>
    %1109 = vector.extract_strided_slice %17 {offsets = [0, 7], sizes = [8, 1], strides = [1, 1]} : vector<8x8xf32> to vector<8x1xf32>
    %1110 = vector.extract_strided_slice %16 {offsets = [0, 7], sizes = [8, 1], strides = [1, 1]} : vector<8x8xf32> to vector<8x1xf32>
    %1111 = vector.broadcast %1110 : vector<8x1xf32> to vector<8x8xf32>
    %1112 = arith.addf %16, %1111 : vector<8x8xf32>
    %1113 = vector.extract_strided_slice %16 {offsets = [7, 0], sizes = [1, 8], strides = [1, 1]} : vector<8x8xf32> to vector<1x8xf32>
    %1114 = vector.broadcast %1113 : vector<1x8xf32> to vector<8x8xf32>
    %1115 = arith.subf %1112, %1114 : vector<8x8xf32>
    %cst_302 = arith.constant 5.000000e-01 : f32
    %1116 = vector.broadcast %cst_302 : f32 to vector<8x8xf32>
    %1117 = arith.mulf %1116, %1115 : vector<8x8xf32>
    %1118 = vector.broadcast %1109 : vector<8x1xf32> to vector<8x8xf32>
    %1119 = arith.mulf %17, %1118 : vector<8x8xf32>
    %cst_303 = arith.constant 1.000000e-10 : f32
    %1120 = vector.broadcast %cst_303 : f32 to vector<8x8xf32>
    %1121 = arith.addf %1119, %1120 : vector<8x8xf32>
    %1122 = tpu.reciprocal %1121 {approx = true} : vector<8x8xf32> -> vector<8x8xf32>
    %1123 = arith.mulf %1121, %1122 : vector<8x8xf32>
    %cst_304 = arith.constant 2.000000e+00 : f32
    %1124 = vector.broadcast %cst_304 : f32 to vector<8x8xf32>
    %1125 = arith.subf %1124, %1123 : vector<8x8xf32>
    %1126 = arith.mulf %1122, %1125 : vector<8x8xf32>
    %cst_305 = arith.constant 0.949999988 : f32
    %1127 = vector.broadcast %cst_305 : f32 to vector<8x8xf32>
    %1128 = arith.mulf %1127, %1117 : vector<8x8xf32>
    %1129 = arith.mulf %1128, %1126 : vector<8x8xf32>
    %1130 = arith.mulf %1129, %1129 : vector<8x8xf32>
    %cst_306 = arith.constant 1.000000e+00 : f32
    %1131 = vector.broadcast %cst_306 : f32 to vector<8x8xf32>
    %1132 = arith.subf %1131, %1130 : vector<8x8xf32>
    %cst_307 = arith.constant 0.000000e+00 : f32
    %1133 = vector.broadcast %cst_307 : f32 to vector<8x8xf32>
    %1134 = arith.maximumf %1132, %1133 : vector<8x8xf32>
    %1135 = math.sqrt %1134 : vector<8x8xf32>
    %1136 = vector.broadcast %1109 : vector<8x1xf32> to vector<8x8xf32>
    %1137 = arith.addf %17, %1136 : vector<8x8xf32>
    %cst_308 = arith.constant 5.000000e-01 : f32
    %1138 = vector.broadcast %cst_308 : f32 to vector<8x8xf32>
    %1139 = arith.mulf %1138, %1137 : vector<8x8xf32>
    %1140 = vector.extract_strided_slice %22 {offsets = [0, 7], sizes = [8, 1], strides = [1, 1]} : vector<8x8xf32> to vector<8x1xf32>
    %1141 = vector.broadcast %1140 : vector<8x1xf32> to vector<8x8xf32>
    %1142 = arith.mulf %26, %1141 : vector<8x8xf32>
    %1143 = vector.extract_strided_slice %22 {offsets = [7, 0], sizes = [1, 8], strides = [1, 1]} : vector<8x8xf32> to vector<1x8xf32>
    %1144 = vector.broadcast %1143 : vector<1x8xf32> to vector<8x8xf32>
    %1145 = arith.mulf %1142, %1144 : vector<8x8xf32>
    %1146 = vector.broadcast %1103 : f32 to vector<8x8xf32>
    %1147 = arith.mulf %1145, %1146 : vector<8x8xf32>
    %1148 = vector.extract_strided_slice %98 {offsets = [0, 7], sizes = [8, 1], strides = [1, 1]} : vector<8x8xf32> to vector<8x1xf32>
    %1149 = vector.broadcast %1148 : vector<8x1xf32> to vector<8x8xf32>
    %1150 = arith.mulf %98, %1149 : vector<8x8xf32>
    %cst_309 = arith.constant 2.000000e+00 : f32
    %1151 = vector.broadcast %cst_309 : f32 to vector<8x8xf32>
    %1152 = arith.mulf %1151, %1150 : vector<8x8xf32>
    %1153 = arith.mulf %1152, %1147 : vector<8x8xf32>
    %cst_310 = arith.constant 0.899999976 : f32
    %1154 = vector.broadcast %cst_310 : f32 to vector<8x8xf32>
    %1155 = arith.subf %1139, %1154 : vector<8x8xf32>
    %1156 = arith.mulf %1155, %1155 : vector<8x8xf32>
    %cst_311 = arith.constant -8.000000e+00 : f32
    %1157 = vector.broadcast %cst_311 : f32 to vector<8x8xf32>
    %1158 = arith.mulf %1157, %1156 : vector<8x8xf32>
    %1159 = math.exp %1158 : vector<8x8xf32>
    %cst_312 = arith.constant 2.200000e+00 : f32
    %1160 = vector.broadcast %cst_312 : f32 to vector<8x8xf32>
    %1161 = arith.subf %1139, %1160 : vector<8x8xf32>
    %1162 = arith.mulf %1161, %1161 : vector<8x8xf32>
    %cst_313 = arith.constant -8.000000e+00 : f32
    %1163 = vector.broadcast %cst_313 : f32 to vector<8x8xf32>
    %1164 = arith.mulf %1163, %1162 : vector<8x8xf32>
    %1165 = math.exp %1164 : vector<8x8xf32>
    %cst_314 = arith.constant 0.923879504 : f32
    %1166 = vector.broadcast %cst_314 : f32 to vector<8x8xf32>
    %1167 = arith.mulf %1129, %1166 : vector<8x8xf32>
    %cst_315 = arith.constant 1.000000e+00 : f32
    %1168 = vector.broadcast %cst_315 : f32 to vector<8x8xf32>
    %1169 = arith.addf %1168, %1167 : vector<8x8xf32>
    %cst_316 = arith.constant 0.382683426 : f32
    %1170 = vector.broadcast %cst_316 : f32 to vector<8x8xf32>
    %1171 = arith.mulf %1135, %1170 : vector<8x8xf32>
    %1172 = arith.addf %1169, %1171 : vector<8x8xf32>
    %cst_317 = arith.constant 5.000000e-01 : f32
    %1173 = vector.broadcast %cst_317 : f32 to vector<8x8xf32>
    %1174 = arith.mulf %1172, %1173 : vector<8x8xf32>
    %1175 = arith.mulf %1174, %1174 : vector<8x8xf32>
    %1176 = arith.mulf %1175, %1175 : vector<8x8xf32>
    %1177 = arith.mulf %1176, %1176 : vector<8x8xf32>
    %cst_318 = arith.constant 0.382683426 : f32
    %1178 = vector.broadcast %cst_318 : f32 to vector<8x8xf32>
    %1179 = arith.mulf %1129, %1178 : vector<8x8xf32>
    %cst_319 = arith.constant 1.000000e+00 : f32
    %1180 = vector.broadcast %cst_319 : f32 to vector<8x8xf32>
    %1181 = arith.addf %1180, %1179 : vector<8x8xf32>
    %cst_320 = arith.constant 0.923879504 : f32
    %1182 = vector.broadcast %cst_320 : f32 to vector<8x8xf32>
    %1183 = arith.mulf %1135, %1182 : vector<8x8xf32>
    %1184 = arith.addf %1181, %1183 : vector<8x8xf32>
    %cst_321 = arith.constant 5.000000e-01 : f32
    %1185 = vector.broadcast %cst_321 : f32 to vector<8x8xf32>
    %1186 = arith.mulf %1184, %1185 : vector<8x8xf32>
    %1187 = arith.mulf %1186, %1186 : vector<8x8xf32>
    %1188 = arith.mulf %1187, %1187 : vector<8x8xf32>
    %1189 = arith.mulf %1188, %1188 : vector<8x8xf32>
    %cst_322 = arith.constant -0.382683426 : f32
    %1190 = vector.broadcast %cst_322 : f32 to vector<8x8xf32>
    %1191 = arith.mulf %1129, %1190 : vector<8x8xf32>
    %cst_323 = arith.constant 1.000000e+00 : f32
    %1192 = vector.broadcast %cst_323 : f32 to vector<8x8xf32>
    %1193 = arith.addf %1192, %1191 : vector<8x8xf32>
    %cst_324 = arith.constant 0.923879504 : f32
    %1194 = vector.broadcast %cst_324 : f32 to vector<8x8xf32>
    %1195 = arith.mulf %1135, %1194 : vector<8x8xf32>
    %1196 = arith.addf %1193, %1195 : vector<8x8xf32>
    %cst_325 = arith.constant 5.000000e-01 : f32
    %1197 = vector.broadcast %cst_325 : f32 to vector<8x8xf32>
    %1198 = arith.mulf %1196, %1197 : vector<8x8xf32>
    %1199 = arith.mulf %1198, %1198 : vector<8x8xf32>
    %1200 = arith.mulf %1199, %1199 : vector<8x8xf32>
    %1201 = arith.mulf %1200, %1200 : vector<8x8xf32>
    %cst_326 = arith.constant -0.923879504 : f32
    %1202 = vector.broadcast %cst_326 : f32 to vector<8x8xf32>
    %1203 = arith.mulf %1129, %1202 : vector<8x8xf32>
    %cst_327 = arith.constant 1.000000e+00 : f32
    %1204 = vector.broadcast %cst_327 : f32 to vector<8x8xf32>
    %1205 = arith.addf %1204, %1203 : vector<8x8xf32>
    %cst_328 = arith.constant 0.382683426 : f32
    %1206 = vector.broadcast %cst_328 : f32 to vector<8x8xf32>
    %1207 = arith.mulf %1135, %1206 : vector<8x8xf32>
    %1208 = arith.addf %1205, %1207 : vector<8x8xf32>
    %cst_329 = arith.constant 5.000000e-01 : f32
    %1209 = vector.broadcast %cst_329 : f32 to vector<8x8xf32>
    %1210 = arith.mulf %1208, %1209 : vector<8x8xf32>
    %1211 = arith.mulf %1210, %1210 : vector<8x8xf32>
    %1212 = arith.mulf %1211, %1211 : vector<8x8xf32>
    %1213 = arith.mulf %1212, %1212 : vector<8x8xf32>
    %1214 = arith.mulf %1153, %1177 : vector<8x8xf32>
    %1215 = arith.mulf %1214, %1159 : vector<8x8xf32>
    %1216 = arith.mulf %1153, %1189 : vector<8x8xf32>
    %1217 = arith.mulf %1216, %1159 : vector<8x8xf32>
    %1218 = arith.mulf %1153, %1201 : vector<8x8xf32>
    %1219 = arith.mulf %1218, %1159 : vector<8x8xf32>
    %1220 = arith.mulf %1153, %1213 : vector<8x8xf32>
    %1221 = arith.mulf %1220, %1159 : vector<8x8xf32>
    %1222 = arith.mulf %1153, %1177 : vector<8x8xf32>
    %1223 = arith.mulf %1222, %1165 : vector<8x8xf32>
    %1224 = arith.mulf %1153, %1189 : vector<8x8xf32>
    %1225 = arith.mulf %1224, %1165 : vector<8x8xf32>
    %1226 = arith.mulf %1153, %1201 : vector<8x8xf32>
    %1227 = arith.mulf %1226, %1165 : vector<8x8xf32>
    %1228 = arith.mulf %1153, %1213 : vector<8x8xf32>
    %1229 = arith.mulf %1228, %1165 : vector<8x8xf32>
    %1230 = tpu.concatenate %1215, %1217, %1219, %1221, %1223, %1225, %1227, %1229 in 0 : vector<8x8xf32>, vector<8x8xf32>, vector<8x8xf32>, vector<8x8xf32>, vector<8x8xf32>, vector<8x8xf32>, vector<8x8xf32>, vector<8x8xf32> -> vector<64x8xf32>
    %cst_330 = arith.constant dense<0.000000e+00> : vector<64x10xf32>
    %1231 = tpu.matmul %1230, %1108, %cst_330 {dimension_numbers = #tpu.dot_dimension_numbers<[1], [0], [0], [1], [0, 0, 1, 1], [], []>} : vector<64x8xf32>, vector<8x10xf32>, vector<64x10xf32> -> vector<64x10xf32>
    %1232 = arith.addf %1098, %1231 : vector<64x10xf32>
    %1233 = vector.extract_strided_slice %159 {offsets = [0, 0], sizes = [8, 4], strides = [1, 1]} : vector<64x4xf32> to vector<8x4xf32>
    %1234 = vector.extract_strided_slice %159 {offsets = [8, 0], sizes = [8, 4], strides = [1, 1]} : vector<64x4xf32> to vector<8x4xf32>
    %1235 = vector.extract_strided_slice %159 {offsets = [16, 0], sizes = [8, 4], strides = [1, 1]} : vector<64x4xf32> to vector<8x4xf32>
    %1236 = vector.extract_strided_slice %159 {offsets = [24, 0], sizes = [8, 4], strides = [1, 1]} : vector<64x4xf32> to vector<8x4xf32>
    %1237 = vector.extract_strided_slice %159 {offsets = [32, 0], sizes = [8, 4], strides = [1, 1]} : vector<64x4xf32> to vector<8x4xf32>
    %1238 = vector.extract_strided_slice %159 {offsets = [40, 0], sizes = [8, 4], strides = [1, 1]} : vector<64x4xf32> to vector<8x4xf32>
    %1239 = vector.extract_strided_slice %159 {offsets = [48, 0], sizes = [8, 4], strides = [1, 1]} : vector<64x4xf32> to vector<8x4xf32>
    %1240 = vector.extract_strided_slice %159 {offsets = [56, 0], sizes = [8, 4], strides = [1, 1]} : vector<64x4xf32> to vector<8x4xf32>
    %1241 = vector.extract_strided_slice %1232 {offsets = [0, 0], sizes = [8, 10], strides = [1, 1]} : vector<64x10xf32> to vector<8x10xf32>
    %1242 = vector.extract_strided_slice %1232 {offsets = [8, 0], sizes = [8, 10], strides = [1, 1]} : vector<64x10xf32> to vector<8x10xf32>
    %1243 = vector.extract_strided_slice %1232 {offsets = [16, 0], sizes = [8, 10], strides = [1, 1]} : vector<64x10xf32> to vector<8x10xf32>
    %1244 = vector.extract_strided_slice %1232 {offsets = [24, 0], sizes = [8, 10], strides = [1, 1]} : vector<64x10xf32> to vector<8x10xf32>
    %1245 = vector.extract_strided_slice %1232 {offsets = [32, 0], sizes = [8, 10], strides = [1, 1]} : vector<64x10xf32> to vector<8x10xf32>
    %1246 = vector.extract_strided_slice %1232 {offsets = [40, 0], sizes = [8, 10], strides = [1, 1]} : vector<64x10xf32> to vector<8x10xf32>
    %1247 = vector.extract_strided_slice %1232 {offsets = [48, 0], sizes = [8, 10], strides = [1, 1]} : vector<64x10xf32> to vector<8x10xf32>
    %1248 = vector.extract_strided_slice %1232 {offsets = [56, 0], sizes = [8, 10], strides = [1, 1]} : vector<64x10xf32> to vector<8x10xf32>
    %cst_331 = arith.constant 0.000000e+00 : f32
    %1249 = vector.broadcast %cst_331 : f32 to vector<8x16xf32>
    %1250 = tpu.concatenate %1233, %1234, %1235, %1236, %1237, %1238, %1239, %1240, %1241, %1242, %1243, %1244, %1245, %1246, %1247, %1248 in 1 : vector<8x4xf32>, vector<8x4xf32>, vector<8x4xf32>, vector<8x4xf32>, vector<8x4xf32>, vector<8x4xf32>, vector<8x4xf32>, vector<8x4xf32>, vector<8x10xf32>, vector<8x10xf32>, vector<8x10xf32>, vector<8x10xf32>, vector<8x10xf32>, vector<8x10xf32>, vector<8x10xf32>, vector<8x10xf32> -> vector<8x112xf32>
    %1251 = tpu.concatenate %1250, %1249 in 1 : vector<8x112xf32>, vector<8x16xf32> -> vector<8x128xf32>
    %c0_332 = arith.constant 0 : index
    %c0_333 = arith.constant 0 : index
    %c0_334 = arith.constant 0 : index
    %1252 = vector.load %arg11[%c0_332, %c0_333, %c0_334] : memref<1x8x128xf32, #tpu.memory_space<vmem>>, vector<1x8x128xf32>
    %1253 = vector.shape_cast %1252 : vector<1x8x128xf32> to vector<8x128xf32>
    %1254 = vector.shape_cast %1251 : vector<8x128xf32> to vector<1x8x128xf32>
    tpu.vector_store %arg11[%c0_332, %c0_333, %c0_334], %1254 {strides = array<i32>} : memref<1x8x128xf32, #tpu.memory_space<vmem>>, vector<1x8x128xf32>,
    %c0_335 = arith.constant 0 : index
    %c0_336 = arith.constant 0 : index
    %1255 = vector.load %arg5[%c0_335, %c0_336] : memref<128x256xf32, #tpu.memory_space<vmem>>, vector<128x256xf32>
    %cst_337 = arith.constant dense<0.000000e+00> : vector<8x256xf32>
    %1256 = tpu.matmul %1251, %1255, %cst_337 {dimension_numbers = #tpu.dot_dimension_numbers<[1], [0], [0], [1], [0, 0, 1, 1], [], []>} : vector<8x128xf32>, vector<128x256xf32>, vector<8x256xf32> -> vector<8x256xf32>
    %c0_338 = arith.constant 0 : index
    %c0_339 = arith.constant 0 : index
    %1257 = vector.load %arg6[%c0_338, %c0_339] : memref<1x256xf32, #tpu.memory_space<vmem>>, vector<1x256xf32>
    %1258 = vector.broadcast %1257 : vector<1x256xf32> to vector<8x256xf32>
    %1259 = arith.addf %1256, %1258 : vector<8x256xf32>
    %cst_340 = arith.constant 0.000000e+00 : f32
    %1260 = vector.broadcast %cst_340 : f32 to vector<8x256xf32>
    %1261 = arith.maximumf %1259, %1260 : vector<8x256xf32>
    %cst_341 = arith.constant 0.000000e+00 : f32
    %1262 = vector.broadcast %cst_341 : f32 to vector<8x256xf32>
    %1263 = arith.minimumf %1259, %1262 : vector<8x256xf32>
    %cst_342 = arith.constant 1.000000e-01 : f32
    %1264 = vector.broadcast %cst_342 : f32 to vector<8x256xf32>
    %1265 = arith.divf %1263, %1264 : vector<8x256xf32>
    %1266 = math.exp %1265 : vector<8x256xf32>
    %cst_343 = arith.constant 1.000000e+00 : f32
    %1267 = vector.broadcast %cst_343 : f32 to vector<8x256xf32>
    %1268 = arith.subf %1266, %1267 : vector<8x256xf32>
    %cst_344 = arith.constant 1.000000e-01 : f32
    %1269 = vector.broadcast %cst_344 : f32 to vector<8x256xf32>
    %1270 = arith.mulf %1269, %1268 : vector<8x256xf32>
    %1271 = arith.addf %1261, %1270 : vector<8x256xf32>
    %c0_345 = arith.constant 0 : index
    %c0_346 = arith.constant 0 : index
    %1272 = vector.load %arg7[%c0_345, %c0_346] : memref<256x128xf32, #tpu.memory_space<vmem>>, vector<256x128xf32>
    %cst_347 = arith.constant dense<0.000000e+00> : vector<8x128xf32>
    %1273 = tpu.matmul %1271, %1272, %cst_347 {dimension_numbers = #tpu.dot_dimension_numbers<[1], [0], [0], [1], [0, 0, 1, 1], [], []>} : vector<8x256xf32>, vector<256x128xf32>, vector<8x128xf32> -> vector<8x128xf32>
    %c0_348 = arith.constant 0 : index
    %c0_349 = arith.constant 0 : index
    %1274 = vector.load %arg8[%c0_348, %c0_349] : memref<1x128xf32, #tpu.memory_space<vmem>>, vector<1x128xf32>
    %1275 = vector.broadcast %1274 : vector<1x128xf32> to vector<8x128xf32>
    %1276 = arith.addf %1273, %1275 : vector<8x128xf32>
    %cst_350 = arith.constant 0.000000e+00 : f32
    %1277 = vector.broadcast %cst_350 : f32 to vector<8x128xf32>
    %1278 = arith.maximumf %1276, %1277 : vector<8x128xf32>
    %cst_351 = arith.constant 0.000000e+00 : f32
    %1279 = vector.broadcast %cst_351 : f32 to vector<8x128xf32>
    %1280 = arith.minimumf %1276, %1279 : vector<8x128xf32>
    %cst_352 = arith.constant 1.000000e-01 : f32
    %1281 = vector.broadcast %cst_352 : f32 to vector<8x128xf32>
    %1282 = arith.divf %1280, %1281 : vector<8x128xf32>
    %1283 = math.exp %1282 : vector<8x128xf32>
    %cst_353 = arith.constant 1.000000e+00 : f32
    %1284 = vector.broadcast %cst_353 : f32 to vector<8x128xf32>
    %1285 = arith.subf %1283, %1284 : vector<8x128xf32>
    %cst_354 = arith.constant 1.000000e-01 : f32
    %1286 = vector.broadcast %cst_354 : f32 to vector<8x128xf32>
    %1287 = arith.mulf %1286, %1285 : vector<8x128xf32>
    %1288 = arith.addf %1278, %1287 : vector<8x128xf32>
    %c0_355 = arith.constant 0 : index
    %c0_356 = arith.constant 0 : index
    %1289 = vector.load %arg9[%c0_355, %c0_356] : memref<128x4xf32, #tpu.memory_space<vmem>>, vector<128x4xf32>
    %cst_357 = arith.constant dense<0.000000e+00> : vector<8x4xf32>
    %1290 = tpu.matmul %1288, %1289, %cst_357 {dimension_numbers = #tpu.dot_dimension_numbers<[1], [0], [0], [1], [0, 0, 1, 1], [], []>} : vector<8x128xf32>, vector<128x4xf32>, vector<8x4xf32> -> vector<8x4xf32>
    %c0_358 = arith.constant 0 : index
    %c0_359 = arith.constant 0 : index
    %1291 = vector.load %arg10[%c0_358, %c0_359] : memref<1x4xf32, #tpu.memory_space<vmem>>, vector<1x4xf32>
    %1292 = vector.broadcast %1291 : vector<1x4xf32> to vector<8x4xf32>
    %1293 = arith.addf %1290, %1292 : vector<8x4xf32>
    %1294 = arith.mulf %1293, %3 : vector<8x4xf32>
    %cst_360 = arith.constant dense<0.000000e+00> : vector<8xf32>
    %1295 = vector.multi_reduction <add>, %1294, %cst_360 [1] : vector<8x4xf32> to vector<8xf32>
    %1296 = vector.shape_cast %1295 : vector<8xf32> to vector<8x1xf32>
    %cst_361 = arith.constant dense<0.000000e+00> : vector<1xf32>
    %1297 = vector.multi_reduction <add>, %1296, %cst_361 [0] : vector<8x1xf32> to vector<1xf32>
    %1298 = vector.shape_cast %1297 : vector<1xf32> to vector<1x1xf32>
    %c0_362 = arith.constant 0 : index
    %c0_363 = arith.constant 0 : index
    %c0_364 = arith.constant 0 : index
    %1299 = vector.load %arg12[%c0_362, %c0_363, %c0_364] : memref<1x1x1xf32, #tpu.memory_space<vmem>>, vector<1x1x1xf32>
    %1300 = vector.shape_cast %1299 : vector<1x1x1xf32> to vector<1x1xf32>
    %1301 = vector.shape_cast %1298 : vector<1x1xf32> to vector<1x1x1xf32>
    tpu.vector_store %arg12[%c0_362, %c0_363, %c0_364], %1301 {strides = array<i32>} : memref<1x1x1xf32, #tpu.memory_space<vmem>>, vector<1x1x1xf32>,
    return
  }
  func.func @transform_0(%arg0: i32, %arg1: memref<2x8xi32, #tpu.memory_space<smem>>) -> (i32, i32, i32) {
    %c0_i32 = arith.constant 0 : i32
    %c0_i32_0 = arith.constant 0 : i32
    %c0_i32_1 = arith.constant 0 : i32
    return %arg0, %c0_i32, %c0_i32_0 : i32, i32, i32
  }
  func.func @transform_1(%arg0: i32, %arg1: memref<2x8xi32, #tpu.memory_space<smem>>) -> (i32, i32, i32) {
    %c0_i32 = arith.constant 0 : i32
    %c0_i32_0 = arith.constant 0 : i32
    %c0_i32_1 = arith.constant 0 : i32
    return %arg0, %c0_i32, %c0_i32_0 : i32, i32, i32
  }
  func.func @transform_2(%arg0: i32, %arg1: memref<2x8xi32, #tpu.memory_space<smem>>) -> (i32, i32, i32) {
    %c0_i32 = arith.constant 0 : i32
    %c0_i32_0 = arith.constant 0 : i32
    %c0_i32_1 = arith.constant 0 : i32
    %c0_i32_2 = arith.constant 0 : i32
    return %c0_i32, %c0_i32_0, %c0_i32_1 : i32, i32, i32
  }
  func.func @transform_3(%arg0: i32, %arg1: memref<2x8xi32, #tpu.memory_space<smem>>) -> (i32, i32) {
    %c0_i32 = arith.constant 0 : i32
    %c0_i32_0 = arith.constant 0 : i32
    %c0_i32_1 = arith.constant 0 : i32
    return %c0_i32, %c0_i32_0 : i32, i32
  }
  func.func @transform_4(%arg0: i32, %arg1: memref<2x8xi32, #tpu.memory_space<smem>>) -> (i32, i32) {
    %c0_i32 = arith.constant 0 : i32
    %c0_i32_0 = arith.constant 0 : i32
    %c0_i32_1 = arith.constant 0 : i32
    return %c0_i32, %c0_i32_0 : i32, i32
  }
  func.func @transform_5(%arg0: i32, %arg1: memref<2x8xi32, #tpu.memory_space<smem>>) -> (i32, i32) {
    %c0_i32 = arith.constant 0 : i32
    %c0_i32_0 = arith.constant 0 : i32
    %c0_i32_1 = arith.constant 0 : i32
    return %c0_i32, %c0_i32_0 : i32, i32
  }
  func.func @transform_6(%arg0: i32, %arg1: memref<2x8xi32, #tpu.memory_space<smem>>) -> (i32, i32) {
    %c0_i32 = arith.constant 0 : i32
    %c0_i32_0 = arith.constant 0 : i32
    %c0_i32_1 = arith.constant 0 : i32
    return %c0_i32, %c0_i32_0 : i32, i32
  }
  func.func @transform_7(%arg0: i32, %arg1: memref<2x8xi32, #tpu.memory_space<smem>>) -> (i32, i32) {
    %c0_i32 = arith.constant 0 : i32
    %c0_i32_0 = arith.constant 0 : i32
    %c0_i32_1 = arith.constant 0 : i32
    return %c0_i32, %c0_i32_0 : i32, i32
  }
  func.func @transform_8(%arg0: i32, %arg1: memref<2x8xi32, #tpu.memory_space<smem>>) -> (i32, i32) {
    %c0_i32 = arith.constant 0 : i32
    %c0_i32_0 = arith.constant 0 : i32
    %c0_i32_1 = arith.constant 0 : i32
    return %c0_i32, %c0_i32_0 : i32, i32
  }
  func.func @transform_9(%arg0: i32, %arg1: memref<2x8xi32, #tpu.memory_space<smem>>) -> (i32, i32, i32) {
    %c0_i32 = arith.constant 0 : i32
    %c0_i32_0 = arith.constant 0 : i32
    %c0_i32_1 = arith.constant 0 : i32
    return %arg0, %c0_i32, %c0_i32_0 : i32, i32, i32
  }
  func.func @transform_10(%arg0: i32, %arg1: memref<2x8xi32, #tpu.memory_space<smem>>) -> (i32, i32, i32) {
    %c0_i32 = arith.constant 0 : i32
    %c0_i32_0 = arith.constant 0 : i32
    %c0_i32_1 = arith.constant 0 : i32
    return %arg0, %c0_i32, %c0_i32_0 : i32, i32, i32
  }
}

</mosaic_0001>

<llo_original>
// kernel: tpu_custom_call.1
$region0: #{tpu_custom_call.1}
  #allocation0 [shape = 'u32[]', space=smem, size = 0x4, offset = 0x4, fixed_abs, tag = 'smem constant byte address 0x4 - core index']
  #allocation1 [shape = 'u32[144,128]{1,0:T(1,128)}', space=vmem, size = 0x12000, scoped, tag = 'internal scratch']
  #allocation2 [shape = 's32[1]{0}', space=sflag, size = 0x4, scoped, tag = 'scoped memory for tpu_custom_call.1']
  #allocation3 [shape = 'u8[1024]{0}', space=smem, size = 0x400, scoped, tag = 'prefetched SMEM operand 0']
  %s0 = inlined_call_operand.vmem [shape: s32[2,8], index: 0, kind: input, shape index: {}]
  %s1 = inlined_call_operand.vmem [shape: f32[2,8,3], index: 1, kind: input, shape index: {}]
  %s2 = inlined_call_operand.vmem [shape: f32[2,8,4], index: 2, kind: input, shape index: {}]
  %s3 = inlined_call_operand.vmem [shape: f32[4,4,10], index: 3, kind: input, shape index: {}]
  %s4 = inlined_call_operand.hbm [shape: f32[128,256], index: 4, kind: input, shape index: {}]
  %s5 = inlined_call_operand.vmem [shape: f32[1,256], index: 5, kind: input, shape index: {}]
  %s6 = inlined_call_operand.hbm [shape: f32[256,128], index: 6, kind: input, shape index: {}]
  %s7 = inlined_call_operand.vmem [shape: f32[1,128], index: 7, kind: input, shape index: {}]
  %s8 = inlined_call_operand.vmem [shape: f32[128,4], index: 8, kind: input, shape index: {}]
  %s9 = inlined_call_operand.vmem [shape: f32[1,4], index: 9, kind: input, shape index: {}]
  %s10 = inlined_call_operand.hbm [shape: f32[2,8,128], index: 10, kind: output, shape index: {0}]
  %s11 = inlined_call_operand.vmem [shape: f32[2,1,1], index: 11, kind: output, shape index: {1}]
  %12 = xla_tuple %s10, %s11
  %s13 = sld [smem:[#allocation0]]
  $region85: #{tpu_custom_call.1} parent=0
    _
  %s15 = ssub.s32 1, %s13
  %s16 = scalar_select 0, %s15, %s13
  %s17 = sshll.u32 %s0, 4
  %s18 = int_to_ptr.vmem [resolvable:$true] %s17
  %20 = dma.vmem_to_smem %s18, 32, [#allocation3], [#allocation2]
  %21 = dma.done [#allocation2], 32
  %22 = sfence
  $region1: #{tpu_custom_call.1} parent=0
    #allocation4 [shape = 'u8[131072]{0}', space=vmem, size = 0x20000, scoped, tag = 'input window, operand 4, single buffered']
    #allocation5 [shape = 's32[2]{0}', space=sflag, size = 0x8, scoped, tag = 'scoped memory for tpu_custom_call.1']
    #allocation6 [shape = 's32[2]{0}', space=sflag, size = 0x8, scoped, tag = 'scoped memory for tpu_custom_call.1']
    #allocation7 [shape = 'u8[131072]{0}', space=vmem, size = 0x20000, scoped, tag = 'input window, operand 6, single buffered']
    #allocation8 [shape = 's32[1]{0}', space=sflag, size = 0x4, scoped, tag = 'scoped memory for tpu_custom_call.1']
    #allocation9 [shape = 'u8[8192]{0}', space=vmem, size = 0x2000, scoped, tag = 'output window, operand 0']
    %23 = vsyncpa [#allocation5], 0
    %24 = vsyncpa [#allocation8], 0
    %25 = vsyncpa [#allocation6], 0
    %s26 = scalar_lea.sflag [#allocation6], 1
    %27 = vsyncpa %s26, 0
    loop: start=0, step=1, limit=4
    $region2: #{tpu_custom_call.1} parent=1 // loop_pre_header
      _
    $region3: #{tpu_custom_call.1} parent=1 // loop_header
      %s29 = sphi 0, %s33
      %p30 = scmp.ge.s32.totalorder %s29, 4
      %s39 = sphi 0, %s41
      %s42 = sphi 0, %s39
      %s43 = sphi 0, %s42
      %s59 = sphi 0, %s43
      %s65 = sphi 0, %s67
      %s68 = sphi 0, %s65
      %s69 = sphi 0, %s68
      %s85 = sphi 0, %s69
      %s89 = sphi 0, %s89
      %s91 = sphi 0, %s89
      %s92 = sphi 0, %s91
      %s106 = sphi 0, %s92
      %s110 = sphi 0, %s110
      %s112 = sphi 0, %s110
      %s113 = sphi 0, %s112
      %s127 = sphi 0, %s113
      %s131 = sphi 0, %s131
      %s133 = sphi 0, %s131
      %s134 = sphi 0, %s133
      %s148 = sphi 0, %s134
      %s152 = sphi 0, %s152
      %s154 = sphi 0, %s152
      %s155 = sphi 0, %s154
      %s169 = sphi 0, %s155
      %s173 = sphi 0, %s173
      %s175 = sphi 0, %s173
      %s176 = sphi 0, %s175
      %s190 = sphi 0, %s176
      %s194 = sphi 0, %s194
      %s196 = sphi 0, %s194
      %s197 = sphi 0, %s196
      %s211 = sphi 0, %s197
      %s215 = sphi 0, %s215
      %s217 = sphi 0, %s215
      %s218 = sphi 0, %s217
      %s232 = sphi 0, %s218
      %s238 = sphi 0, %s240
      %s241 = sphi 0, %s238
      %s242 = sphi 0, %s241
      %s258 = sphi 0, %s242
      %s264 = sphi 0, %s266
      %s267 = sphi 0, %s264
      %s268 = sphi 0, %s267
      %s284 = sphi 0, %s268
    $region4: #{tpu_custom_call.1} parent=1 // loop_header_branch
      %32 = sbr.rel (%p30) target = $region8
    $region5: #{tpu_custom_call.1} parent=1 // loop_body
      %s34 = ssub.s32 %s29, 1
      %s35 = ssub.s32 %s29, 2
      %s36 = sadd.s32 %s29, 1
      %s37 = ssub.s32 %s29, %s36
      %p38 = scmp.eq.s32.totalorder %s37, 0
      %s40 = sadd.s32 %s39, 1
      %s41 = scalar_select %p38, %s39, %s40
      %p44 = pneg %p38
      %p45 = scmp.eq.s32.totalorder %s29, 1
      %p46 = por %p44, %p45
      %p47 = scmp.ne.s32.totalorder %s39, %s42
      %p48 = scmp.eq.s32.totalorder %s29, 0
      %p49 = por %p47, %p48
      %p50 = scmp.ne.s32.totalorder %s39, %s42
      %p51 = scmp.eq.s32.totalorder %s34, 1
      %p52 = por %p50, %p51
      %p53 = scmp.ne.s32.totalorder %s42, %s43
      %p54 = scmp.eq.s32.totalorder %s34, 0
      %p55 = por %p53, %p54
      %p56 = scmp.ne.s32.totalorder %s42, %s43
      %p57 = scmp.eq.s32.totalorder %s35, 1
      %p58 = por %p56, %p57
      %p60 = scmp.ne.s32.totalorder %s43, %s59
      %p61 = scmp.eq.s32.totalorder %s35, 0
      %p62 = por %p60, %p61
      %s63 = ssub.s32 %s29, %s36
      %p64 = scmp.eq.s32.totalorder %s63, 0
      %s66 = sadd.s32 %s65, 1
      %s67 = scalar_select %p64, %s65, %s66
      %p70 = pneg %p64
      %p71 = scmp.eq.s32.totalorder %s29, 1
      %p72 = por %p70, %p71
      %p73 = scmp.ne.s32.totalorder %s65, %s68
      %p74 = scmp.eq.s32.totalorder %s29, 0
      %p75 = por %p73, %p74
      %p76 = scmp.ne.s32.totalorder %s65, %s68
      %p77 = scmp.eq.s32.totalorder %s34, 1
      %p78 = por %p76, %p77
      %p79 = scmp.ne.s32.totalorder %s68, %s69
      %p80 = scmp.eq.s32.totalorder %s34, 0
      %p81 = por %p79, %p80
      %p82 = scmp.ne.s32.totalorder %s68, %s69
      %p83 = scmp.eq.s32.totalorder %s35, 1
      %p84 = por %p82, %p83
      %p86 = scmp.ne.s32.totalorder %s69, %s85
      %p87 = scmp.eq.s32.totalorder %s35, 0
      %p88 = por %p86, %p87
      %s90 = sadd.s32 %s89, 1
      %p93 = scmp.eq.s32.totalorder %s29, 1
      %p94 = scmp.ne.s32.totalorder %s89, %s91
      %p95 = scmp.eq.s32.totalorder %s29, 0
      %p96 = por %p94, %p95
      %p97 = scmp.ne.s32.totalorder %s89, %s91
      %p98 = scmp.eq.s32.totalorder %s34, 1
      %p99 = por %p97, %p98
      %p100 = scmp.ne.s32.totalorder %s91, %s92
      %p101 = scmp.eq.s32.totalorder %s34, 0
      %p102 = por %p100, %p101
      %p103 = scmp.ne.s32.totalorder %s91, %s92
      %p104 = scmp.eq.s32.totalorder %s35, 1
      %p105 = por %p103, %p104
      %p107 = scmp.ne.s32.totalorder %s92, %s106
      %p108 = scmp.eq.s32.totalorder %s35, 0
      %p109 = por %p107, %p108
      %s111 = sadd.s32 %s110, 1
      %p114 = scmp.eq.s32.totalorder %s29, 1
      %p115 = scmp.ne.s32.totalorder %s110, %s112
      %p116 = scmp.eq.s32.totalorder %s29, 0
      %p117 = por %p115, %p116
      %p118 = scmp.ne.s32.totalorder %s110, %s112
      %p119 = scmp.eq.s32.totalorder %s34, 1
      %p120 = por %p118, %p119
      %p121 = scmp.ne.s32.totalorder %s112, %s113
      %p122 = scmp.eq.s32.totalorder %s34, 0
      %p123 = por %p121, %p122
      %p124 = scmp.ne.s32.totalorder %s112, %s113
      %p125 = scmp.eq.s32.totalorder %s35, 1
      %p126 = por %p124, %p125
      %p128 = scmp.ne.s32.totalorder %s113, %s127
      %p129 = scmp.eq.s32.totalorder %s35, 0
      %p130 = por %p128, %p129
      %s132 = sadd.s32 %s131, 1
      %p135 = scmp.eq.s32.totalorder %s29, 1
      %p136 = scmp.ne.s32.totalorder %s131, %s133
      %p137 = scmp.eq.s32.totalorder %s29, 0
      %p138 = por %p136, %p137
      %p139 = scmp.ne.s32.totalorder %s131, %s133
      %p140 = scmp.eq.s32.totalorder %s34, 1
      %p141 = por %p139, %p140
      %p142 = scmp.ne.s32.totalorder %s133, %s134
      %p143 = scmp.eq.s32.totalorder %s34, 0
      %p144 = por %p142, %p143
      %p145 = scmp.ne.s32.totalorder %s133, %s134
      %p146 = scmp.eq.s32.totalorder %s35, 1
      %p147 = por %p145, %p146
      %p149 = scmp.ne.s32.totalorder %s134, %s148
      %p150 = scmp.eq.s32.totalorder %s35, 0
      %p151 = por %p149, %p150
      %s153 = sadd.s32 %s152, 1
      %p156 = scmp.eq.s32.totalorder %s29, 1
      %p157 = scmp.ne.s32.totalorder %s152, %s154
      %p158 = scmp.eq.s32.totalorder %s29, 0
      %p159 = por %p157, %p158
      %p160 = scmp.ne.s32.totalorder %s152, %s154
      %p161 = scmp.eq.s32.totalorder %s34, 1
      %p162 = por %p160, %p161
      %p163 = scmp.ne.s32.totalorder %s154, %s155
      %p164 = scmp.eq.s32.totalorder %s34, 0
      %p165 = por %p163, %p164
      %p166 = scmp.ne.s32.totalorder %s154, %s155
      %p167 = scmp.eq.s32.totalorder %s35, 1
      %p168 = por %p166, %p167
      %p170 = scmp.ne.s32.totalorder %s155, %s169
      %p171 = scmp.eq.s32.totalorder %s35, 0
      %p172 = por %p170, %p171
      %s174 = sadd.s32 %s173, 1
      %p177 = scmp.eq.s32.totalorder %s29, 1
      %p178 = scmp.ne.s32.totalorder %s173, %s175
      %p179 = scmp.eq.s32.totalorder %s29, 0
      %p180 = por %p178, %p179
      %p181 = scmp.ne.s32.totalorder %s173, %s175
      %p182 = scmp.eq.s32.totalorder %s34, 1
      %p183 = por %p181, %p182
      %p184 = scmp.ne.s32.totalorder %s175, %s176
      %p185 = scmp.eq.s32.totalorder %s34, 0
      %p186 = por %p184, %p185
      %p187 = scmp.ne.s32.totalorder %s175, %s176
      %p188 = scmp.eq.s32.totalorder %s35, 1
      %p189 = por %p187, %p188
      %p191 = scmp.ne.s32.totalorder %s176, %s190
      %p192 = scmp.eq.s32.totalorder %s35, 0
      %p193 = por %p191, %p192
      %s195 = sadd.s32 %s194, 1
      %p198 = scmp.eq.s32.totalorder %s29, 1
      %p199 = scmp.ne.s32.totalorder %s194, %s196
      %p200 = scmp.eq.s32.totalorder %s29, 0
      %p201 = por %p199, %p200
      %p202 = scmp.ne.s32.totalorder %s194, %s196
      %p203 = scmp.eq.s32.totalorder %s34, 1
      %p204 = por %p202, %p203
      %p205 = scmp.ne.s32.totalorder %s196, %s197
      %p206 = scmp.eq.s32.totalorder %s34, 0
      %p207 = por %p205, %p206
      %p208 = scmp.ne.s32.totalorder %s196, %s197
      %p209 = scmp.eq.s32.totalorder %s35, 1
      %p210 = por %p208, %p209
      %p212 = scmp.ne.s32.totalorder %s197, %s211
      %p213 = scmp.eq.s32.totalorder %s35, 0
      %p214 = por %p212, %p213
      %s216 = sadd.s32 %s215, 1
      %p219 = scmp.eq.s32.totalorder %s29, 1
      %p220 = scmp.ne.s32.totalorder %s215, %s217
      %p221 = scmp.eq.s32.totalorder %s29, 0
      %p222 = por %p220, %p221
      %p223 = scmp.ne.s32.totalorder %s215, %s217
      %p224 = scmp.eq.s32.totalorder %s34, 1
      %p225 = por %p223, %p224
      %p226 = scmp.ne.s32.totalorder %s217, %s218
      %p227 = scmp.eq.s32.totalorder %s34, 0
      %p228 = por %p226, %p227
      %p229 = scmp.ne.s32.totalorder %s217, %s218
      %p230 = scmp.eq.s32.totalorder %s35, 1
      %p231 = por %p229, %p230
      %p233 = scmp.ne.s32.totalorder %s218, %s232
      %p234 = scmp.eq.s32.totalorder %s35, 0
      %p235 = por %p233, %p234
      %s236 = ssub.s32 %s29, %s36
      %p237 = scmp.eq.s32.totalorder %s236, 0
      %s239 = sadd.s32 %s238, 1
      %s240 = scalar_select %p237, %s238, %s239
      %p243 = pneg %p237
      %p244 = scmp.eq.s32.totalorder %s29, 1
      %p245 = por %p243, %p244
      %p246 = scmp.ne.s32.totalorder %s238, %s241
      %p247 = scmp.eq.s32.totalorder %s29, 0
      %p248 = por %p246, %p247
      %p249 = scmp.ne.s32.totalorder %s238, %s241
      %p250 = scmp.eq.s32.totalorder %s34, 1
      %p251 = por %p249, %p250
      %p252 = scmp.ne.s32.totalorder %s241, %s242
      %p253 = scmp.eq.s32.totalorder %s34, 0
      %p254 = por %p252, %p253
      %p255 = scmp.ne.s32.totalorder %s241, %s242
      %p256 = scmp.eq.s32.totalorder %s35, 1
      %p257 = por %p255, %p256
      %p259 = scmp.ne.s32.totalorder %s242, %s258
      %p260 = scmp.eq.s32.totalorder %s35, 0
      %p261 = por %p259, %p260
      %s262 = ssub.s32 %s29, %s36
      %p263 = scmp.eq.s32.totalorder %s262, 0
      %s265 = sadd.s32 %s264, 1
      %s266 = scalar_select %p263, %s264, %s265
      %p269 = pneg %p263
      %p270 = scmp.eq.s32.totalorder %s29, 1
      %p271 = por %p269, %p270
      %p272 = scmp.ne.s32.totalorder %s264, %s267
      %p273 = scmp.eq.s32.totalorder %s29, 0
      %p274 = por %p272, %p273
      %p275 = scmp.ne.s32.totalorder %s264, %s267
      %p276 = scmp.eq.s32.totalorder %s34, 1
      %p277 = por %p275, %p276
      %p278 = scmp.ne.s32.totalorder %s267, %s268
      %p279 = scmp.eq.s32.totalorder %s34, 0
      %p280 = por %p278, %p279
      %p281 = scmp.ne.s32.totalorder %s267, %s268
      %p282 = scmp.eq.s32.totalorder %s35, 1
      %p283 = por %p281, %p282
      %p285 = scmp.ne.s32.totalorder %s268, %s284
      %p286 = scmp.eq.s32.totalorder %s35, 0
      %p287 = por %p285, %p286
      %p288 = scmp.le.s32.totalorder 1, %s29
      %p289 = scmp.lt.s32.totalorder %s29, 3
      %p290 = pnand %p288, %p289
      %p291 = pneg %p290
      // Predicated region
      $region9: #{tpu_custom_call.1} parent=5 // pred_check
        _
      $region10: #{tpu_custom_call.1} parent=5 // pred_check_branch
        %293 = sbr.rel (%p290) target = $region12
      $region11: #{tpu_custom_call.1} parent=5 // pred_region
        %s294 = ssub.s32 %s29, 1
        // Predicated region
        $region13: #{tpu_custom_call.1} parent=11 // pred_check
          %p295 = pneg %p102
        $region14: #{tpu_custom_call.1} parent=11 // pred_check_branch
          %297 = sbr.rel (%p295) target = $region16
        $region15: #{tpu_custom_call.1} parent=11 // pred_region
          _
        $region16: #{tpu_custom_call.1} parent=11 // pred_fallthru
          _
        // Predicated region
        $region17: #{tpu_custom_call.1} parent=11 // pred_check
          %p298 = pneg %p123
        $region18: #{tpu_custom_call.1} parent=11 // pred_check_branch
          %300 = sbr.rel (%p298) target = $region20
        $region19: #{tpu_custom_call.1} parent=11 // pred_region
          %s302 = ssub.s32 4096, 4096
          %303 = vsyncadd [#allocation5], %s302
          %s304 = sshll.u32 [#allocation4], 4
          %s305 = int_to_ptr.vmem [resolvable:$true] %s304
          %310 = dma.hbm_to_vmem [thread:$0]  %s4, 4096, %s305, [#allocation5], 256, 256, 16
        $region20: #{tpu_custom_call.1} parent=11 // pred_fallthru
          _
        // Predicated region
        $region21: #{tpu_custom_call.1} parent=11 // pred_check
          %p311 = pneg %p144
        $region22: #{tpu_custom_call.1} parent=11 // pred_check_branch
          %313 = sbr.rel (%p311) target = $region24
        $region23: #{tpu_custom_call.1} parent=11 // pred_region
          _
        $region24: #{tpu_custom_call.1} parent=11 // pred_fallthru
          _
        // Predicated region
        $region25: #{tpu_custom_call.1} parent=11 // pred_check
          %p314 = pneg %p165
        $region26: #{tpu_custom_call.1} parent=11 // pred_check_branch
          %316 = sbr.rel (%p314) target = $region28
        $region27: #{tpu_custom_call.1} parent=11 // pred_region
          %s318 = ssub.s32 4096, 4096
          %319 = vsyncadd [#allocation8], %s318
          %s320 = sshll.u32 [#allocation7], 4
          %s321 = int_to_ptr.vmem [resolvable:$true] %s320
          %326 = dma.hbm_to_vmem [thread:$0]  %s6, 4096, %s321, [#allocation8], 128, 128, 8
        $region28: #{tpu_custom_call.1} parent=11 // pred_fallthru
          _
        // Predicated region
        $region29: #{tpu_custom_call.1} parent=11 // pred_check
          %p327 = pneg %p186
        $region30: #{tpu_custom_call.1} parent=11 // pred_check_branch
          %329 = sbr.rel (%p327) target = $region32
        $region31: #{tpu_custom_call.1} parent=11 // pred_region
          _
        $region32: #{tpu_custom_call.1} parent=11 // pred_fallthru
          _
        // Predicated region
        $region33: #{tpu_custom_call.1} parent=11 // pred_check
          %p330 = pneg %p207
        $region34: #{tpu_custom_call.1} parent=11 // pred_check_branch
          %332 = sbr.rel (%p330) target = $region36
        $region35: #{tpu_custom_call.1} parent=11 // pred_region
          _
        $region36: #{tpu_custom_call.1} parent=11 // pred_fallthru
          _
        // Predicated region
        $region37: #{tpu_custom_call.1} parent=11 // pred_check
          %p333 = pneg %p228
        $region38: #{tpu_custom_call.1} parent=11 // pred_check_branch
          %335 = sbr.rel (%p333) target = $region40
        $region39: #{tpu_custom_call.1} parent=11 // pred_region
          _
        $region40: #{tpu_custom_call.1} parent=11 // pred_fallthru
          _
      $region12: #{tpu_custom_call.1} parent=5 // pred_fallthru
        _
      %p336 = scmp.lt.s32.totalorder %s29, 2
      // Predicated region
      $region41: #{tpu_custom_call.1} parent=5 // pred_check
        %p337 = pneg %p336
      $region42: #{tpu_custom_call.1} parent=5 // pred_check_branch
        %339 = sbr.rel (%p337) target = $region44
      $region43: #{tpu_custom_call.1} parent=5 // pred_region
        // Predicated region
        $region45: #{tpu_custom_call.1} parent=43 // pred_check
          %p340 = pneg %p49
        $region46: #{tpu_custom_call.1} parent=43 // pred_check_branch
          %342 = sbr.rel (%p340) target = $region48
        $region47: #{tpu_custom_call.1} parent=43 // pred_region
          %p343 = scmp.lt.s32.totalorder %s29, 1
          %s344 = scalar_select %p343, %s29, 1
          %s345 = smul.addr %s344, 8
          %s346 = scalar_lea.vmem %s1, %s345
        $region48: #{tpu_custom_call.1} parent=43 // pred_fallthru
          _
        // Predicated region
        $region49: #{tpu_custom_call.1} parent=43 // pred_check
          %p347 = pneg %p75
        $region50: #{tpu_custom_call.1} parent=43 // pred_check_branch
          %349 = sbr.rel (%p347) target = $region52
        $region51: #{tpu_custom_call.1} parent=43 // pred_region
          %p350 = scmp.lt.s32.totalorder %s29, 1
          %s351 = scalar_select %p350, %s29, 1
          %s352 = smul.addr %s351, 8
          %s353 = scalar_lea.vmem %s2, %s352
        $region52: #{tpu_custom_call.1} parent=43 // pred_fallthru
          _
      $region44: #{tpu_custom_call.1} parent=5 // pred_fallthru
        _
      %p354 = scmp.le.s32.totalorder 1, %s29
      %p355 = scmp.lt.s32.totalorder %s29, 3
      %p356 = pnand %p354, %p355
      %p357 = pneg %p356
      // Predicated region
      $region53: #{tpu_custom_call.1} parent=5 // pred_check
        _
      $region54: #{tpu_custom_call.1} parent=5 // pred_check_branch
        %359 = sbr.rel (%p356) target = $region56
      $region55: #{tpu_custom_call.1} parent=5 // pred_region
        %s360 = ssub.s32 %s29, 1
        // Predicated region
        $region57: #{tpu_custom_call.1} parent=55 // pred_check
          %p361 = pneg %p123
        $region58: #{tpu_custom_call.1} parent=55 // pred_check_branch
          %363 = sbr.rel (%p361) target = $region60
        $region59: #{tpu_custom_call.1} parent=55 // pred_region
          %364 = dma.done [#allocation5], 4096
        $region60: #{tpu_custom_call.1} parent=55 // pred_fallthru
          _
        // Predicated region
        $region61: #{tpu_custom_call.1} parent=55 // pred_check
          %p365 = pneg %p165
        $region62: #{tpu_custom_call.1} parent=55 // pred_check_branch
          %367 = sbr.rel (%p365) target = $region64
        $region63: #{tpu_custom_call.1} parent=55 // pred_region
          %368 = dma.done [#allocation8], 4096
        $region64: #{tpu_custom_call.1} parent=55 // pred_fallthru
          _
        %p369 = scmp.lt.s32.totalorder %s34, 1
        %s370 = scalar_select %p369, %s34, 1
        %s371 = smul.addr %s370, 8
        %s372 = scalar_lea.vmem %s1, %s371
        %p373 = pneg %p55
        %p374 = pneg %p52
        %p375 = scmp.lt.s32.totalorder %s34, 1
        %s376 = scalar_select %p375, %s34, 1
        %s377 = smul.addr %s376, 8
        %s378 = scalar_lea.vmem %s2, %s377
        %p379 = pneg %p81
        %p380 = pneg %p78
        %p381 = pneg %p102
        %p382 = pneg %p99
        %p383 = pneg %p123
        %p384 = pneg %p120
        %p385 = pneg %p144
        %p386 = pneg %p141
        %p387 = pneg %p165
        %p388 = pneg %p162
        %p389 = pneg %p186
        %p390 = pneg %p183
        %p391 = pneg %p207
        %p392 = pneg %p204
        %p393 = pneg %p228
        %p394 = pneg %p225
        %p395 = pneg %p254
        %p396 = pneg %p251
        %s397 = sand.u32 %s241, 1
        %s398 = scalar_lea.sflag [#allocation6], %s397
        %s399 = sand.u32 %s241, 1
        %s400 = smul.addr %s399, 8
        %s401 = scalar_lea.vmem [#allocation9], %s400
        %p402 = pneg %p280
        %p403 = pneg %p277
        %p404 = scmp.lt.s32.totalorder %s34, 1
        %s405 = scalar_select %p404, %s34, 1
        %s406 = scalar_lea.vmem %s11, %s405
        %p407 = scmp.lt.s32.totalorder %s34, 1
        %s408 = scalar_select %p407, %s34, 1
        %s409 = smul.addr %s408, 8
        %s410 = scalar_lea.vmem %s1, %s409
        %p411 = scmp.lt.s32.totalorder %s34, 1
        %s412 = scalar_select %p411, %s34, 1
        %s413 = smul.addr %s412, 8
        %s414 = scalar_lea.vmem %s2, %s413
        %p415 = scmp.lt.s32.totalorder %s34, 1
        %s416 = scalar_select %p415, %s34, 1
        %s417 = scalar_lea.vmem %s11, %s416
        %v418 = vld [vmem:[%s410] sm:$0xff]
        %v419 = vld [vmem:[%s414] sm:$0xff]
        %vm420 = vcmask 23552
        %v422 = vsel %vm420, %v418, 0
        %424 = vmatprep.subr.mxu0 0.0
        %425 = vmatpush1.xpose.msra.mxu0 %v422
        %426 = vmatprep.subr.mxu0 0.0
        %427 = vmatpush1.xpose.msra.mxu0 0.0
        %428 = vmatprep.subr.mxu0 0.0
        %429 = vmatpush1.xpose.msra.mxu0 0.0
        %430 = vmatprep.subr.mxu0 0.0
        %431 = vmatpush1.xpose.msra.mxu0 0.0
        %432 = vmatprep.subr.mxu0 0.0
        %433 = vmatpush1.xpose.msra.mxu0 0.0
        %434 = vmatprep.subr.mxu0 0.0
        %435 = vmatpush1.xpose.msra.mxu0 0.0
        %436 = vmatprep.subr.mxu0 0.0
        %437 = vmatpush1.xpose.msra.mxu0 0.0
        %438 = vmatprep.subr.mxu0 0.0
        %439 = vmatpush1.xpose.msra.mxu0 0.0
        %440 = vmatprep.subr.mxu0 0.0
        %441 = vmatpush1.xpose.msra.mxu0 0.0
        %442 = vmatprep.subr.mxu0 0.0
        %443 = vmatpush1.xpose.msra.mxu0 0.0
        %444 = vmatprep.subr.mxu0 0.0
        %445 = vmatpush1.xpose.msra.mxu0 0.0
        %446 = vmatprep.subr.mxu0 0.0
        %447 = vmatpush1.xpose.msra.mxu0 0.0
        %448 = vmatprep.subr.mxu0 0.0
        %449 = vmatpush1.xpose.msra.mxu0 0.0
        %450 = vmatprep.subr.mxu0 0.0
        %451 = vmatpush1.xpose.msra.mxu0 0.0
        %452 = vmatprep.subr.mxu0 0.0
        %453 = vmatpush1.xpose.msra.mxu0 0.0
        %454 = vmatprep.subr.mxu0 0.0
        %455 = vmatpush1.xpose.msra.mxu0 0.0
        %456 = vmatprep.subr.mxu0 0.0
        %457 = vmatpush1.xpose.msra.mxu0 0.0
        %458 = vmatprep.subr.mxu0 0.0
        %459 = vmatpush1.xpose.msra.mxu0 0.0
        %460 = vmatprep.subr.mxu0 0.0
        %461 = vmatpush1.xpose.msra.mxu0 0.0
        %462 = vmatprep.subr.mxu0 0.0
        %463 = vmatpush1.xpose.msra.mxu0 0.0
        %464 = vmatprep.subr.mxu0 0.0
        %465 = vmatpush1.xpose.msra.mxu0 0.0
        %466 = vmatprep.subr.mxu0 0.0
        %467 = vmatpush1.xpose.msra.mxu0 0.0
        %468 = vmatprep.subr.mxu0 0.0
        %469 = vmatpush1.xpose.msra.mxu0 0.0
        %470 = vmatprep.subr.mxu0 0.0
        %471 = vmatpush1.xpose.msra.mxu0 0.0
        %472 = vmatprep.subr.mxu0 0.0
        %473 = vmatpush1.xpose.msra.mxu0 0.0
        %474 = vmatprep.subr.mxu0 0.0
        %475 = vmatpush1.xpose.msra.mxu0 0.0
        %476 = vmatprep.subr.mxu0 0.0
        %477 = vmatpush1.xpose.msra.mxu0 0.0
        %478 = vmatprep.subr.mxu0 0.0
        %479 = vmatpush1.xpose.msra.mxu0 0.0
        %480 = vmatprep.subr.mxu0 0.0
        %481 = vmatpush1.xpose.msra.mxu0 0.0
        %482 = vmatprep.subr.mxu0 0.0
        %483 = vmatpush1.xpose.msra.mxu0 0.0
        %484 = vmatprep.subr.mxu0 0.0
        %485 = vmatpush1.xpose.msra.mxu0 0.0
        %486 = vmatprep.subr.mxu0 0.0
        %487 = vmatpush1.xpose.msra.mxu0 0.0
        %488 = vmatprep.mubr.f32.mxu0 0.0
        %489 = vmatmul.mubr.f32.gmra.mrb[0].mxu0 %v422
        %v490 = vpop.f32.mrb[0].mxu0
        %v491 = vadd.f32 0.0, %v490
        %v492 = vpop.f32.mrb[0].mxu0
        %493 = vdwg.mxu0
        %v494 = vmul.f32 %v418, %v418
        %v495 = vsel %vm420, %v494, 0.0
        %496 = vadd.xlane.f32.xlu0 %v495
        %v497 = vpop.xlane.xlu0 %496
        %vm498 = vcmask 7168
        %v500 = vsel %vm498, 1.0, 0
        %v503 = vsel %vm498, %v497, 0
        %505 = vmatprep.subr.mxu0 0.0
        %506 = vmatpush1.xpose.msra.mxu0 %v503
        %507 = vmatprep.subr.mxu0 0.0
        %508 = vmatpush1.xpose.msra.mxu0 0.0
        %509 = vmatprep.subr.mxu0 0.0
        %510 = vmatpush1.xpose.msra.mxu0 0.0
        %511 = vmatprep.subr.mxu0 0.0
        %512 = vmatpush1.xpose.msra.mxu0 0.0
        %513 = vmatprep.subr.mxu0 0.0
        %514 = vmatpush1.xpose.msra.mxu0 0.0
        %515 = vmatprep.subr.mxu0 0.0
        %516 = vmatpush1.xpose.msra.mxu0 0.0
        %517 = vmatprep.subr.mxu0 0.0
        %518 = vmatpush1.xpose.msra.mxu0 0.0
        %519 = vmatprep.subr.mxu0 0.0
        %520 = vmatpush1.xpose.msra.mxu0 0.0
        %521 = vmatprep.subr.mxu0 0.0
        %522 = vmatpush1.xpose.msra.mxu0 0.0
        %523 = vmatprep.subr.mxu0 0.0
        %524 = vmatpush1.xpose.msra.mxu0 0.0
        %525 = vmatprep.subr.mxu0 0.0
        %526 = vmatpush1.xpose.msra.mxu0 0.0
        %527 = vmatprep.subr.mxu0 0.0
        %528 = vmatpush1.xpose.msra.mxu0 0.0
        %529 = vmatprep.subr.mxu0 0.0
        %530 = vmatpush1.xpose.msra.mxu0 0.0
        %531 = vmatprep.subr.mxu0 0.0
        %532 = vmatpush1.xpose.msra.mxu0 0.0
        %533 = vmatprep.subr.mxu0 0.0
        %534 = vmatpush1.xpose.msra.mxu0 0.0
        %535 = vmatprep.subr.mxu0 0.0
        %536 = vmatpush1.xpose.msra.mxu0 0.0
        %537 = vmatprep.subr.mxu0 0.0
        %538 = vmatpush1.xpose.msra.mxu0 0.0
        %539 = vmatprep.subr.mxu0 0.0
        %540 = vmatpush1.xpose.msra.mxu0 0.0
        %541 = vmatprep.subr.mxu0 0.0
        %542 = vmatpush1.xpose.msra.mxu0 0.0
        %543 = vmatprep.subr.mxu0 0.0
        %544 = vmatpush1.xpose.msra.mxu0 0.0
        %545 = vmatprep.subr.mxu0 0.0
        %546 = vmatpush1.xpose.msra.mxu0 0.0
        %547 = vmatprep.subr.mxu0 0.0
        %548 = vmatpush1.xpose.msra.mxu0 0.0
        %549 = vmatprep.subr.mxu0 0.0
        %550 = vmatpush1.xpose.msra.mxu0 0.0
        %551 = vmatprep.subr.mxu0 0.0
        %552 = vmatpush1.xpose.msra.mxu0 0.0
        %553 = vmatprep.subr.mxu0 0.0
        %554 = vmatpush1.xpose.msra.mxu0 0.0
        %555 = vmatprep.subr.mxu0 0.0
        %556 = vmatpush1.xpose.msra.mxu0 0.0
        %557 = vmatprep.subr.mxu0 0.0
        %558 = vmatpush1.xpose.msra.mxu0 0.0
        %559 = vmatprep.subr.mxu0 0.0
        %560 = vmatpush1.xpose.msra.mxu0 0.0
        %561 = vmatprep.subr.mxu0 0.0
        %562 = vmatpush1.xpose.msra.mxu0 0.0
        %563 = vmatprep.subr.mxu0 0.0
        %564 = vmatpush1.xpose.msra.mxu0 0.0
        %565 = vmatprep.subr.mxu0 0.0
        %566 = vmatpush1.xpose.msra.mxu0 0.0
        %567 = vmatprep.subr.mxu0 0.0
        %568 = vmatpush1.xpose.msra.mxu0 0.0
        %569 = vmatprep.mubr.f32.mxu0 0.0
        %570 = vmatmul.mubr.f32.gmra.mrb[0].mxu0 %v500
        %v571 = vpop.f32.mrb[0].mxu0
        %v572 = vadd.f32 0.0, %v571
        %v573 = vpop.f32.mrb[0].mxu0
        %574 = vdwg.mxu0
        %v575 = vadd.f32 %v497, %v572
        %v576 = vmul.f32 %v491, 2.0
        %v577 = vsub.f32 %v575, %v576
        %v578 = vmax.f32 %v577, 0.0
        %v579 = vrsqrt.pop %v578
        %v580 = vmul.f32 %v578, %v579
        %vm581 = vcmp.eq.f32.partialorder %v578, inf
        %v582 = vsel %vm581, %v578, %v580
        %vm583 = vcmp.eq.f32.partialorder %v578, 0.0
        %v584 = vand.u32 %v578, 2147483648
        %v585 = vsel %vm583, %v584, %v582
        %v586 = vlaneseq
        %v587 = vshrl.u32 %v586, 7
        %v588 = vlaneseq
        %v589 = vand.u32 %v588, 127
        %vm590 = vcmp.ne.s32.totalorder %v587, %v589
        %v591 = vsel %vm590, 1, 0
        %v592 = vcvt.s32.f32 %v591
        %vm593 = vcmask 31744
        %v594 = vsel %vm593, %v419, 0.0
        %595 = vadd.xlane.f32.xlu0 %v594
        %v596 = vpop.xlane.xlu0 %595
        %v598 = vsel %vm498, %v596, 0
        %600 = vmatprep.subr.mxu0 0.0
        %601 = vmatpush1.xpose.msra.mxu0 %v598
        %602 = vmatprep.subr.mxu0 0.0
        %603 = vmatpush1.xpose.msra.mxu0 0.0
        %604 = vmatprep.subr.mxu0 0.0
        %605 = vmatpush1.xpose.msra.mxu0 0.0
        %606 = vmatprep.subr.mxu0 0.0
        %607 = vmatpush1.xpose.msra.mxu0 0.0
        %608 = vmatprep.subr.mxu0 0.0
        %609 = vmatpush1.xpose.msra.mxu0 0.0
        %610 = vmatprep.subr.mxu0 0.0
        %611 = vmatpush1.xpose.msra.mxu0 0.0
        %612 = vmatprep.subr.mxu0 0.0
        %613 = vmatpush1.xpose.msra.mxu0 0.0
        %614 = vmatprep.subr.mxu0 0.0
        %615 = vmatpush1.xpose.msra.mxu0 0.0
        %616 = vmatprep.subr.mxu0 0.0
        %617 = vmatpush1.xpose.msra.mxu0 0.0
        %618 = vmatprep.subr.mxu0 0.0
        %619 = vmatpush1.xpose.msra.mxu0 0.0
        %620 = vmatprep.subr.mxu0 0.0
        %621 = vmatpush1.xpose.msra.mxu0 0.0
        %622 = vmatprep.subr.mxu0 0.0
        %623 = vmatpush1.xpose.msra.mxu0 0.0
        %624 = vmatprep.subr.mxu0 0.0
        %625 = vmatpush1.xpose.msra.mxu0 0.0
        %626 = vmatprep.subr.mxu0 0.0
        %627 = vmatpush1.xpose.msra.mxu0 0.0
        %628 = vmatprep.subr.mxu0 0.0
        %629 = vmatpush1.xpose.msra.mxu0 0.0
        %630 = vmatprep.subr.mxu0 0.0
        %631 = vmatpush1.xpose.msra.mxu0 0.0
        %632 = vmatprep.subr.mxu0 0.0
        %633 = vmatpush1.xpose.msra.mxu0 0.0
        %634 = vmatprep.subr.mxu0 0.0
        %635 = vmatpush1.xpose.msra.mxu0 0.0
        %636 = vmatprep.subr.mxu0 0.0
        %637 = vmatpush1.xpose.msra.mxu0 0.0
        %638 = vmatprep.subr.mxu0 0.0
        %639 = vmatpush1.xpose.msra.mxu0 0.0
        %640 = vmatprep.subr.mxu0 0.0
        %641 = vmatpush1.xpose.msra.mxu0 0.0
        %642 = vmatprep.subr.mxu0 0.0
        %643 = vmatpush1.xpose.msra.mxu0 0.0
        %644 = vmatprep.subr.mxu0 0.0
        %645 = vmatpush1.xpose.msra.mxu0 0.0
        %646 = vmatprep.subr.mxu0 0.0
        %647 = vmatpush1.xpose.msra.mxu0 0.0
        %648 = vmatprep.subr.mxu0 0.0
        %649 = vmatpush1.xpose.msra.mxu0 0.0
        %650 = vmatprep.subr.mxu0 0.0
        %651 = vmatpush1.xpose.msra.mxu0 0.0
        %652 = vmatprep.subr.mxu0 0.0
        %653 = vmatpush1.xpose.msra.mxu0 0.0
        %654 = vmatprep.subr.mxu0 0.0
        %655 = vmatpush1.xpose.msra.mxu0 0.0
        %656 = vmatprep.subr.mxu0 0.0
        %657 = vmatpush1.xpose.msra.mxu0 0.0
        %658 = vmatprep.subr.mxu0 0.0
        %659 = vmatpush1.xpose.msra.mxu0 0.0
        %660 = vmatprep.subr.mxu0 0.0
        %661 = vmatpush1.xpose.msra.mxu0 0.0
        %662 = vmatprep.subr.mxu0 0.0
        %663 = vmatpush1.xpose.msra.mxu0 0.0
        %664 = vmatprep.mubr.f32.mxu0 0.0
        %665 = vmatmul.mubr.f32.gmra.mrb[0].mxu0 %v598
        %v666 = vpop.f32.mrb[0].mxu0
        %v667 = vadd.f32 0.0, %v666
        %v668 = vpop.f32.mrb[0].mxu0
        %669 = vdwg.mxu0
        %v670 = vmul.f32 %v592, %v667
        %vm671 = vcmp.le.f32.partialorder %v585, 5.2
        %v672 = vmul.f32 %v585, 0.60415244
        %v673 = vmul.f32 %v672, %v672
        %v674 = vmul.f32 %v673, 4.7794773e-14
        %v675 = vadd.f32 %v674, -1.1470745e-11
        %v676 = vmul.f32 %v675, %v673
        %v677 = vadd.f32 %v676, 2.0876756e-09
        %v678 = vmul.f32 %v677, %v673
        %v679 = vadd.f32 %v678, -2.755732e-07
        %v680 = vmul.f32 %v679, %v673
        %v681 = vadd.f32 %v680, 2.4801588e-05
        %v682 = vmul.f32 %v681, %v673
        %v683 = vadd.f32 %v682, -0.0013888889
        %v684 = vmul.f32 %v683, %v673
        %v685 = vadd.f32 %v684, 0.041666668
        %v686 = vmul.f32 %v685, %v673
        %v687 = vadd.f32 %v686, -0.5
        %v688 = vmul.f32 %v687, %v673
        %v689 = vadd.f32 %v688, 1.0
        %v690 = vmul.f32 %v689, 0.5
        %v691 = vadd.f32 %v690, 0.5
        %v692 = vsel %vm671, %v691, 0.0
        %vm693 = vcmp.le.f32.partialorder %v585, 3.5
        %v694 = vmul.f32 %v585, 0.8975979
        %v695 = vmul.f32 %v694, %v694
        %v696 = vmul.f32 %v695, 4.7794773e-14
        %v697 = vadd.f32 %v696, -1.1470745e-11
        %v698 = vmul.f32 %v697, %v695
        %v699 = vadd.f32 %v698, 2.0876756e-09
        %v700 = vmul.f32 %v699, %v695
        %v701 = vadd.f32 %v700, -2.755732e-07
        %v702 = vmul.f32 %v701, %v695
        %v703 = vadd.f32 %v702, 2.4801588e-05
        %v704 = vmul.f32 %v703, %v695
        %v705 = vadd.f32 %v704, -0.0013888889
        %v706 = vmul.f32 %v705, %v695
        %v707 = vadd.f32 %v706, 0.041666668
        %v708 = vmul.f32 %v707, %v695
        %v709 = vadd.f32 %v708, -0.5
        %v710 = vmul.f32 %v709, %v695
        %v711 = vadd.f32 %v710, 1.0
        %v712 = vmul.f32 %v711, 0.5
        %v713 = vadd.f32 %v712, 0.5
        %v714 = vsel %vm693, %v713, 0.0
        %v715 = vmul.f32 %v692, 0.25
        %v716 = vmul.f32 %v715, %v670
        %v717 = vsub.f32 %v585, 0.9
        %v718 = vmul.f32 %v717, %v717
        %v719 = vmul.f32 %v718, -16.0
        %v720 = vmul.f32 %v719, 1.442695
        %v721 = vpow.pop %v720
        %v722 = vmul.f32 %v721, %v716
        %v723 = vsub.f32 %v585, 1.4285715
        %v724 = vmul.f32 %v723, %v723
        %v725 = vmul.f32 %v724, -16.0
        %v726 = vmul.f32 %v725, 1.442695
        %v727 = vpow.pop %v726
        %v728 = vmul.f32 %v727, %v716
        %v729 = vsub.f32 %v585, 1.9571428
        %v730 = vmul.f32 %v729, %v729
        %v731 = vmul.f32 %v730, -16.0
        %v732 = vmul.f32 %v731, 1.442695
        %v733 = vpow.pop %v732
        %v734 = vmul.f32 %v733, %v716
        %v735 = vsub.f32 %v585, 2.4857142
        %v736 = vmul.f32 %v735, %v735
        %v737 = vmul.f32 %v736, -16.0
        %v738 = vmul.f32 %v737, 1.442695
        %v739 = vpow.pop %v738
        %v740 = vmul.f32 %v739, %v716
        %v741 = vsub.f32 %v585, 3.0142858
        %v742 = vmul.f32 %v741, %v741
        %v743 = vmul.f32 %v742, -16.0
        %v744 = vmul.f32 %v743, 1.442695
        %v745 = vpow.pop %v744
        %v746 = vmul.f32 %v745, %v716
        %v747 = vsub.f32 %v585, 3.5428572
        %v748 = vmul.f32 %v747, %v747
        %v749 = vmul.f32 %v748, -16.0
        %v750 = vmul.f32 %v749, 1.442695
        %v751 = vpow.pop %v750
        %v752 = vmul.f32 %v751, %v716
        %v753 = vsub.f32 %v585, 4.071429
        %v754 = vmul.f32 %v753, %v753
        %v755 = vmul.f32 %v754, -16.0
        %v756 = vmul.f32 %v755, 1.442695
        %v757 = vpow.pop %v756
        %v758 = vmul.f32 %v757, %v716
        %v759 = vsub.f32 %v585, 4.6
        %v760 = vmul.f32 %v759, %v759
        %v761 = vmul.f32 %v760, -16.0
        %v762 = vmul.f32 %v761, 1.442695
        %v763 = vpow.pop %v762
        %v764 = vmul.f32 %v763, %v716
        %vm765 = vcmask 64512
        %v767 = vsel %vm765, %v722, 0
        %v770 = vsel %vm765, %v728, 0
        %v773 = vsel %vm765, %v734, 0
        %v776 = vsel %vm765, %v740, 0
        %v779 = vsel %vm765, %v746, 0
        %v782 = vsel %vm765, %v752, 0
        %v785 = vsel %vm765, %v758, 0
        %v788 = vsel %vm765, %v764, 0
        %790 = vmatprep.subr.mxu0 0.0
        %791 = vmatpush1.msra.mxu0 %v419
        %792 = vmatprep.subr.mxu0 0.0
        %793 = vmatpush1.msra.mxu0 0.0
        %794 = vmatprep.subr.mxu0 0.0
        %795 = vmatpush1.msra.mxu0 0.0
        %796 = vmatprep.subr.mxu0 0.0
        %797 = vmatpush1.msra.mxu0 0.0
        %798 = vmatprep.subr.mxu0 0.0
        %799 = vmatpush1.msra.mxu0 0.0
        %800 = vmatprep.subr.mxu0 0.0
        %801 = vmatpush1.msra.mxu0 0.0
        %802 = vmatprep.subr.mxu0 0.0
        %803 = vmatpush1.msra.mxu0 0.0
        %804 = vmatprep.subr.mxu0 0.0
        %805 = vmatpush1.msra.mxu0 0.0
        %806 = vmatprep.subr.mxu0 0.0
        %807 = vmatpush1.msra.mxu0 0.0
        %808 = vmatprep.subr.mxu0 0.0
        %809 = vmatpush1.msra.mxu0 0.0
        %810 = vmatprep.subr.mxu0 0.0
        %811 = vmatpush1.msra.mxu0 0.0
        %812 = vmatprep.subr.mxu0 0.0
        %813 = vmatpush1.msra.mxu0 0.0
        %814 = vmatprep.subr.mxu0 0.0
        %815 = vmatpush1.msra.mxu0 0.0
        %816 = vmatprep.subr.mxu0 0.0
        %817 = vmatpush1.msra.mxu0 0.0
        %818 = vmatprep.subr.mxu0 0.0
        %819 = vmatpush1.msra.mxu0 0.0
        %820 = vmatprep.subr.mxu0 0.0
        %821 = vmatpush1.msra.mxu0 0.0
        %822 = vmatprep.subr.mxu0 0.0
        %823 = vmatpush1.msra.mxu0 0.0
        %824 = vmatprep.subr.mxu0 0.0
        %825 = vmatpush1.msra.mxu0 0.0
        %826 = vmatprep.subr.mxu0 0.0
        %827 = vmatpush1.msra.mxu0 0.0
        %828 = vmatprep.subr.mxu0 0.0
        %829 = vmatpush1.msra.mxu0 0.0
        %830 = vmatprep.subr.mxu0 0.0
        %831 = vmatpush1.msra.mxu0 0.0
        %832 = vmatprep.subr.mxu0 0.0
        %833 = vmatpush1.msra.mxu0 0.0
        %834 = vmatprep.subr.mxu0 0.0
        %835 = vmatpush1.msra.mxu0 0.0
        %836 = vmatprep.subr.mxu0 0.0
        %837 = vmatpush1.msra.mxu0 0.0
        %838 = vmatprep.subr.mxu0 0.0
        %839 = vmatpush1.msra.mxu0 0.0
        %840 = vmatprep.subr.mxu0 0.0
        %841 = vmatpush1.msra.mxu0 0.0
        %842 = vmatprep.subr.mxu0 0.0
        %843 = vmatpush1.msra.mxu0 0.0
        %844 = vmatprep.subr.mxu0 0.0
        %845 = vmatpush1.msra.mxu0 0.0
        %846 = vmatprep.subr.mxu0 0.0
        %847 = vmatpush1.msra.mxu0 0.0
        %848 = vmatprep.subr.mxu0 0.0
        %849 = vmatpush1.msra.mxu0 0.0
        %850 = vmatprep.subr.mxu0 0.0
        %851 = vmatpush1.msra.mxu0 0.0
        %852 = vmatprep.subr.mxu0 0.0
        %853 = vmatpush1.msra.mxu0 0.0
        %854 = vmatprep.mubr.f32.mxu0 0.0
        %855 = vmatmul.mubr.f32.gmra.mrb[0].mxu0 %v767
        %v856 = vpop.f32.mrb[0].mxu0
        %v857 = vadd.f32 0.0, %v856
        %v858 = vpop.f32.mrb[0].mxu0
        %859 = vmatprep.mubr.f32.mxu0 0.0
        %860 = vmatmul.mubr.f32.gmra.mrb[0].mxu0 %v770
        %v861 = vpop.f32.mrb[0].mxu0
        %v862 = vadd.f32 0.0, %v861
        %v863 = vpop.f32.mrb[0].mxu0
        %864 = vmatprep.mubr.f32.mxu0 0.0
        %865 = vmatmul.mubr.f32.gmra.mrb[0].mxu0 %v773
        %v866 = vpop.f32.mrb[0].mxu0
        %v867 = vadd.f32 0.0, %v866
        %v868 = vpop.f32.mrb[0].mxu0
        %869 = vmatprep.mubr.f32.mxu0 0.0
        %870 = vmatmul.mubr.f32.gmra.mrb[0].mxu0 %v776
        %v871 = vpop.f32.mrb[0].mxu0
        %v872 = vadd.f32 0.0, %v871
        %v873 = vpop.f32.mrb[0].mxu0
        %874 = vmatprep.mubr.f32.mxu0 0.0
        %875 = vmatmul.mubr.f32.gmra.mrb[0].mxu0 %v779
        %v876 = vpop.f32.mrb[0].mxu0
        %v877 = vadd.f32 0.0, %v876
        %v878 = vpop.f32.mrb[0].mxu0
        %879 = vmatprep.mubr.f32.mxu0 0.0
        %880 = vmatmul.mubr.f32.gmra.mrb[0].mxu0 %v782
        %v881 = vpop.f32.mrb[0].mxu0
        %v882 = vadd.f32 0.0, %v881
        %v883 = vpop.f32.mrb[0].mxu0
        %884 = vmatprep.mubr.f32.mxu0 0.0
        %885 = vmatmul.mubr.f32.gmra.mrb[0].mxu0 %v785
        %v886 = vpop.f32.mrb[0].mxu0
        %v887 = vadd.f32 0.0, %v886
        %v888 = vpop.f32.mrb[0].mxu0
        %889 = vmatprep.mubr.f32.mxu0 0.0
        %890 = vmatmul.mubr.f32.gmra.mrb[0].mxu0 %v788
        %v891 = vpop.f32.mrb[0].mxu0
        %v892 = vadd.f32 0.0, %v891
        %v893 = vpop.f32.mrb[0].mxu0
        %894 = vdwg.mxu0
        %s895 = smul.u32 %s34, 128
        %s896 = sld [smem:[#allocation3 + %s895]]
        %p897 = scmp.ge.s32.totalorder %s896, 0
        %s898 = scalar_select %p897, 1, 0
        %s899 = scvt.s32.f32 %s898
        %p900 = scmp.gt.s32.totalorder %s896, 0
        %s901 = scalar_select %p900, %s896, 0
        %s902 = smul.u32 %s901, 4
        %s903 = scalar_lea.vmem %s3, %s902
        %v904 = vld [vmem:[%s903] sm:$0xf]
        %v906 = vsel %vm593, %v419, 0
        %vm908 = vcmask 1043456
        %v910 = vsel %vm908, %v904, 0
        %912 = vmatprep.subr.mxu0 0.0
        %913 = vmatpush1.msra.mxu0 %v910
        %914 = vmatprep.subr.mxu0 0.0
        %915 = vmatpush1.msra.mxu0 0.0
        %916 = vmatprep.subr.mxu0 0.0
        %917 = vmatpush1.msra.mxu0 0.0
        %918 = vmatprep.subr.mxu0 0.0
        %919 = vmatpush1.msra.mxu0 0.0
        %920 = vmatprep.subr.mxu0 0.0
        %921 = vmatpush1.msra.mxu0 0.0
        %922 = vmatprep.subr.mxu0 0.0
        %923 = vmatpush1.msra.mxu0 0.0
        %924 = vmatprep.subr.mxu0 0.0
        %925 = vmatpush1.msra.mxu0 0.0
        %926 = vmatprep.subr.mxu0 0.0
        %927 = vmatpush1.msra.mxu0 0.0
        %928 = vmatprep.subr.mxu0 0.0
        %929 = vmatpush1.msra.mxu0 0.0
        %930 = vmatprep.subr.mxu0 0.0
        %931 = vmatpush1.msra.mxu0 0.0
        %932 = vmatprep.subr.mxu0 0.0
        %933 = vmatpush1.msra.mxu0 0.0
        %934 = vmatprep.subr.mxu0 0.0
        %935 = vmatpush1.msra.mxu0 0.0
        %936 = vmatprep.subr.mxu0 0.0
        %937 = vmatpush1.msra.mxu0 0.0
        %938 = vmatprep.subr.mxu0 0.0
        %939 = vmatpush1.msra.mxu0 0.0
        %940 = vmatprep.subr.mxu0 0.0
        %941 = vmatpush1.msra.mxu0 0.0
        %942 = vmatprep.subr.mxu0 0.0
        %943 = vmatpush1.msra.mxu0 0.0
        %944 = vmatprep.subr.mxu0 0.0
        %945 = vmatpush1.msra.mxu0 0.0
        %946 = vmatprep.subr.mxu0 0.0
        %947 = vmatpush1.msra.mxu0 0.0
        %948 = vmatprep.subr.mxu0 0.0
        %949 = vmatpush1.msra.mxu0 0.0
        %950 = vmatprep.subr.mxu0 0.0
        %951 = vmatpush1.msra.mxu0 0.0
        %952 = vmatprep.subr.mxu0 0.0
        %953 = vmatpush1.msra.mxu0 0.0
        %954 = vmatprep.subr.mxu0 0.0
        %955 = vmatpush1.msra.mxu0 0.0
        %956 = vmatprep.subr.mxu0 0.0
        %957 = vmatpush1.msra.mxu0 0.0
        %958 = vmatprep.subr.mxu0 0.0
        %959 = vmatpush1.msra.mxu0 0.0
        %960 = vmatprep.subr.mxu0 0.0
        %961 = vmatpush1.msra.mxu0 0.0
        %962 = vmatprep.subr.mxu0 0.0
        %963 = vmatpush1.msra.mxu0 0.0
        %964 = vmatprep.subr.mxu0 0.0
        %965 = vmatpush1.msra.mxu0 0.0
        %966 = vmatprep.subr.mxu0 0.0
        %967 = vmatpush1.msra.mxu0 0.0
        %968 = vmatprep.subr.mxu0 0.0
        %969 = vmatpush1.msra.mxu0 0.0
        %970 = vmatprep.subr.mxu0 0.0
        %971 = vmatpush1.msra.mxu0 0.0
        %972 = vmatprep.subr.mxu0 0.0
        %973 = vmatpush1.msra.mxu0 0.0
        %974 = vmatprep.subr.mxu0 0.0
        %975 = vmatpush1.msra.mxu0 0.0
        %976 = vmatprep.mubr.f32.mxu0 0.0
        %977 = vmatmul.mubr.f32.gmra.mrb[0].mxu0 %v906
        %v978 = vpop.f32.mrb[0].mxu0
        %v979 = vadd.f32 0.0, %v978
        %v980 = vpop.f32.mrb[0].mxu0
        %981 = vdwg.mxu0
        %983 = vset.pattern.permute.xlu0 0
        %984 = vperm.xlu0 %983, %v578
        %v985 = vpop.permute.xlu0 %984
        %v987 = vadd.f32 %v578, %v985
        %v988 = vlaneseq
        %v989 = vshrl.u32 %v988, 7
        %v990 = vsub.s32 0, %v989
        %v991 = vrot.slane %v578, %v990
        %v992 = vsub.f32 %v987, %v991
        %v993 = vmul.f32 %v992, 0.5
        %995 = vset.pattern.permute.xlu0 0
        %996 = vperm.xlu0 %995, %v585
        %v997 = vpop.permute.xlu0 %996
        %v999 = vmul.f32 %v585, %v997
        %v1000 = vadd.f32 %v999, 1e-10
        %v1001 = vrcp.pop %v1000
        %v1002 = vmul.f32 %v1000, %v1001
        %v1003 = vsub.f32 2.0, %v1002
        %v1004 = vmul.f32 %v1001, %v1003
        %v1005 = vmul.f32 %v993, 0.95
        %v1006 = vmul.f32 %v1005, %v1004
        %v1007 = vmul.f32 %v1006, %v1006
        %v1008 = vsub.f32 1.0, %v1007
        %v1009 = vmax.f32 %v1008, 0.0
        %v1010 = vrsqrt.pop %v1009
        %v1011 = vmul.f32 %v1009, %v1010
        %vm1012 = vcmp.eq.f32.partialorder %v1009, inf
        %v1013 = vsel %vm1012, %v1009, %v1011
        %vm1014 = vcmp.eq.f32.partialorder %v1009, 0.0
        %v1015 = vand.u32 %v1009, 2147483648
        %v1016 = vsel %vm1014, %v1015, %v1013
        %v1017 = vadd.f32 %v585, %v997
        %v1018 = vmul.f32 %v1017, 0.5
        %1020 = vset.pattern.permute.xlu0 0
        %1021 = vperm.xlu0 %1020, %v592
        %v1022 = vpop.permute.xlu0 %1021
        %v1024 = vmul.f32 %v670, %v1022
        %v1025 = vlaneseq
        %v1026 = vshrl.u32 %v1025, 7
        %v1027 = vsub.s32 0, %v1026
        %v1028 = vrot.slane %v592, %v1027
        %v1029 = vmul.f32 %v1024, %v1028
        %v1030 = vstv %s899
        %v1031 = vmul.f32 %v1029, %v1030
        %1033 = vset.pattern.permute.xlu0 0
        %1034 = vperm.xlu0 %1033, %v714
        %v1035 = vpop.permute.xlu0 %1034
        %v1037 = vmul.f32 %v714, %v1035
        %v1038 = vmul.f32 %v1037, 2.0
        %v1039 = vmul.f32 %v1038, %v1031
        %v1040 = vsub.f32 %v1018, 0.9
        %v1041 = vmul.f32 %v1040, %v1040
        %v1042 = vmul.f32 %v1041, -8.0
        %v1043 = vmul.f32 %v1042, 1.442695
        %v1044 = vpow.pop %v1043
        %v1045 = vsub.f32 %v1018, 2.2
        %v1046 = vmul.f32 %v1045, %v1045
        %v1047 = vmul.f32 %v1046, -8.0
        %v1048 = vmul.f32 %v1047, 1.442695
        %v1049 = vpow.pop %v1048
        %v1050 = vmul.f32 %v1006, 0.9238795
        %v1051 = vadd.f32 %v1050, 1.0
        %v1052 = vmul.f32 %v1016, 0.38268343
        %v1053 = vadd.f32 %v1051, %v1052
        %v1054 = vmul.f32 %v1053, 0.5
        %v1055 = vmul.f32 %v1054, %v1054
        %v1056 = vmul.f32 %v1055, %v1055
        %v1057 = vmul.f32 %v1056, %v1056
        %v1058 = vmul.f32 %v1006, 0.38268343
        %v1059 = vadd.f32 %v1058, 1.0
        %v1060 = vmul.f32 %v1016, 0.9238795
        %v1061 = vadd.f32 %v1059, %v1060
        %v1062 = vmul.f32 %v1061, 0.5
        %v1063 = vmul.f32 %v1062, %v1062
        %v1064 = vmul.f32 %v1063, %v1063
        %v1065 = vmul.f32 %v1064, %v1064
        %v1066 = vmul.f32 %v1006, -0.38268343
        %v1067 = vadd.f32 %v1066, 1.0
        %v1068 = vadd.f32 %v1067, %v1060
        %v1069 = vmul.f32 %v1068, 0.5
        %v1070 = vmul.f32 %v1069, %v1069
        %v1071 = vmul.f32 %v1070, %v1070
        %v1072 = vmul.f32 %v1071, %v1071
        %v1073 = vmul.f32 %v1006, -0.9238795
        %v1074 = vadd.f32 %v1073, 1.0
        %v1075 = vadd.f32 %v1074, %v1052
        %v1076 = vmul.f32 %v1075, 0.5
        %v1077 = vmul.f32 %v1076, %v1076
        %v1078 = vmul.f32 %v1077, %v1077
        %v1079 = vmul.f32 %v1078, %v1078
        %v1080 = vmul.f32 %v1039, %v1057
        %v1081 = vmul.f32 %v1080, %v1044
        %v1082 = vmul.f32 %v1039, %v1065
        %v1083 = vmul.f32 %v1082, %v1044
        %v1084 = vmul.f32 %v1039, %v1072
        %v1085 = vmul.f32 %v1084, %v1044
        %v1086 = vmul.f32 %v1039, %v1079
        %v1087 = vmul.f32 %v1086, %v1044
        %v1088 = vmul.f32 %v1080, %v1049
        %v1089 = vmul.f32 %v1082, %v1049
        %v1090 = vmul.f32 %v1084, %v1049
        %v1091 = vmul.f32 %v1086, %v1049
        %s1092 = sadd.s32 %s895, 1
        %s1093 = sld [smem:[#allocation3 + %s1092]]
        %p1094 = scmp.ge.s32.totalorder %s1093, 0
        %s1095 = scalar_select %p1094, 1, 0
        %s1096 = scvt.s32.f32 %s1095
        %p1097 = scmp.gt.s32.totalorder %s1093, 0
        %s1098 = scalar_select %p1097, %s1093, 0
        %s1099 = smul.u32 %s1098, 4
        %s1100 = scalar_lea.vmem %s3, %s1099
        %v1101 = vld [vmem:[%s1100] sm:$0xf]
        %v1103 = vsel %vm908, %v1101, 0
        %1105 = vmatprep.subr.mxu0 0.0
        %1106 = vmatpush1.msra.mxu0 %v1103
        %1107 = vmatprep.subr.mxu0 0.0
        %1108 = vmatpush1.msra.mxu0 0.0
        %1109 = vmatprep.subr.mxu0 0.0
        %1110 = vmatpush1.msra.mxu0 0.0
        %1111 = vmatprep.subr.mxu0 0.0
        %1112 = vmatpush1.msra.mxu0 0.0
        %1113 = vmatprep.subr.mxu0 0.0
        %1114 = vmatpush1.msra.mxu0 0.0
        %1115 = vmatprep.subr.mxu0 0.0
        %1116 = vmatpush1.msra.mxu0 0.0
        %1117 = vmatprep.subr.mxu0 0.0
        %1118 = vmatpush1.msra.mxu0 0.0
        %1119 = vmatprep.subr.mxu0 0.0
        %1120 = vmatpush1.msra.mxu0 0.0
        %1121 = vmatprep.subr.mxu0 0.0
        %1122 = vmatpush1.msra.mxu0 0.0
        %1123 = vmatprep.subr.mxu0 0.0
        %1124 = vmatpush1.msra.mxu0 0.0
        %1125 = vmatprep.subr.mxu0 0.0
        %1126 = vmatpush1.msra.mxu0 0.0
        %1127 = vmatprep.subr.mxu0 0.0
        %1128 = vmatpush1.msra.mxu0 0.0
        %1129 = vmatprep.subr.mxu0 0.0
        %1130 = vmatpush1.msra.mxu0 0.0
        %1131 = vmatprep.subr.mxu0 0.0
        %1132 = vmatpush1.msra.mxu0 0.0
        %1133 = vmatprep.subr.mxu0 0.0
        %1134 = vmatpush1.msra.mxu0 0.0
        %1135 = vmatprep.subr.mxu0 0.0
        %1136 = vmatpush1.msra.mxu0 0.0
        %1137 = vmatprep.subr.mxu0 0.0
        %1138 = vmatpush1.msra.mxu0 0.0
        %1139 = vmatprep.subr.mxu0 0.0
        %1140 = vmatpush1.msra.mxu0 0.0
        %1141 = vmatprep.subr.mxu0 0.0
        %1142 = vmatpush1.msra.mxu0 0.0
        %1143 = vmatprep.subr.mxu0 0.0
        %1144 = vmatpush1.msra.mxu0 0.0
        %1145 = vmatprep.subr.mxu0 0.0
        %1146 = vmatpush1.msra.mxu0 0.0
        %1147 = vmatprep.subr.mxu0 0.0
        %1148 = vmatpush1.msra.mxu0 0.0
        %1149 = vmatprep.subr.mxu0 0.0
        %1150 = vmatpush1.msra.mxu0 0.0
        %1151 = vmatprep.subr.mxu0 0.0
        %1152 = vmatpush1.msra.mxu0 0.0
        %1153 = vmatprep.subr.mxu0 0.0
        %1154 = vmatpush1.msra.mxu0 0.0
        %1155 = vmatprep.subr.mxu0 0.0
        %1156 = vmatpush1.msra.mxu0 0.0
        %1157 = vmatprep.subr.mxu0 0.0
        %1158 = vmatpush1.msra.mxu0 0.0
        %1159 = vmatprep.subr.mxu0 0.0
        %1160 = vmatpush1.msra.mxu0 0.0
        %1161 = vmatprep.subr.mxu0 0.0
        %1162 = vmatpush1.msra.mxu0 0.0
        %1163 = vmatprep.subr.mxu0 0.0
        %1164 = vmatpush1.msra.mxu0 0.0
        %1165 = vmatprep.subr.mxu0 0.0
        %1166 = vmatpush1.msra.mxu0 0.0
        %1167 = vmatprep.subr.mxu0 0.0
        %1168 = vmatpush1.msra.mxu0 0.0
        %1169 = vmatprep.mubr.f32.mxu0 0.0
        %1170 = vmatmul.mubr.f32.gmra.mrb[0].mxu0 %v906
        %v1171 = vpop.f32.mrb[0].mxu0
        %v1172 = vadd.f32 0.0, %v1171
        %v1173 = vpop.f32.mrb[0].mxu0
        %1174 = vdwg.mxu0
        %1175 = vset.pattern.permute.xlu0 1
        %1176 = vperm.xlu0 %1175, %v578
        %v1177 = vpop.permute.xlu0 %1176
        %v1179 = vadd.f32 %v578, %v1177
        %v1180 = vlaneseq
        %v1181 = vshrl.u32 %v1180, 7
        %v1182 = vsub.s32 1, %v1181
        %v1183 = vrot.slane %v578, %v1182
        %v1184 = vsub.f32 %v1179, %v1183
        %v1185 = vmul.f32 %v1184, 0.5
        %1186 = vset.pattern.permute.xlu0 1
        %1187 = vperm.xlu0 %1186, %v585
        %v1188 = vpop.permute.xlu0 %1187
        %v1190 = vmul.f32 %v585, %v1188
        %v1191 = vadd.f32 %v1190, 1e-10
        %v1192 = vrcp.pop %v1191
        %v1193 = vmul.f32 %v1191, %v1192
        %v1194 = vsub.f32 2.0, %v1193
        %v1195 = vmul.f32 %v1192, %v1194
        %v1196 = vmul.f32 %v1185, 0.95
        %v1197 = vmul.f32 %v1196, %v1195
        %v1198 = vmul.f32 %v1197, %v1197
        %v1199 = vsub.f32 1.0, %v1198
        %v1200 = vmax.f32 %v1199, 0.0
        %v1201 = vrsqrt.pop %v1200
        %v1202 = vmul.f32 %v1200, %v1201
        %vm1203 = vcmp.eq.f32.partialorder %v1200, inf
        %v1204 = vsel %vm1203, %v1200, %v1202
        %vm1205 = vcmp.eq.f32.partialorder %v1200, 0.0
        %v1206 = vand.u32 %v1200, 2147483648
        %v1207 = vsel %vm1205, %v1206, %v1204
        %v1208 = vadd.f32 %v585, %v1188
        %v1209 = vmul.f32 %v1208, 0.5
        %1210 = vset.pattern.permute.xlu0 1
        %1211 = vperm.xlu0 %1210, %v592
        %v1212 = vpop.permute.xlu0 %1211
        %v1214 = vmul.f32 %v670, %v1212
        %v1215 = vlaneseq
        %v1216 = vshrl.u32 %v1215, 7
        %v1217 = vsub.s32 1, %v1216
        %v1218 = vrot.slane %v592, %v1217
        %v1219 = vmul.f32 %v1214, %v1218
        %v1220 = vstv %s1096
        %v1221 = vmul.f32 %v1219, %v1220
        %1222 = vset.pattern.permute.xlu0 1
        %1223 = vperm.xlu0 %1222, %v714
        %v1224 = vpop.permute.xlu0 %1223
        %v1226 = vmul.f32 %v714, %v1224
        %v1227 = vmul.f32 %v1226, 2.0
        %v1228 = vmul.f32 %v1227, %v1221
        %v1229 = vsub.f32 %v1209, 0.9
        %v1230 = vmul.f32 %v1229, %v1229
        %v1231 = vmul.f32 %v1230, -8.0
        %v1232 = vmul.f32 %v1231, 1.442695
        %v1233 = vpow.pop %v1232
        %v1234 = vsub.f32 %v1209, 2.2
        %v1235 = vmul.f32 %v1234, %v1234
        %v1236 = vmul.f32 %v1235, -8.0
        %v1237 = vmul.f32 %v1236, 1.442695
        %v1238 = vpow.pop %v1237
        %v1239 = vmul.f32 %v1197, 0.9238795
        %v1240 = vadd.f32 %v1239, 1.0
        %v1241 = vmul.f32 %v1207, 0.38268343
        %v1242 = vadd.f32 %v1240, %v1241
        %v1243 = vmul.f32 %v1242, 0.5
        %v1244 = vmul.f32 %v1243, %v1243
        %v1245 = vmul.f32 %v1244, %v1244
        %v1246 = vmul.f32 %v1245, %v1245
        %v1247 = vmul.f32 %v1197, 0.38268343
        %v1248 = vadd.f32 %v1247, 1.0
        %v1249 = vmul.f32 %v1207, 0.9238795
        %v1250 = vadd.f32 %v1248, %v1249
        %v1251 = vmul.f32 %v1250, 0.5
        %v1252 = vmul.f32 %v1251, %v1251
        %v1253 = vmul.f32 %v1252, %v1252
        %v1254 = vmul.f32 %v1253, %v1253
        %v1255 = vmul.f32 %v1197, -0.38268343
        %v1256 = vadd.f32 %v1255, 1.0
        %v1257 = vadd.f32 %v1256, %v1249
        %v1258 = vmul.f32 %v1257, 0.5
        %v1259 = vmul.f32 %v1258, %v1258
        %v1260 = vmul.f32 %v1259, %v1259
        %v1261 = vmul.f32 %v1260, %v1260
        %v1262 = vmul.f32 %v1197, -0.9238795
        %v1263 = vadd.f32 %v1262, 1.0
        %v1264 = vadd.f32 %v1263, %v1241
        %v1265 = vmul.f32 %v1264, 0.5
        %v1266 = vmul.f32 %v1265, %v1265
        %v1267 = vmul.f32 %v1266, %v1266
        %v1268 = vmul.f32 %v1267, %v1267
        %v1269 = vmul.f32 %v1228, %v1246
        %v1270 = vmul.f32 %v1269, %v1233
        %v1271 = vmul.f32 %v1228, %v1254
        %v1272 = vmul.f32 %v1271, %v1233
        %v1273 = vmul.f32 %v1228, %v1261
        %v1274 = vmul.f32 %v1273, %v1233
        %v1275 = vmul.f32 %v1228, %v1268
        %v1276 = vmul.f32 %v1275, %v1233
        %v1277 = vmul.f32 %v1269, %v1238
        %v1278 = vmul.f32 %v1271, %v1238
        %v1279 = vmul.f32 %v1273, %v1238
        %v1280 = vmul.f32 %v1275, %v1238
        %v1282 = vsel %vm765, %v1270, 0
        %v1285 = vsel %vm765, %v1272, 0
        %v1288 = vsel %vm765, %v1274, 0
        %v1291 = vsel %vm765, %v1276, 0
        %v1294 = vsel %vm765, %v1277, 0
        %v1297 = vsel %vm765, %v1278, 0
        %v1300 = vsel %vm765, %v1279, 0
        %v1303 = vsel %vm765, %v1280, 0
        %1305 = vmatprep.subr.mxu0 0.0
        %1306 = vmatpush1.msra.mxu0 %v1172
        %1307 = vmatprep.subr.mxu0 0.0
        %1308 = vmatpush1.msra.mxu0 0.0
        %1309 = vmatprep.subr.mxu0 0.0
        %1310 = vmatpush1.msra.mxu0 0.0
        %1311 = vmatprep.subr.mxu0 0.0
        %1312 = vmatpush1.msra.mxu0 0.0
        %1313 = vmatprep.subr.mxu0 0.0
        %1314 = vmatpush1.msra.mxu0 0.0
        %1315 = vmatprep.subr.mxu0 0.0
        %1316 = vmatpush1.msra.mxu0 0.0
        %1317 = vmatprep.subr.mxu0 0.0
        %1318 = vmatpush1.msra.mxu0 0.0
        %1319 = vmatprep.subr.mxu0 0.0
        %1320 = vmatpush1.msra.mxu0 0.0
        %1321 = vmatprep.subr.mxu0 0.0
        %1322 = vmatpush1.msra.mxu0 0.0
        %1323 = vmatprep.subr.mxu0 0.0
        %1324 = vmatpush1.msra.mxu0 0.0
        %1325 = vmatprep.subr.mxu0 0.0
        %1326 = vmatpush1.msra.mxu0 0.0
        %1327 = vmatprep.subr.mxu0 0.0
        %1328 = vmatpush1.msra.mxu0 0.0
        %1329 = vmatprep.subr.mxu0 0.0
        %1330 = vmatpush1.msra.mxu0 0.0
        %1331 = vmatprep.subr.mxu0 0.0
        %1332 = vmatpush1.msra.mxu0 0.0
        %1333 = vmatprep.subr.mxu0 0.0
        %1334 = vmatpush1.msra.mxu0 0.0
        %1335 = vmatprep.subr.mxu0 0.0
        %1336 = vmatpush1.msra.mxu0 0.0
        %1337 = vmatprep.subr.mxu0 0.0
        %1338 = vmatpush1.msra.mxu0 0.0
        %1339 = vmatprep.subr.mxu0 0.0
        %1340 = vmatpush1.msra.mxu0 0.0
        %1341 = vmatprep.subr.mxu0 0.0
        %1342 = vmatpush1.msra.mxu0 0.0
        %1343 = vmatprep.subr.mxu0 0.0
        %1344 = vmatpush1.msra.mxu0 0.0
        %1345 = vmatprep.subr.mxu0 0.0
        %1346 = vmatpush1.msra.mxu0 0.0
        %1347 = vmatprep.subr.mxu0 0.0
        %1348 = vmatpush1.msra.mxu0 0.0
        %1349 = vmatprep.subr.mxu0 0.0
        %1350 = vmatpush1.msra.mxu0 0.0
        %1351 = vmatprep.subr.mxu0 0.0
        %1352 = vmatpush1.msra.mxu0 0.0
        %1353 = vmatprep.subr.mxu0 0.0
        %1354 = vmatpush1.msra.mxu0 0.0
        %1355 = vmatprep.subr.mxu0 0.0
        %1356 = vmatpush1.msra.mxu0 0.0
        %1357 = vmatprep.subr.mxu0 0.0
        %1358 = vmatpush1.msra.mxu0 0.0
        %1359 = vmatprep.subr.mxu0 0.0
        %1360 = vmatpush1.msra.mxu0 0.0
        %1361 = vmatprep.subr.mxu0 0.0
        %1362 = vmatpush1.msra.mxu0 0.0
        %1363 = vmatprep.subr.mxu0 0.0
        %1364 = vmatpush1.msra.mxu0 0.0
        %1365 = vmatprep.subr.mxu0 0.0
        %1366 = vmatpush1.msra.mxu0 0.0
        %1367 = vmatprep.subr.mxu0 0.0
        %1368 = vmatpush1.msra.mxu0 0.0
        %1369 = vmatprep.mubr.f32.mxu0 0.0
        %1370 = vmatmul.mubr.f32.gmra.mrb[0].mxu0 %v1282
        %v1371 = vpop.f32.mrb[0].mxu0
        %v1372 = vadd.f32 0.0, %v1371
        %v1373 = vpop.f32.mrb[0].mxu0
        %1374 = vmatprep.mubr.f32.mxu0 0.0
        %1375 = vmatmul.mubr.f32.gmra.mrb[0].mxu0 %v1285
        %v1376 = vpop.f32.mrb[0].mxu0
        %v1377 = vadd.f32 0.0, %v1376
        %v1378 = vpop.f32.mrb[0].mxu0
        %1379 = vmatprep.mubr.f32.mxu0 0.0
        %1380 = vmatmul.mubr.f32.gmra.mrb[0].mxu0 %v1288
        %v1381 = vpop.f32.mrb[0].mxu0
        %v1382 = vadd.f32 0.0, %v1381
        %v1383 = vpop.f32.mrb[0].mxu0
        %1384 = vmatprep.mubr.f32.mxu0 0.0
        %1385 = vmatmul.mubr.f32.gmra.mrb[0].mxu0 %v1291
        %v1386 = vpop.f32.mrb[0].mxu0
        %v1387 = vadd.f32 0.0, %v1386
        %v1388 = vpop.f32.mrb[0].mxu0
        %1389 = vmatprep.mubr.f32.mxu0 0.0
        %1390 = vmatmul.mubr.f32.gmra.mrb[0].mxu0 %v1294
        %v1391 = vpop.f32.mrb[0].mxu0
        %v1392 = vadd.f32 0.0, %v1391
        %v1393 = vpop.f32.mrb[0].mxu0
        %1394 = vmatprep.mubr.f32.mxu0 0.0
        %1395 = vmatmul.mubr.f32.gmra.mrb[0].mxu0 %v1297
        %v1396 = vpop.f32.mrb[0].mxu0
        %v1397 = vadd.f32 0.0, %v1396
        %v1398 = vpop.f32.mrb[0].mxu0
        %1399 = vmatprep.mubr.f32.mxu0 0.0
        %1400 = vmatmul.mubr.f32.gmra.mrb[0].mxu0 %v1300
        %v1401 = vpop.f32.mrb[0].mxu0
        %v1402 = vadd.f32 0.0, %v1401
        %v1403 = vpop.f32.mrb[0].mxu0
        %1404 = vmatprep.mubr.f32.mxu0 0.0
        %1405 = vmatmul.mubr.f32.gmra.mrb[0].mxu0 %v1303
        %v1406 = vpop.f32.mrb[0].mxu0
        %v1407 = vadd.f32 0.0, %v1406
        %v1408 = vpop.f32.mrb[0].mxu0
        %1409 = vdwg.mxu0
        %v1411 = vsel %vm765, %v1081, 0
        %v1414 = vsel %vm765, %v1083, 0
        %v1417 = vsel %vm765, %v1085, 0
        %v1420 = vsel %vm765, %v1087, 0
        %v1423 = vsel %vm765, %v1088, 0
        %v1426 = vsel %vm765, %v1089, 0
        %v1429 = vsel %vm765, %v1090, 0
        %v1432 = vsel %vm765, %v1091, 0
        %1434 = vmatprep.subr.mxu0 0.0
        %1435 = vmatpush1.msra.mxu0 %v979
        %1436 = vmatprep.subr.mxu0 0.0
        %1437 = vmatpush1.msra.mxu0 0.0
        %1438 = vmatprep.subr.mxu0 0.0
        %1439 = vmatpush1.msra.mxu0 0.0
        %1440 = vmatprep.subr.mxu0 0.0
        %1441 = vmatpush1.msra.mxu0 0.0
        %1442 = vmatprep.subr.mxu0 0.0
        %1443 = vmatpush1.msra.mxu0 0.0
        %1444 = vmatprep.subr.mxu0 0.0
        %1445 = vmatpush1.msra.mxu0 0.0
        %1446 = vmatprep.subr.mxu0 0.0
        %1447 = vmatpush1.msra.mxu0 0.0
        %1448 = vmatprep.subr.mxu0 0.0
        %1449 = vmatpush1.msra.mxu0 0.0
        %1450 = vmatprep.subr.mxu0 0.0
        %1451 = vmatpush1.msra.mxu0 0.0
        %1452 = vmatprep.subr.mxu0 0.0
        %1453 = vmatpush1.msra.mxu0 0.0
        %1454 = vmatprep.subr.mxu0 0.0
        %1455 = vmatpush1.msra.mxu0 0.0
        %1456 = vmatprep.subr.mxu0 0.0
        %1457 = vmatpush1.msra.mxu0 0.0
        %1458 = vmatprep.subr.mxu0 0.0
        %1459 = vmatpush1.msra.mxu0 0.0
        %1460 = vmatprep.subr.mxu0 0.0
        %1461 = vmatpush1.msra.mxu0 0.0
        %1462 = vmatprep.subr.mxu0 0.0
        %1463 = vmatpush1.msra.mxu0 0.0
        %1464 = vmatprep.subr.mxu0 0.0
        %1465 = vmatpush1.msra.mxu0 0.0
        %1466 = vmatprep.subr.mxu0 0.0
        %1467 = vmatpush1.msra.mxu0 0.0
        %1468 = vmatprep.subr.mxu0 0.0
        %1469 = vmatpush1.msra.mxu0 0.0
        %1470 = vmatprep.subr.mxu0 0.0
        %1471 = vmatpush1.msra.mxu0 0.0
        %1472 = vmatprep.subr.mxu0 0.0
        %1473 = vmatpush1.msra.mxu0 0.0
        %1474 = vmatprep.subr.mxu0 0.0
        %1475 = vmatpush1.msra.mxu0 0.0
        %1476 = vmatprep.subr.mxu0 0.0
        %1477 = vmatpush1.msra.mxu0 0.0
        %1478 = vmatprep.subr.mxu0 0.0
        %1479 = vmatpush1.msra.mxu0 0.0
        %1480 = vmatprep.subr.mxu0 0.0
        %1481 = vmatpush1.msra.mxu0 0.0
        %1482 = vmatprep.subr.mxu0 0.0
        %1483 = vmatpush1.msra.mxu0 0.0
        %1484 = vmatprep.subr.mxu0 0.0
        %1485 = vmatpush1.msra.mxu0 0.0
        %1486 = vmatprep.subr.mxu0 0.0
        %1487 = vmatpush1.msra.mxu0 0.0
        %1488 = vmatprep.subr.mxu0 0.0
        %1489 = vmatpush1.msra.mxu0 0.0
        %1490 = vmatprep.subr.mxu0 0.0
        %1491 = vmatpush1.msra.mxu0 0.0
        %1492 = vmatprep.subr.mxu0 0.0
        %1493 = vmatpush1.msra.mxu0 0.0
        %1494 = vmatprep.subr.mxu0 0.0
        %1495 = vmatpush1.msra.mxu0 0.0
        %1496 = vmatprep.subr.mxu0 0.0
        %1497 = vmatpush1.msra.mxu0 0.0
        %1498 = vmatprep.mubr.f32.mxu0 0.0
        %1499 = vmatmul.mubr.f32.gmra.mrb[0].mxu0 %v1411
        %v1500 = vpop.f32.mrb[0].mxu0
        %v1501 = vadd.f32 %v1372, %v1500
        %v1502 = vpop.f32.mrb[0].mxu0
        %1503 = vmatprep.mubr.f32.mxu0 0.0
        %1504 = vmatmul.mubr.f32.gmra.mrb[0].mxu0 %v1414
        %v1505 = vpop.f32.mrb[0].mxu0
        %v1506 = vadd.f32 %v1377, %v1505
        %v1507 = vpop.f32.mrb[0].mxu0
        %1508 = vmatprep.mubr.f32.mxu0 0.0
        %1509 = vmatmul.mubr.f32.gmra.mrb[0].mxu0 %v1417
        %v1510 = vpop.f32.mrb[0].mxu0
        %v1511 = vadd.f32 %v1382, %v1510
        %v1512 = vpop.f32.mrb[0].mxu0
        %1513 = vmatprep.mubr.f32.mxu0 0.0
        %1514 = vmatmul.mubr.f32.gmra.mrb[0].mxu0 %v1420
        %v1515 = vpop.f32.mrb[0].mxu0
        %v1516 = vadd.f32 %v1387, %v1515
        %v1517 = vpop.f32.mrb[0].mxu0
        %1518 = vmatprep.mubr.f32.mxu0 0.0
        %1519 = vmatmul.mubr.f32.gmra.mrb[0].mxu0 %v1423
        %v1520 = vpop.f32.mrb[0].mxu0
        %v1521 = vadd.f32 %v1392, %v1520
        %v1522 = vpop.f32.mrb[0].mxu0
        %1523 = vmatprep.mubr.f32.mxu0 0.0
        %1524 = vmatmul.mubr.f32.gmra.mrb[0].mxu0 %v1426
        %v1525 = vpop.f32.mrb[0].mxu0
        %v1526 = vadd.f32 %v1397, %v1525
        %v1527 = vpop.f32.mrb[0].mxu0
        %1528 = vmatprep.mubr.f32.mxu0 0.0
        %1529 = vmatmul.mubr.f32.gmra.mrb[0].mxu0 %v1429
        %v1530 = vpop.f32.mrb[0].mxu0
        %v1531 = vadd.f32 %v1402, %v1530
        %v1532 = vpop.f32.mrb[0].mxu0
        %1533 = vmatprep.mubr.f32.mxu0 0.0
        %1534 = vmatmul.mubr.f32.gmra.mrb[0].mxu0 %v1432
        %v1535 = vpop.f32.mrb[0].mxu0
        %v1536 = vadd.f32 %v1407, %v1535
        %v1537 = vpop.f32.mrb[0].mxu0
        %1538 = vdwg.mxu0
        %s1539 = sadd.s32 %s895, 2
        %s1540 = sld [smem:[#allocation3 + %s1539]]
        %p1541 = scmp.ge.s32.totalorder %s1540, 0
        %s1542 = scalar_select %p1541, 1, 0
        %s1543 = scvt.s32.f32 %s1542
        %p1544 = scmp.gt.s32.totalorder %s1540, 0
        %s1545 = scalar_select %p1544, %s1540, 0
        %s1546 = smul.u32 %s1545, 4
        %s1547 = scalar_lea.vmem %s3, %s1546
        %v1548 = vld [vmem:[%s1547] sm:$0xf]
        %v1550 = vsel %vm908, %v1548, 0
        %1552 = vmatprep.subr.mxu0 0.0
        %1553 = vmatpush1.msra.mxu0 %v1550
        %1554 = vmatprep.subr.mxu0 0.0
        %1555 = vmatpush1.msra.mxu0 0.0
        %1556 = vmatprep.subr.mxu0 0.0
        %1557 = vmatpush1.msra.mxu0 0.0
        %1558 = vmatprep.subr.mxu0 0.0
        %1559 = vmatpush1.msra.mxu0 0.0
        %1560 = vmatprep.subr.mxu0 0.0
        %1561 = vmatpush1.msra.mxu0 0.0
        %1562 = vmatprep.subr.mxu0 0.0
        %1563 = vmatpush1.msra.mxu0 0.0
        %1564 = vmatprep.subr.mxu0 0.0
        %1565 = vmatpush1.msra.mxu0 0.0
        %1566 = vmatprep.subr.mxu0 0.0
        %1567 = vmatpush1.msra.mxu0 0.0
        %1568 = vmatprep.subr.mxu0 0.0
        %1569 = vmatpush1.msra.mxu0 0.0
        %1570 = vmatprep.subr.mxu0 0.0
        %1571 = vmatpush1.msra.mxu0 0.0
        %1572 = vmatprep.subr.mxu0 0.0
        %1573 = vmatpush1.msra.mxu0 0.0
        %1574 = vmatprep.subr.mxu0 0.0
        %1575 = vmatpush1.msra.mxu0 0.0
        %1576 = vmatprep.subr.mxu0 0.0
        %1577 = vmatpush1.msra.mxu0 0.0
        %1578 = vmatprep.subr.mxu0 0.0
        %1579 = vmatpush1.msra.mxu0 0.0
        %1580 = vmatprep.subr.mxu0 0.0
        %1581 = vmatpush1.msra.mxu0 0.0
        %1582 = vmatprep.subr.mxu0 0.0
        %1583 = vmatpush1.msra.mxu0 0.0
        %1584 = vmatprep.subr.mxu0 0.0
        %1585 = vmatpush1.msra.mxu0 0.0
        %1586 = vmatprep.subr.mxu0 0.0
        %1587 = vmatpush1.msra.mxu0 0.0
        %1588 = vmatprep.subr.mxu0 0.0
        %1589 = vmatpush1.msra.mxu0 0.0
        %1590 = vmatprep.subr.mxu0 0.0
        %1591 = vmatpush1.msra.mxu0 0.0
        %1592 = vmatprep.subr.mxu0 0.0
        %1593 = vmatpush1.msra.mxu0 0.0
        %1594 = vmatprep.subr.mxu0 0.0
        %1595 = vmatpush1.msra.mxu0 0.0
        %1596 = vmatprep.subr.mxu0 0.0
        %1597 = vmatpush1.msra.mxu0 0.0
        %1598 = vmatprep.subr.mxu0 0.0
        %1599 = vmatpush1.msra.mxu0 0.0
        %1600 = vmatprep.subr.mxu0 0.0
        %1601 = vmatpush1.msra.mxu0 0.0
        %1602 = vmatprep.subr.mxu0 0.0
        %1603 = vmatpush1.msra.mxu0 0.0
        %1604 = vmatprep.subr.mxu0 0.0
        %1605 = vmatpush1.msra.mxu0 0.0
        %1606 = vmatprep.subr.mxu0 0.0
        %1607 = vmatpush1.msra.mxu0 0.0
        %1608 = vmatprep.subr.mxu0 0.0
        %1609 = vmatpush1.msra.mxu0 0.0
        %1610 = vmatprep.subr.mxu0 0.0
        %1611 = vmatpush1.msra.mxu0 0.0
        %1612 = vmatprep.subr.mxu0 0.0
        %1613 = vmatpush1.msra.mxu0 0.0
        %1614 = vmatprep.subr.mxu0 0.0
        %1615 = vmatpush1.msra.mxu0 0.0
        %1616 = vmatprep.mubr.f32.mxu0 0.0
        %1617 = vmatmul.mubr.f32.gmra.mrb[0].mxu0 %v906
        %v1618 = vpop.f32.mrb[0].mxu0
        %v1619 = vadd.f32 0.0, %v1618
        %v1620 = vpop.f32.mrb[0].mxu0
        %1621 = vdwg.mxu0
        %1622 = vset.pattern.permute.xlu0 2
        %1623 = vperm.xlu0 %1622, %v578
        %v1624 = vpop.permute.xlu0 %1623
        %v1626 = vadd.f32 %v578, %v1624
        %v1627 = vlaneseq
        %v1628 = vshrl.u32 %v1627, 7
        %v1629 = vsub.s32 2, %v1628
        %v1630 = vrot.slane %v578, %v1629
        %v1631 = vsub.f32 %v1626, %v1630
        %v1632 = vmul.f32 %v1631, 0.5
        %1633 = vset.pattern.permute.xlu0 2
        %1634 = vperm.xlu0 %1633, %v585
        %v1635 = vpop.permute.xlu0 %1634
        %v1637 = vmul.f32 %v585, %v1635
        %v1638 = vadd.f32 %v1637, 1e-10
        %v1639 = vrcp.pop %v1638
        %v1640 = vmul.f32 %v1638, %v1639
        %v1641 = vsub.f32 2.0, %v1640
        %v1642 = vmul.f32 %v1639, %v1641
        %v1643 = vmul.f32 %v1632, 0.95
        %v1644 = vmul.f32 %v1643, %v1642
        %v1645 = vmul.f32 %v1644, %v1644
        %v1646 = vsub.f32 1.0, %v1645
        %v1647 = vmax.f32 %v1646, 0.0
        %v1648 = vrsqrt.pop %v1647
        %v1649 = vmul.f32 %v1647, %v1648
        %vm1650 = vcmp.eq.f32.partialorder %v1647, inf
        %v1651 = vsel %vm1650, %v1647, %v1649
        %vm1652 = vcmp.eq.f32.partialorder %v1647, 0.0
        %v1653 = vand.u32 %v1647, 2147483648
        %v1654 = vsel %vm1652, %v1653, %v1651
        %v1655 = vadd.f32 %v585, %v1635
        %v1656 = vmul.f32 %v1655, 0.5
        %1657 = vset.pattern.permute.xlu0 2
        %1658 = vperm.xlu0 %1657, %v592
        %v1659 = vpop.permute.xlu0 %1658
        %v1661 = vmul.f32 %v670, %v1659
        %v1662 = vlaneseq
        %v1663 = vshrl.u32 %v1662, 7
        %v1664 = vsub.s32 2, %v1663
        %v1665 = vrot.slane %v592, %v1664
        %v1666 = vmul.f32 %v1661, %v1665
        %v1667 = vstv %s1543
        %v1668 = vmul.f32 %v1666, %v1667
        %1669 = vset.pattern.permute.xlu0 2
        %1670 = vperm.xlu0 %1669, %v714
        %v1671 = vpop.permute.xlu0 %1670
        %v1673 = vmul.f32 %v714, %v1671
        %v1674 = vmul.f32 %v1673, 2.0
        %v1675 = vmul.f32 %v1674, %v1668
        %v1676 = vsub.f32 %v1656, 0.9
        %v1677 = vmul.f32 %v1676, %v1676
        %v1678 = vmul.f32 %v1677, -8.0
        %v1679 = vmul.f32 %v1678, 1.442695
        %v1680 = vpow.pop %v1679
        %v1681 = vsub.f32 %v1656, 2.2
        %v1682 = vmul.f32 %v1681, %v1681
        %v1683 = vmul.f32 %v1682, -8.0
        %v1684 = vmul.f32 %v1683, 1.442695
        %v1685 = vpow.pop %v1684
        %v1686 = vmul.f32 %v1644, 0.9238795
        %v1687 = vadd.f32 %v1686, 1.0
        %v1688 = vmul.f32 %v1654, 0.38268343
        %v1689 = vadd.f32 %v1687, %v1688
        %v1690 = vmul.f32 %v1689, 0.5
        %v1691 = vmul.f32 %v1690, %v1690
        %v1692 = vmul.f32 %v1691, %v1691
        %v1693 = vmul.f32 %v1692, %v1692
        %v1694 = vmul.f32 %v1644, 0.38268343
        %v1695 = vadd.f32 %v1694, 1.0
        %v1696 = vmul.f32 %v1654, 0.9238795
        %v1697 = vadd.f32 %v1695, %v1696
        %v1698 = vmul.f32 %v1697, 0.5
        %v1699 = vmul.f32 %v1698, %v1698
        %v1700 = vmul.f32 %v1699, %v1699
        %v1701 = vmul.f32 %v1700, %v1700
        %v1702 = vmul.f32 %v1644, -0.38268343
        %v1703 = vadd.f32 %v1702, 1.0
        %v1704 = vadd.f32 %v1703, %v1696
        %v1705 = vmul.f32 %v1704, 0.5
        %v1706 = vmul.f32 %v1705, %v1705
        %v1707 = vmul.f32 %v1706, %v1706
        %v1708 = vmul.f32 %v1707, %v1707
        %v1709 = vmul.f32 %v1644, -0.9238795
        %v1710 = vadd.f32 %v1709, 1.0
        %v1711 = vadd.f32 %v1710, %v1688
        %v1712 = vmul.f32 %v1711, 0.5
        %v1713 = vmul.f32 %v1712, %v1712
        %v1714 = vmul.f32 %v1713, %v1713
        %v1715 = vmul.f32 %v1714, %v1714
        %v1716 = vmul.f32 %v1675, %v1693
        %v1717 = vmul.f32 %v1716, %v1680
        %v1718 = vmul.f32 %v1675, %v1701
        %v1719 = vmul.f32 %v1718, %v1680
        %v1720 = vmul.f32 %v1675, %v1708
        %v1721 = vmul.f32 %v1720, %v1680
        %v1722 = vmul.f32 %v1675, %v1715
        %v1723 = vmul.f32 %v1722, %v1680
        %v1724 = vmul.f32 %v1716, %v1685
        %v1725 = vmul.f32 %v1718, %v1685
        %v1726 = vmul.f32 %v1720, %v1685
        %v1727 = vmul.f32 %v1722, %v1685
        %v1729 = vsel %vm765, %v1717, 0
        %v1732 = vsel %vm765, %v1719, 0
        %v1735 = vsel %vm765, %v1721, 0
        %v1738 = vsel %vm765, %v1723, 0
        %v1741 = vsel %vm765, %v1724, 0
        %v1744 = vsel %vm765, %v1725, 0
        %v1747 = vsel %vm765, %v1726, 0
        %v1750 = vsel %vm765, %v1727, 0
        %1752 = vmatprep.subr.mxu0 0.0
        %1753 = vmatpush1.msra.mxu0 %v1619
        %1754 = vmatprep.subr.mxu0 0.0
        %1755 = vmatpush1.msra.mxu0 0.0
        %1756 = vmatprep.subr.mxu0 0.0
        %1757 = vmatpush1.msra.mxu0 0.0
        %1758 = vmatprep.subr.mxu0 0.0
        %1759 = vmatpush1.msra.mxu0 0.0
        %1760 = vmatprep.subr.mxu0 0.0
        %1761 = vmatpush1.msra.mxu0 0.0
        %1762 = vmatprep.subr.mxu0 0.0
        %1763 = vmatpush1.msra.mxu0 0.0
        %1764 = vmatprep.subr.mxu0 0.0
        %1765 = vmatpush1.msra.mxu0 0.0
        %1766 = vmatprep.subr.mxu0 0.0
        %1767 = vmatpush1.msra.mxu0 0.0
        %1768 = vmatprep.subr.mxu0 0.0
        %1769 = vmatpush1.msra.mxu0 0.0
        %1770 = vmatprep.subr.mxu0 0.0
        %1771 = vmatpush1.msra.mxu0 0.0
        %1772 = vmatprep.subr.mxu0 0.0
        %1773 = vmatpush1.msra.mxu0 0.0
        %1774 = vmatprep.subr.mxu0 0.0
        %1775 = vmatpush1.msra.mxu0 0.0
        %1776 = vmatprep.subr.mxu0 0.0
        %1777 = vmatpush1.msra.mxu0 0.0
        %1778 = vmatprep.subr.mxu0 0.0
        %1779 = vmatpush1.msra.mxu0 0.0
        %1780 = vmatprep.subr.mxu0 0.0
        %1781 = vmatpush1.msra.mxu0 0.0
        %1782 = vmatprep.subr.mxu0 0.0
        %1783 = vmatpush1.msra.mxu0 0.0
        %1784 = vmatprep.subr.mxu0 0.0
        %1785 = vmatpush1.msra.mxu0 0.0
        %1786 = vmatprep.subr.mxu0 0.0
        %1787 = vmatpush1.msra.mxu0 0.0
        %1788 = vmatprep.subr.mxu0 0.0
        %1789 = vmatpush1.msra.mxu0 0.0
        %1790 = vmatprep.subr.mxu0 0.0
        %1791 = vmatpush1.msra.mxu0 0.0
        %1792 = vmatprep.subr.mxu0 0.0
        %1793 = vmatpush1.msra.mxu0 0.0
        %1794 = vmatprep.subr.mxu0 0.0
        %1795 = vmatpush1.msra.mxu0 0.0
        %1796 = vmatprep.subr.mxu0 0.0
        %1797 = vmatpush1.msra.mxu0 0.0
        %1798 = vmatprep.subr.mxu0 0.0
        %1799 = vmatpush1.msra.mxu0 0.0
        %1800 = vmatprep.subr.mxu0 0.0
        %1801 = vmatpush1.msra.mxu0 0.0
        %1802 = vmatprep.subr.mxu0 0.0
        %1803 = vmatpush1.msra.mxu0 0.0
        %1804 = vmatprep.subr.mxu0 0.0
        %1805 = vmatpush1.msra.mxu0 0.0
        %1806 = vmatprep.subr.mxu0 0.0
        %1807 = vmatpush1.msra.mxu0 0.0
        %1808 = vmatprep.subr.mxu0 0.0
        %1809 = vmatpush1.msra.mxu0 0.0
        %1810 = vmatprep.subr.mxu0 0.0
        %1811 = vmatpush1.msra.mxu0 0.0
        %1812 = vmatprep.subr.mxu0 0.0
        %1813 = vmatpush1.msra.mxu0 0.0
        %1814 = vmatprep.subr.mxu0 0.0
        %1815 = vmatpush1.msra.mxu0 0.0
        %1816 = vmatprep.mubr.f32.mxu0 0.0
        %1817 = vmatmul.mubr.f32.gmra.mrb[0].mxu0 %v1729
        %v1818 = vpop.f32.mrb[0].mxu0
        %v1819 = vadd.f32 0.0, %v1818
        %v1820 = vpop.f32.mrb[0].mxu0
        %1821 = vmatprep.mubr.f32.mxu0 0.0
        %1822 = vmatmul.mubr.f32.gmra.mrb[0].mxu0 %v1732
        %v1823 = vpop.f32.mrb[0].mxu0
        %v1824 = vadd.f32 0.0, %v1823
        %v1825 = vpop.f32.mrb[0].mxu0
        %1826 = vmatprep.mubr.f32.mxu0 0.0
        %1827 = vmatmul.mubr.f32.gmra.mrb[0].mxu0 %v1735
        %v1828 = vpop.f32.mrb[0].mxu0
        %v1829 = vadd.f32 0.0, %v1828
        %v1830 = vpop.f32.mrb[0].mxu0
        %1831 = vmatprep.mubr.f32.mxu0 0.0
        %1832 = vmatmul.mubr.f32.gmra.mrb[0].mxu0 %v1738
        %v1833 = vpop.f32.mrb[0].mxu0
        %v1834 = vadd.f32 0.0, %v1833
        %v1835 = vpop.f32.mrb[0].mxu0
        %1836 = vmatprep.mubr.f32.mxu0 0.0
        %1837 = vmatmul.mubr.f32.gmra.mrb[0].mxu0 %v1741
        %v1838 = vpop.f32.mrb[0].mxu0
        %v1839 = vadd.f32 0.0, %v1838
        %v1840 = vpop.f32.mrb[0].mxu0
        %1841 = vmatprep.mubr.f32.mxu0 0.0
        %1842 = vmatmul.mubr.f32.gmra.mrb[0].mxu0 %v1744
        %v1843 = vpop.f32.mrb[0].mxu0
        %v1844 = vadd.f32 0.0, %v1843
        %v1845 = vpop.f32.mrb[0].mxu0
        %1846 = vmatprep.mubr.f32.mxu0 0.0
        %1847 = vmatmul.mubr.f32.gmra.mrb[0].mxu0 %v1747
        %v1848 = vpop.f32.mrb[0].mxu0
        %v1849 = vadd.f32 0.0, %v1848
        %v1850 = vpop.f32.mrb[0].mxu0
        %1851 = vmatprep.mubr.f32.mxu0 0.0
        %1852 = vmatmul.mubr.f32.gmra.mrb[0].mxu0 %v1750
        %v1853 = vpop.f32.mrb[0].mxu0
        %v1854 = vadd.f32 0.0, %v1853
        %v1855 = vpop.f32.mrb[0].mxu0
        %1856 = vdwg.mxu0
        %v1857 = vadd.f32 %v1501, %v1819
        %v1858 = vadd.f32 %v1506, %v1824
        %v1859 = vadd.f32 %v1511, %v1829
        %v1860 = vadd.f32 %v1516, %v1834
        %v1861 = vadd.f32 %v1521, %v1839
        %v1862 = vadd.f32 %v1526, %v1844
        %v1863 = vadd.f32 %v1531, %v1849
        %v1864 = vadd.f32 %v1536, %v1854
        %s1865 = sadd.s32 %s895, 3
        %s1866 = sld [smem:[#allocation3 + %s1865]]
        %p1867 = scmp.ge.s32.totalorder %s1866, 0
        %s1868 = scalar_select %p1867, 1, 0
        %s1869 = scvt.s32.f32 %s1868
        %p1870 = scmp.gt.s32.totalorder %s1866, 0
        %s1871 = scalar_select %p1870, %s1866, 0
        %s1872 = smul.u32 %s1871, 4
        %s1873 = scalar_lea.vmem %s3, %s1872
        %v1874 = vld [vmem:[%s1873] sm:$0xf]
        %v1876 = vsel %vm908, %v1874, 0
        %1878 = vmatprep.subr.mxu0 0.0
        %1879 = vmatpush1.msra.mxu0 %v1876
        %1880 = vmatprep.subr.mxu0 0.0
        %1881 = vmatpush1.msra.mxu0 0.0
        %1882 = vmatprep.subr.mxu0 0.0
        %1883 = vmatpush1.msra.mxu0 0.0
        %1884 = vmatprep.subr.mxu0 0.0
        %1885 = vmatpush1.msra.mxu0 0.0
        %1886 = vmatprep.subr.mxu0 0.0
        %1887 = vmatpush1.msra.mxu0 0.0
        %1888 = vmatprep.subr.mxu0 0.0
        %1889 = vmatpush1.msra.mxu0 0.0
        %1890 = vmatprep.subr.mxu0 0.0
        %1891 = vmatpush1.msra.mxu0 0.0
        %1892 = vmatprep.subr.mxu0 0.0
        %1893 = vmatpush1.msra.mxu0 0.0
        %1894 = vmatprep.subr.mxu0 0.0
        %1895 = vmatpush1.msra.mxu0 0.0
        %1896 = vmatprep.subr.mxu0 0.0
        %1897 = vmatpush1.msra.mxu0 0.0
        %1898 = vmatprep.subr.mxu0 0.0
        %1899 = vmatpush1.msra.mxu0 0.0
        %1900 = vmatprep.subr.mxu0 0.0
        %1901 = vmatpush1.msra.mxu0 0.0
        %1902 = vmatprep.subr.mxu0 0.0
        %1903 = vmatpush1.msra.mxu0 0.0
        %1904 = vmatprep.subr.mxu0 0.0
        %1905 = vmatpush1.msra.mxu0 0.0
        %1906 = vmatprep.subr.mxu0 0.0
        %1907 = vmatpush1.msra.mxu0 0.0
        %1908 = vmatprep.subr.mxu0 0.0
        %1909 = vmatpush1.msra.mxu0 0.0
        %1910 = vmatprep.subr.mxu0 0.0
        %1911 = vmatpush1.msra.mxu0 0.0
        %1912 = vmatprep.subr.mxu0 0.0
        %1913 = vmatpush1.msra.mxu0 0.0
        %1914 = vmatprep.subr.mxu0 0.0
        %1915 = vmatpush1.msra.mxu0 0.0
        %1916 = vmatprep.subr.mxu0 0.0
        %1917 = vmatpush1.msra.mxu0 0.0
        %1918 = vmatprep.subr.mxu0 0.0
        %1919 = vmatpush1.msra.mxu0 0.0
        %1920 = vmatprep.subr.mxu0 0.0
        %1921 = vmatpush1.msra.mxu0 0.0
        %1922 = vmatprep.subr.mxu0 0.0
        %1923 = vmatpush1.msra.mxu0 0.0
        %1924 = vmatprep.subr.mxu0 0.0
        %1925 = vmatpush1.msra.mxu0 0.0
        %1926 = vmatprep.subr.mxu0 0.0
        %1927 = vmatpush1.msra.mxu0 0.0
        %1928 = vmatprep.subr.mxu0 0.0
        %1929 = vmatpush1.msra.mxu0 0.0
        %1930 = vmatprep.subr.mxu0 0.0
        %1931 = vmatpush1.msra.mxu0 0.0
        %1932 = vmatprep.subr.mxu0 0.0
        %1933 = vmatpush1.msra.mxu0 0.0
        %1934 = vmatprep.subr.mxu0 0.0
        %1935 = vmatpush1.msra.mxu0 0.0
        %1936 = vmatprep.subr.mxu0 0.0
        %1937 = vmatpush1.msra.mxu0 0.0
        %1938 = vmatprep.subr.mxu0 0.0
        %1939 = vmatpush1.msra.mxu0 0.0
        %1940 = vmatprep.subr.mxu0 0.0
        %1941 = vmatpush1.msra.mxu0 0.0
        %1942 = vmatprep.mubr.f32.mxu0 0.0
        %1943 = vmatmul.mubr.f32.gmra.mrb[0].mxu0 %v906
        %v1944 = vpop.f32.mrb[0].mxu0
        %v1945 = vadd.f32 0.0, %v1944
        %v1946 = vpop.f32.mrb[0].mxu0
        %1947 = vdwg.mxu0
        %1948 = vset.pattern.permute.xlu0 3
        %1949 = vperm.xlu0 %1948, %v578
        %v1950 = vpop.permute.xlu0 %1949
        %v1952 = vadd.f32 %v578, %v1950
        %v1953 = vlaneseq
        %v1954 = vshrl.u32 %v1953, 7
        %v1955 = vsub.s32 3, %v1954
        %v1956 = vrot.slane %v578, %v1955
        %v1957 = vsub.f32 %v1952, %v1956
        %v1958 = vmul.f32 %v1957, 0.5
        %1959 = vset.pattern.permute.xlu0 3
        %1960 = vperm.xlu0 %1959, %v585
        %v1961 = vpop.permute.xlu0 %1960
        %v1963 = vmul.f32 %v585, %v1961
        %v1964 = vadd.f32 %v1963, 1e-10
        %v1965 = vrcp.pop %v1964
        %v1966 = vmul.f32 %v1964, %v1965
        %v1967 = vsub.f32 2.0, %v1966
        %v1968 = vmul.f32 %v1965, %v1967
        %v1969 = vmul.f32 %v1958, 0.95
        %v1970 = vmul.f32 %v1969, %v1968
        %v1971 = vmul.f32 %v1970, %v1970
        %v1972 = vsub.f32 1.0, %v1971
        %v1973 = vmax.f32 %v1972, 0.0
        %v1974 = vrsqrt.pop %v1973
        %v1975 = vmul.f32 %v1973, %v1974
        %vm1976 = vcmp.eq.f32.partialorder %v1973, inf
        %v1977 = vsel %vm1976, %v1973, %v1975
        %vm1978 = vcmp.eq.f32.partialorder %v1973, 0.0
        %v1979 = vand.u32 %v1973, 2147483648
        %v1980 = vsel %vm1978, %v1979, %v1977
        %v1981 = vadd.f32 %v585, %v1961
        %v1982 = vmul.f32 %v1981, 0.5
        %1983 = vset.pattern.permute.xlu0 3
        %1984 = vperm.xlu0 %1983, %v592
        %v1985 = vpop.permute.xlu0 %1984
        %v1987 = vmul.f32 %v670, %v1985
        %v1988 = vlaneseq
        %v1989 = vshrl.u32 %v1988, 7
        %v1990 = vsub.s32 3, %v1989
        %v1991 = vrot.slane %v592, %v1990
        %v1992 = vmul.f32 %v1987, %v1991
        %v1993 = vstv %s1869
        %v1994 = vmul.f32 %v1992, %v1993
        %1995 = vset.pattern.permute.xlu0 3
        %1996 = vperm.xlu0 %1995, %v714
        %v1997 = vpop.permute.xlu0 %1996
        %v1999 = vmul.f32 %v714, %v1997
        %v2000 = vmul.f32 %v1999, 2.0
        %v2001 = vmul.f32 %v2000, %v1994
        %v2002 = vsub.f32 %v1982, 0.9
        %v2003 = vmul.f32 %v2002, %v2002
        %v2004 = vmul.f32 %v2003, -8.0
        %v2005 = vmul.f32 %v2004, 1.442695
        %v2006 = vpow.pop %v2005
        %v2007 = vsub.f32 %v1982, 2.2
        %v2008 = vmul.f32 %v2007, %v2007
        %v2009 = vmul.f32 %v2008, -8.0
        %v2010 = vmul.f32 %v2009, 1.442695
        %v2011 = vpow.pop %v2010
        %v2012 = vmul.f32 %v1970, 0.9238795
        %v2013 = vadd.f32 %v2012, 1.0
        %v2014 = vmul.f32 %v1980, 0.38268343
        %v2015 = vadd.f32 %v2013, %v2014
        %v2016 = vmul.f32 %v2015, 0.5
        %v2017 = vmul.f32 %v2016, %v2016
        %v2018 = vmul.f32 %v2017, %v2017
        %v2019 = vmul.f32 %v2018, %v2018
        %v2020 = vmul.f32 %v1970, 0.38268343
        %v2021 = vadd.f32 %v2020, 1.0
        %v2022 = vmul.f32 %v1980, 0.9238795
        %v2023 = vadd.f32 %v2021, %v2022
        %v2024 = vmul.f32 %v2023, 0.5
        %v2025 = vmul.f32 %v2024, %v2024
        %v2026 = vmul.f32 %v2025, %v2025
        %v2027 = vmul.f32 %v2026, %v2026
        %v2028 = vmul.f32 %v1970, -0.38268343
        %v2029 = vadd.f32 %v2028, 1.0
        %v2030 = vadd.f32 %v2029, %v2022
        %v2031 = vmul.f32 %v2030, 0.5
        %v2032 = vmul.f32 %v2031, %v2031
        %v2033 = vmul.f32 %v2032, %v2032
        %v2034 = vmul.f32 %v2033, %v2033
        %v2035 = vmul.f32 %v1970, -0.9238795
        %v2036 = vadd.f32 %v2035, 1.0
        %v2037 = vadd.f32 %v2036, %v2014
        %v2038 = vmul.f32 %v2037, 0.5
        %v2039 = vmul.f32 %v2038, %v2038
        %v2040 = vmul.f32 %v2039, %v2039
        %v2041 = vmul.f32 %v2040, %v2040
        %v2042 = vmul.f32 %v2001, %v2019
        %v2043 = vmul.f32 %v2042, %v2006
        %v2044 = vmul.f32 %v2001, %v2027
        %v2045 = vmul.f32 %v2044, %v2006
        %v2046 = vmul.f32 %v2001, %v2034
        %v2047 = vmul.f32 %v2046, %v2006
        %v2048 = vmul.f32 %v2001, %v2041
        %v2049 = vmul.f32 %v2048, %v2006
        %v2050 = vmul.f32 %v2042, %v2011
        %v2051 = vmul.f32 %v2044, %v2011
        %v2052 = vmul.f32 %v2046, %v2011
        %v2053 = vmul.f32 %v2048, %v2011
        %v2055 = vsel %vm765, %v2043, 0
        %v2058 = vsel %vm765, %v2045, 0
        %v2061 = vsel %vm765, %v2047, 0
        %v2064 = vsel %vm765, %v2049, 0
        %v2067 = vsel %vm765, %v2050, 0
        %v2070 = vsel %vm765, %v2051, 0
        %v2073 = vsel %vm765, %v2052, 0
        %v2076 = vsel %vm765, %v2053, 0
        %2078 = vmatprep.subr.mxu0 0.0
        %2079 = vmatpush1.msra.mxu0 %v1945
        %2080 = vmatprep.subr.mxu0 0.0
        %2081 = vmatpush1.msra.mxu0 0.0
        %2082 = vmatprep.subr.mxu0 0.0
        %2083 = vmatpush1.msra.mxu0 0.0
        %2084 = vmatprep.subr.mxu0 0.0
        %2085 = vmatpush1.msra.mxu0 0.0
        %2086 = vmatprep.subr.mxu0 0.0
        %2087 = vmatpush1.msra.mxu0 0.0
        %2088 = vmatprep.subr.mxu0 0.0
        %2089 = vmatpush1.msra.mxu0 0.0
        %2090 = vmatprep.subr.mxu0 0.0
        %2091 = vmatpush1.msra.mxu0 0.0
        %2092 = vmatprep.subr.mxu0 0.0
        %2093 = vmatpush1.msra.mxu0 0.0
        %2094 = vmatprep.subr.mxu0 0.0
        %2095 = vmatpush1.msra.mxu0 0.0
        %2096 = vmatprep.subr.mxu0 0.0
        %2097 = vmatpush1.msra.mxu0 0.0
        %2098 = vmatprep.subr.mxu0 0.0
        %2099 = vmatpush1.msra.mxu0 0.0
        %2100 = vmatprep.subr.mxu0 0.0
        %2101 = vmatpush1.msra.mxu0 0.0
        %2102 = vmatprep.subr.mxu0 0.0
        %2103 = vmatpush1.msra.mxu0 0.0
        %2104 = vmatprep.subr.mxu0 0.0
        %2105 = vmatpush1.msra.mxu0 0.0
        %2106 = vmatprep.subr.mxu0 0.0
        %2107 = vmatpush1.msra.mxu0 0.0
        %2108 = vmatprep.subr.mxu0 0.0
        %2109 = vmatpush1.msra.mxu0 0.0
        %2110 = vmatprep.subr.mxu0 0.0
        %2111 = vmatpush1.msra.mxu0 0.0
        %2112 = vmatprep.subr.mxu0 0.0
        %2113 = vmatpush1.msra.mxu0 0.0
        %2114 = vmatprep.subr.mxu0 0.0
        %2115 = vmatpush1.msra.mxu0 0.0
        %2116 = vmatprep.subr.mxu0 0.0
        %2117 = vmatpush1.msra.mxu0 0.0
        %2118 = vmatprep.subr.mxu0 0.0
        %2119 = vmatpush1.msra.mxu0 0.0
        %2120 = vmatprep.subr.mxu0 0.0
        %2121 = vmatpush1.msra.mxu0 0.0
        %2122 = vmatprep.subr.mxu0 0.0
        %2123 = vmatpush1.msra.mxu0 0.0
        %2124 = vmatprep.subr.mxu0 0.0
        %2125 = vmatpush1.msra.mxu0 0.0
        %2126 = vmatprep.subr.mxu0 0.0
        %2127 = vmatpush1.msra.mxu0 0.0
        %2128 = vmatprep.subr.mxu0 0.0
        %2129 = vmatpush1.msra.mxu0 0.0
        %2130 = vmatprep.subr.mxu0 0.0
        %2131 = vmatpush1.msra.mxu0 0.0
        %2132 = vmatprep.subr.mxu0 0.0
        %2133 = vmatpush1.msra.mxu0 0.0
        %2134 = vmatprep.subr.mxu0 0.0
        %2135 = vmatpush1.msra.mxu0 0.0
        %2136 = vmatprep.subr.mxu0 0.0
        %2137 = vmatpush1.msra.mxu0 0.0
        %2138 = vmatprep.subr.mxu0 0.0
        %2139 = vmatpush1.msra.mxu0 0.0
        %2140 = vmatprep.subr.mxu0 0.0
        %2141 = vmatpush1.msra.mxu0 0.0
        %2142 = vmatprep.mubr.f32.mxu0 0.0
        %2143 = vmatmul.mubr.f32.gmra.mrb[0].mxu0 %v2055
        %v2144 = vpop.f32.mrb[0].mxu0
        %v2145 = vadd.f32 0.0, %v2144
        %v2146 = vpop.f32.mrb[0].mxu0
        %2147 = vmatprep.mubr.f32.mxu0 0.0
        %2148 = vmatmul.mubr.f32.gmra.mrb[0].mxu0 %v2058
        %v2149 = vpop.f32.mrb[0].mxu0
        %v2150 = vadd.f32 0.0, %v2149
        %v2151 = vpop.f32.mrb[0].mxu0
        %2152 = vmatprep.mubr.f32.mxu0 0.0
        %2153 = vmatmul.mubr.f32.gmra.mrb[0].mxu0 %v2061
        %v2154 = vpop.f32.mrb[0].mxu0
        %v2155 = vadd.f32 0.0, %v2154
        %v2156 = vpop.f32.mrb[0].mxu0
        %2157 = vmatprep.mubr.f32.mxu0 0.0
        %2158 = vmatmul.mubr.f32.gmra.mrb[0].mxu0 %v2064
        %v2159 = vpop.f32.mrb[0].mxu0
        %v2160 = vadd.f32 0.0, %v2159
        %v2161 = vpop.f32.mrb[0].mxu0
        %2162 = vmatprep.mubr.f32.mxu0 0.0
        %2163 = vmatmul.mubr.f32.gmra.mrb[0].mxu0 %v2067
        %v2164 = vpop.f32.mrb[0].mxu0
        %v2165 = vadd.f32 0.0, %v2164
        %v2166 = vpop.f32.mrb[0].mxu0
        %2167 = vmatprep.mubr.f32.mxu0 0.0
        %2168 = vmatmul.mubr.f32.gmra.mrb[0].mxu0 %v2070
        %v2169 = vpop.f32.mrb[0].mxu0
        %v2170 = vadd.f32 0.0, %v2169
        %v2171 = vpop.f32.mrb[0].mxu0
        %2172 = vmatprep.mubr.f32.mxu0 0.0
        %2173 = vmatmul.mubr.f32.gmra.mrb[0].mxu0 %v2073
        %v2174 = vpop.f32.mrb[0].mxu0
        %v2175 = vadd.f32 0.0, %v2174
        %v2176 = vpop.f32.mrb[0].mxu0
        %2177 = vmatprep.mubr.f32.mxu0 0.0
        %2178 = vmatmul.mubr.f32.gmra.mrb[0].mxu0 %v2076
        %v2179 = vpop.f32.mrb[0].mxu0
        %v2180 = vadd.f32 0.0, %v2179
        %v2181 = vpop.f32.mrb[0].mxu0
        %2182 = vdwg.mxu0
        %v2183 = vadd.f32 %v1857, %v2145
        %v2184 = vadd.f32 %v1858, %v2150
        %v2185 = vadd.f32 %v1859, %v2155
        %v2186 = vadd.f32 %v1860, %v2160
        %v2187 = vadd.f32 %v1861, %v2165
        %v2188 = vadd.f32 %v1862, %v2170
        %v2189 = vadd.f32 %v1863, %v2175
        %v2190 = vadd.f32 %v1864, %v2180
        %s2191 = sadd.s32 %s895, 4
        %s2192 = sld [smem:[#allocation3 + %s2191]]
        %p2193 = scmp.ge.s32.totalorder %s2192, 0
        %s2194 = scalar_select %p2193, 1, 0
        %s2195 = scvt.s32.f32 %s2194
        %p2196 = scmp.gt.s32.totalorder %s2192, 0
        %s2197 = scalar_select %p2196, %s2192, 0
        %s2198 = smul.u32 %s2197, 4
        %s2199 = scalar_lea.vmem %s3, %s2198
        %v2200 = vld [vmem:[%s2199] sm:$0xf]
        %v2202 = vsel %vm908, %v2200, 0
        %2204 = vmatprep.subr.mxu0 0.0
        %2205 = vmatpush1.msra.mxu0 %v2202
        %2206 = vmatprep.subr.mxu0 0.0
        %2207 = vmatpush1.msra.mxu0 0.0
        %2208 = vmatprep.subr.mxu0 0.0
        %2209 = vmatpush1.msra.mxu0 0.0
        %2210 = vmatprep.subr.mxu0 0.0
        %2211 = vmatpush1.msra.mxu0 0.0
        %2212 = vmatprep.subr.mxu0 0.0
        %2213 = vmatpush1.msra.mxu0 0.0
        %2214 = vmatprep.subr.mxu0 0.0
        %2215 = vmatpush1.msra.mxu0 0.0
        %2216 = vmatprep.subr.mxu0 0.0
        %2217 = vmatpush1.msra.mxu0 0.0
        %2218 = vmatprep.subr.mxu0 0.0
        %2219 = vmatpush1.msra.mxu0 0.0
        %2220 = vmatprep.subr.mxu0 0.0
        %2221 = vmatpush1.msra.mxu0 0.0
        %2222 = vmatprep.subr.mxu0 0.0
        %2223 = vmatpush1.msra.mxu0 0.0
        %2224 = vmatprep.subr.mxu0 0.0
        %2225 = vmatpush1.msra.mxu0 0.0
        %2226 = vmatprep.subr.mxu0 0.0
        %2227 = vmatpush1.msra.mxu0 0.0
        %2228 = vmatprep.subr.mxu0 0.0
        %2229 = vmatpush1.msra.mxu0 0.0
        %2230 = vmatprep.subr.mxu0 0.0
        %2231 = vmatpush1.msra.mxu0 0.0
        %2232 = vmatprep.subr.mxu0 0.0
        %2233 = vmatpush1.msra.mxu0 0.0
        %2234 = vmatprep.subr.mxu0 0.0
        %2235 = vmatpush1.msra.mxu0 0.0
        %2236 = vmatprep.subr.mxu0 0.0
        %2237 = vmatpush1.msra.mxu0 0.0
        %2238 = vmatprep.subr.mxu0 0.0
        %2239 = vmatpush1.msra.mxu0 0.0
        %2240 = vmatprep.subr.mxu0 0.0
        %2241 = vmatpush1.msra.mxu0 0.0
        %2242 = vmatprep.subr.mxu0 0.0
        %2243 = vmatpush1.msra.mxu0 0.0
        %2244 = vmatprep.subr.mxu0 0.0
        %2245 = vmatpush1.msra.mxu0 0.0
        %2246 = vmatprep.subr.mxu0 0.0
        %2247 = vmatpush1.msra.mxu0 0.0
        %2248 = vmatprep.subr.mxu0 0.0
        %2249 = vmatpush1.msra.mxu0 0.0
        %2250 = vmatprep.subr.mxu0 0.0
        %2251 = vmatpush1.msra.mxu0 0.0
        %2252 = vmatprep.subr.mxu0 0.0
        %2253 = vmatpush1.msra.mxu0 0.0
        %2254 = vmatprep.subr.mxu0 0.0
        %2255 = vmatpush1.msra.mxu0 0.0
        %2256 = vmatprep.subr.mxu0 0.0
        %2257 = vmatpush1.msra.mxu0 0.0
        %2258 = vmatprep.subr.mxu0 0.0
        %2259 = vmatpush1.msra.mxu0 0.0
        %2260 = vmatprep.subr.mxu0 0.0
        %2261 = vmatpush1.msra.mxu0 0.0
        %2262 = vmatprep.subr.mxu0 0.0
        %2263 = vmatpush1.msra.mxu0 0.0
        %2264 = vmatprep.subr.mxu0 0.0
        %2265 = vmatpush1.msra.mxu0 0.0
        %2266 = vmatprep.subr.mxu0 0.0
        %2267 = vmatpush1.msra.mxu0 0.0
        %2268 = vmatprep.mubr.f32.mxu0 0.0
        %2269 = vmatmul.mubr.f32.gmra.mrb[0].mxu0 %v906
        %v2270 = vpop.f32.mrb[0].mxu0
        %v2271 = vadd.f32 0.0, %v2270
        %v2272 = vpop.f32.mrb[0].mxu0
        %2273 = vdwg.mxu0
        %2274 = vset.pattern.permute.xlu0 4
        %2275 = vperm.xlu0 %2274, %v578
        %v2276 = vpop.permute.xlu0 %2275
        %v2278 = vadd.f32 %v578, %v2276
        %v2279 = vlaneseq
        %v2280 = vshrl.u32 %v2279, 7
        %v2281 = vsub.s32 4, %v2280
        %v2282 = vrot.slane %v578, %v2281
        %v2283 = vsub.f32 %v2278, %v2282
        %v2284 = vmul.f32 %v2283, 0.5
        %2285 = vset.pattern.permute.xlu0 4
        %2286 = vperm.xlu0 %2285, %v585
        %v2287 = vpop.permute.xlu0 %2286
        %v2289 = vmul.f32 %v585, %v2287
        %v2290 = vadd.f32 %v2289, 1e-10
        %v2291 = vrcp.pop %v2290
        %v2292 = vmul.f32 %v2290, %v2291
        %v2293 = vsub.f32 2.0, %v2292
        %v2294 = vmul.f32 %v2291, %v2293
        %v2295 = vmul.f32 %v2284, 0.95
        %v2296 = vmul.f32 %v2295, %v2294
        %v2297 = vmul.f32 %v2296, %v2296
        %v2298 = vsub.f32 1.0, %v2297
        %v2299 = vmax.f32 %v2298, 0.0
        %v2300 = vrsqrt.pop %v2299
        %v2301 = vmul.f32 %v2299, %v2300
        %vm2302 = vcmp.eq.f32.partialorder %v2299, inf
        %v2303 = vsel %vm2302, %v2299, %v2301
        %vm2304 = vcmp.eq.f32.partialorder %v2299, 0.0
        %v2305 = vand.u32 %v2299, 2147483648
        %v2306 = vsel %vm2304, %v2305, %v2303
        %v2307 = vadd.f32 %v585, %v2287
        %v2308 = vmul.f32 %v2307, 0.5
        %2309 = vset.pattern.permute.xlu0 4
        %2310 = vperm.xlu0 %2309, %v592
        %v2311 = vpop.permute.xlu0 %2310
        %v2313 = vmul.f32 %v670, %v2311
        %v2314 = vlaneseq
        %v2315 = vshrl.u32 %v2314, 7
        %v2316 = vsub.s32 4, %v2315
        %v2317 = vrot.slane %v592, %v2316
        %v2318 = vmul.f32 %v2313, %v2317
        %v2319 = vstv %s2195
        %v2320 = vmul.f32 %v2318, %v2319
        %2321 = vset.pattern.permute.xlu0 4
        %2322 = vperm.xlu0 %2321, %v714
        %v2323 = vpop.permute.xlu0 %2322
        %v2325 = vmul.f32 %v714, %v2323
        %v2326 = vmul.f32 %v2325, 2.0
        %v2327 = vmul.f32 %v2326, %v2320
        %v2328 = vsub.f32 %v2308, 0.9
        %v2329 = vmul.f32 %v2328, %v2328
        %v2330 = vmul.f32 %v2329, -8.0
        %v2331 = vmul.f32 %v2330, 1.442695
        %v2332 = vpow.pop %v2331
        %v2333 = vsub.f32 %v2308, 2.2
        %v2334 = vmul.f32 %v2333, %v2333
        %v2335 = vmul.f32 %v2334, -8.0
        %v2336 = vmul.f32 %v2335, 1.442695
        %v2337 = vpow.pop %v2336
        %v2338 = vmul.f32 %v2296, 0.9238795
        %v2339 = vadd.f32 %v2338, 1.0
        %v2340 = vmul.f32 %v2306, 0.38268343
        %v2341 = vadd.f32 %v2339, %v2340
        %v2342 = vmul.f32 %v2341, 0.5
        %v2343 = vmul.f32 %v2342, %v2342
        %v2344 = vmul.f32 %v2343, %v2343
        %v2345 = vmul.f32 %v2344, %v2344
        %v2346 = vmul.f32 %v2296, 0.38268343
        %v2347 = vadd.f32 %v2346, 1.0
        %v2348 = vmul.f32 %v2306, 0.9238795
        %v2349 = vadd.f32 %v2347, %v2348
        %v2350 = vmul.f32 %v2349, 0.5
        %v2351 = vmul.f32 %v2350, %v2350
        %v2352 = vmul.f32 %v2351, %v2351
        %v2353 = vmul.f32 %v2352, %v2352
        %v2354 = vmul.f32 %v2296, -0.38268343
        %v2355 = vadd.f32 %v2354, 1.0
        %v2356 = vadd.f32 %v2355, %v2348
        %v2357 = vmul.f32 %v2356, 0.5
        %v2358 = vmul.f32 %v2357, %v2357
        %v2359 = vmul.f32 %v2358, %v2358
        %v2360 = vmul.f32 %v2359, %v2359
        %v2361 = vmul.f32 %v2296, -0.9238795
        %v2362 = vadd.f32 %v2361, 1.0
        %v2363 = vadd.f32 %v2362, %v2340
        %v2364 = vmul.f32 %v2363, 0.5
        %v2365 = vmul.f32 %v2364, %v2364
        %v2366 = vmul.f32 %v2365, %v2365
        %v2367 = vmul.f32 %v2366, %v2366
        %v2368 = vmul.f32 %v2327, %v2345
        %v2369 = vmul.f32 %v2368, %v2332
        %v2370 = vmul.f32 %v2327, %v2353
        %v2371 = vmul.f32 %v2370, %v2332
        %v2372 = vmul.f32 %v2327, %v2360
        %v2373 = vmul.f32 %v2372, %v2332
        %v2374 = vmul.f32 %v2327, %v2367
        %v2375 = vmul.f32 %v2374, %v2332
        %v2376 = vmul.f32 %v2368, %v2337
        %v2377 = vmul.f32 %v2370, %v2337
        %v2378 = vmul.f32 %v2372, %v2337
        %v2379 = vmul.f32 %v2374, %v2337
        %v2381 = vsel %vm765, %v2369, 0
        %v2384 = vsel %vm765, %v2371, 0
        %v2387 = vsel %vm765, %v2373, 0
        %v2390 = vsel %vm765, %v2375, 0
        %v2393 = vsel %vm765, %v2376, 0
        %v2396 = vsel %vm765, %v2377, 0
        %v2399 = vsel %vm765, %v2378, 0
        %v2402 = vsel %vm765, %v2379, 0
        %2404 = vmatprep.subr.mxu0 0.0
        %2405 = vmatpush1.msra.mxu0 %v2271
        %2406 = vmatprep.subr.mxu0 0.0
        %2407 = vmatpush1.msra.mxu0 0.0
        %2408 = vmatprep.subr.mxu0 0.0
        %2409 = vmatpush1.msra.mxu0 0.0
        %2410 = vmatprep.subr.mxu0 0.0
        %2411 = vmatpush1.msra.mxu0 0.0
        %2412 = vmatprep.subr.mxu0 0.0
        %2413 = vmatpush1.msra.mxu0 0.0
        %2414 = vmatprep.subr.mxu0 0.0
        %2415 = vmatpush1.msra.mxu0 0.0
        %2416 = vmatprep.subr.mxu0 0.0
        %2417 = vmatpush1.msra.mxu0 0.0
        %2418 = vmatprep.subr.mxu0 0.0
        %2419 = vmatpush1.msra.mxu0 0.0
        %2420 = vmatprep.subr.mxu0 0.0
        %2421 = vmatpush1.msra.mxu0 0.0
        %2422 = vmatprep.subr.mxu0 0.0
        %2423 = vmatpush1.msra.mxu0 0.0
        %2424 = vmatprep.subr.mxu0 0.0
        %2425 = vmatpush1.msra.mxu0 0.0
        %2426 = vmatprep.subr.mxu0 0.0
        %2427 = vmatpush1.msra.mxu0 0.0
        %2428 = vmatprep.subr.mxu0 0.0
        %2429 = vmatpush1.msra.mxu0 0.0
        %2430 = vmatprep.subr.mxu0 0.0
        %2431 = vmatpush1.msra.mxu0 0.0
        %2432 = vmatprep.subr.mxu0 0.0
        %2433 = vmatpush1.msra.mxu0 0.0
        %2434 = vmatprep.subr.mxu0 0.0
        %2435 = vmatpush1.msra.mxu0 0.0
        %2436 = vmatprep.subr.mxu0 0.0
        %2437 = vmatpush1.msra.mxu0 0.0
        %2438 = vmatprep.subr.mxu0 0.0
        %2439 = vmatpush1.msra.mxu0 0.0
        %2440 = vmatprep.subr.mxu0 0.0
        %2441 = vmatpush1.msra.mxu0 0.0
        %2442 = vmatprep.subr.mxu0 0.0
        %2443 = vmatpush1.msra.mxu0 0.0
        %2444 = vmatprep.subr.mxu0 0.0
        %2445 = vmatpush1.msra.mxu0 0.0
        %2446 = vmatprep.subr.mxu0 0.0
        %2447 = vmatpush1.msra.mxu0 0.0
        %2448 = vmatprep.subr.mxu0 0.0
        %2449 = vmatpush1.msra.mxu0 0.0
        %2450 = vmatprep.subr.mxu0 0.0
        %2451 = vmatpush1.msra.mxu0 0.0
        %2452 = vmatprep.subr.mxu0 0.0
        %2453 = vmatpush1.msra.mxu0 0.0
        %2454 = vmatprep.subr.mxu0 0.0
        %2455 = vmatpush1.msra.mxu0 0.0
        %2456 = vmatprep.subr.mxu0 0.0
        %2457 = vmatpush1.msra.mxu0 0.0
        %2458 = vmatprep.subr.mxu0 0.0
        %2459 = vmatpush1.msra.mxu0 0.0
        %2460 = vmatprep.subr.mxu0 0.0
        %2461 = vmatpush1.msra.mxu0 0.0
        %2462 = vmatprep.subr.mxu0 0.0
        %2463 = vmatpush1.msra.mxu0 0.0
        %2464 = vmatprep.subr.mxu0 0.0
        %2465 = vmatpush1.msra.mxu0 0.0
        %2466 = vmatprep.subr.mxu0 0.0
        %2467 = vmatpush1.msra.mxu0 0.0
        %2468 = vmatprep.mubr.f32.mxu0 0.0
        %2469 = vmatmul.mubr.f32.gmra.mrb[0].mxu0 %v2381
        %v2470 = vpop.f32.mrb[0].mxu0
        %v2471 = vadd.f32 0.0, %v2470
        %v2472 = vpop.f32.mrb[0].mxu0
        %2473 = vmatprep.mubr.f32.mxu0 0.0
        %2474 = vmatmul.mubr.f32.gmra.mrb[0].mxu0 %v2384
        %v2475 = vpop.f32.mrb[0].mxu0
        %v2476 = vadd.f32 0.0, %v2475
        %v2477 = vpop.f32.mrb[0].mxu0
        %2478 = vmatprep.mubr.f32.mxu0 0.0
        %2479 = vmatmul.mubr.f32.gmra.mrb[0].mxu0 %v2387
        %v2480 = vpop.f32.mrb[0].mxu0
        %v2481 = vadd.f32 0.0, %v2480
        %v2482 = vpop.f32.mrb[0].mxu0
        %2483 = vmatprep.mubr.f32.mxu0 0.0
        %2484 = vmatmul.mubr.f32.gmra.mrb[0].mxu0 %v2390
        %v2485 = vpop.f32.mrb[0].mxu0
        %v2486 = vadd.f32 0.0, %v2485
        %v2487 = vpop.f32.mrb[0].mxu0
        %2488 = vmatprep.mubr.f32.mxu0 0.0
        %2489 = vmatmul.mubr.f32.gmra.mrb[0].mxu0 %v2393
        %v2490 = vpop.f32.mrb[0].mxu0
        %v2491 = vadd.f32 0.0, %v2490
        %v2492 = vpop.f32.mrb[0].mxu0
        %2493 = vmatprep.mubr.f32.mxu0 0.0
        %2494 = vmatmul.mubr.f32.gmra.mrb[0].mxu0 %v2396
        %v2495 = vpop.f32.mrb[0].mxu0
        %v2496 = vadd.f32 0.0, %v2495
        %v2497 = vpop.f32.mrb[0].mxu0
        %2498 = vmatprep.mubr.f32.mxu0 0.0
        %2499 = vmatmul.mubr.f32.gmra.mrb[0].mxu0 %v2399
        %v2500 = vpop.f32.mrb[0].mxu0
        %v2501 = vadd.f32 0.0, %v2500
        %v2502 = vpop.f32.mrb[0].mxu0
        %2503 = vmatprep.mubr.f32.mxu0 0.0
        %2504 = vmatmul.mubr.f32.gmra.mrb[0].mxu0 %v2402
        %v2505 = vpop.f32.mrb[0].mxu0
        %v2506 = vadd.f32 0.0, %v2505
        %v2507 = vpop.f32.mrb[0].mxu0
        %2508 = vdwg.mxu0
        %v2509 = vadd.f32 %v2183, %v2471
        %v2510 = vadd.f32 %v2184, %v2476
        %v2511 = vadd.f32 %v2185, %v2481
        %v2512 = vadd.f32 %v2186, %v2486
        %v2513 = vadd.f32 %v2187, %v2491
        %v2514 = vadd.f32 %v2188, %v2496
        %v2515 = vadd.f32 %v2189, %v2501
        %v2516 = vadd.f32 %v2190, %v2506
        %s2517 = sadd.s32 %s895, 5
        %s2518 = sld [smem:[#allocation3 + %s2517]]
        %p2519 = scmp.ge.s32.totalorder %s2518, 0
        %s2520 = scalar_select %p2519, 1, 0
        %s2521 = scvt.s32.f32 %s2520
        %p2522 = scmp.gt.s32.totalorder %s2518, 0
        %s2523 = scalar_select %p2522, %s2518, 0
        %s2524 = smul.u32 %s2523, 4
        %s2525 = scalar_lea.vmem %s3, %s2524
        %v2526 = vld [vmem:[%s2525] sm:$0xf]
        %v2528 = vsel %vm908, %v2526, 0
        %2530 = vmatprep.subr.mxu0 0.0
        %2531 = vmatpush1.msra.mxu0 %v2528
        %2532 = vmatprep.subr.mxu0 0.0
        %2533 = vmatpush1.msra.mxu0 0.0
        %2534 = vmatprep.subr.mxu0 0.0
        %2535 = vmatpush1.msra.mxu0 0.0
        %2536 = vmatprep.subr.mxu0 0.0
        %2537 = vmatpush1.msra.mxu0 0.0
        %2538 = vmatprep.subr.mxu0 0.0
        %2539 = vmatpush1.msra.mxu0 0.0
        %2540 = vmatprep.subr.mxu0 0.0
        %2541 = vmatpush1.msra.mxu0 0.0
        %2542 = vmatprep.subr.mxu0 0.0
        %2543 = vmatpush1.msra.mxu0 0.0
        %2544 = vmatprep.subr.mxu0 0.0
        %2545 = vmatpush1.msra.mxu0 0.0
        %2546 = vmatprep.subr.mxu0 0.0
        %2547 = vmatpush1.msra.mxu0 0.0
        %2548 = vmatprep.subr.mxu0 0.0
        %2549 = vmatpush1.msra.mxu0 0.0
        %2550 = vmatprep.subr.mxu0 0.0
        %2551 = vmatpush1.msra.mxu0 0.0
        %2552 = vmatprep.subr.mxu0 0.0
        %2553 = vmatpush1.msra.mxu0 0.0
        %2554 = vmatprep.subr.mxu0 0.0
        %2555 = vmatpush1.msra.mxu0 0.0
        %2556 = vmatprep.subr.mxu0 0.0
        %2557 = vmatpush1.msra.mxu0 0.0
        %2558 = vmatprep.subr.mxu0 0.0
        %2559 = vmatpush1.msra.mxu0 0.0
        %2560 = vmatprep.subr.mxu0 0.0
        %2561 = vmatpush1.msra.mxu0 0.0
        %2562 = vmatprep.subr.mxu0 0.0
        %2563 = vmatpush1.msra.mxu0 0.0
        %2564 = vmatprep.subr.mxu0 0.0
        %2565 = vmatpush1.msra.mxu0 0.0
        %2566 = vmatprep.subr.mxu0 0.0
        %2567 = vmatpush1.msra.mxu0 0.0
        %2568 = vmatprep.subr.mxu0 0.0
        %2569 = vmatpush1.msra.mxu0 0.0
        %2570 = vmatprep.subr.mxu0 0.0
        %2571 = vmatpush1.msra.mxu0 0.0
        %2572 = vmatprep.subr.mxu0 0.0
        %2573 = vmatpush1.msra.mxu0 0.0
        %2574 = vmatprep.subr.mxu0 0.0
        %2575 = vmatpush1.msra.mxu0 0.0
        %2576 = vmatprep.subr.mxu0 0.0
        %2577 = vmatpush1.msra.mxu0 0.0
        %2578 = vmatprep.subr.mxu0 0.0
        %2579 = vmatpush1.msra.mxu0 0.0
        %2580 = vmatprep.subr.mxu0 0.0
        %2581 = vmatpush1.msra.mxu0 0.0
        %2582 = vmatprep.subr.mxu0 0.0
        %2583 = vmatpush1.msra.mxu0 0.0
        %2584 = vmatprep.subr.mxu0 0.0
        %2585 = vmatpush1.msra.mxu0 0.0
        %2586 = vmatprep.subr.mxu0 0.0
        %2587 = vmatpush1.msra.mxu0 0.0
        %2588 = vmatprep.subr.mxu0 0.0
        %2589 = vmatpush1.msra.mxu0 0.0
        %2590 = vmatprep.subr.mxu0 0.0
        %2591 = vmatpush1.msra.mxu0 0.0
        %2592 = vmatprep.subr.mxu0 0.0
        %2593 = vmatpush1.msra.mxu0 0.0
        %2594 = vmatprep.mubr.f32.mxu0 0.0
        %2595 = vmatmul.mubr.f32.gmra.mrb[0].mxu0 %v906
        %v2596 = vpop.f32.mrb[0].mxu0
        %v2597 = vadd.f32 0.0, %v2596
        %v2598 = vpop.f32.mrb[0].mxu0
        %2599 = vdwg.mxu0
        %2600 = vset.pattern.permute.xlu0 5
        %2601 = vperm.xlu0 %2600, %v578
        %v2602 = vpop.permute.xlu0 %2601
        %v2604 = vadd.f32 %v578, %v2602
        %v2605 = vlaneseq
        %v2606 = vshrl.u32 %v2605, 7
        %v2607 = vsub.s32 5, %v2606
        %v2608 = vrot.slane %v578, %v2607
        %v2609 = vsub.f32 %v2604, %v2608
        %v2610 = vmul.f32 %v2609, 0.5
        %2611 = vset.pattern.permute.xlu0 5
        %2612 = vperm.xlu0 %2611, %v585
        %v2613 = vpop.permute.xlu0 %2612
        %v2615 = vmul.f32 %v585, %v2613
        %v2616 = vadd.f32 %v2615, 1e-10
        %v2617 = vrcp.pop %v2616
        %v2618 = vmul.f32 %v2616, %v2617
        %v2619 = vsub.f32 2.0, %v2618
        %v2620 = vmul.f32 %v2617, %v2619
        %v2621 = vmul.f32 %v2610, 0.95
        %v2622 = vmul.f32 %v2621, %v2620
        %v2623 = vmul.f32 %v2622, %v2622
        %v2624 = vsub.f32 1.0, %v2623
        %v2625 = vmax.f32 %v2624, 0.0
        %v2626 = vrsqrt.pop %v2625
        %v2627 = vmul.f32 %v2625, %v2626
        %vm2628 = vcmp.eq.f32.partialorder %v2625, inf
        %v2629 = vsel %vm2628, %v2625, %v2627
        %vm2630 = vcmp.eq.f32.partialorder %v2625, 0.0
        %v2631 = vand.u32 %v2625, 2147483648
        %v2632 = vsel %vm2630, %v2631, %v2629
        %v2633 = vadd.f32 %v585, %v2613
        %v2634 = vmul.f32 %v2633, 0.5
        %2635 = vset.pattern.permute.xlu0 5
        %2636 = vperm.xlu0 %2635, %v592
        %v2637 = vpop.permute.xlu0 %2636
        %v2639 = vmul.f32 %v670, %v2637
        %v2640 = vlaneseq
        %v2641 = vshrl.u32 %v2640, 7
        %v2642 = vsub.s32 5, %v2641
        %v2643 = vrot.slane %v592, %v2642
        %v2644 = vmul.f32 %v2639, %v2643
        %v2645 = vstv %s2521
        %v2646 = vmul.f32 %v2644, %v2645
        %2647 = vset.pattern.permute.xlu0 5
        %2648 = vperm.xlu0 %2647, %v714
        %v2649 = vpop.permute.xlu0 %2648
        %v2651 = vmul.f32 %v714, %v2649
        %v2652 = vmul.f32 %v2651, 2.0
        %v2653 = vmul.f32 %v2652, %v2646
        %v2654 = vsub.f32 %v2634, 0.9
        %v2655 = vmul.f32 %v2654, %v2654
        %v2656 = vmul.f32 %v2655, -8.0
        %v2657 = vmul.f32 %v2656, 1.442695
        %v2658 = vpow.pop %v2657
        %v2659 = vsub.f32 %v2634, 2.2
        %v2660 = vmul.f32 %v2659, %v2659
        %v2661 = vmul.f32 %v2660, -8.0
        %v2662 = vmul.f32 %v2661, 1.442695
        %v2663 = vpow.pop %v2662
        %v2664 = vmul.f32 %v2622, 0.9238795
        %v2665 = vadd.f32 %v2664, 1.0
        %v2666 = vmul.f32 %v2632, 0.38268343
        %v2667 = vadd.f32 %v2665, %v2666
        %v2668 = vmul.f32 %v2667, 0.5
        %v2669 = vmul.f32 %v2668, %v2668
        %v2670 = vmul.f32 %v2669, %v2669
        %v2671 = vmul.f32 %v2670, %v2670
        %v2672 = vmul.f32 %v2622, 0.38268343
        %v2673 = vadd.f32 %v2672, 1.0
        %v2674 = vmul.f32 %v2632, 0.9238795
        %v2675 = vadd.f32 %v2673, %v2674
        %v2676 = vmul.f32 %v2675, 0.5
        %v2677 = vmul.f32 %v2676, %v2676
        %v2678 = vmul.f32 %v2677, %v2677
        %v2679 = vmul.f32 %v2678, %v2678
        %v2680 = vmul.f32 %v2622, -0.38268343
        %v2681 = vadd.f32 %v2680, 1.0
        %v2682 = vadd.f32 %v2681, %v2674
        %v2683 = vmul.f32 %v2682, 0.5
        %v2684 = vmul.f32 %v2683, %v2683
        %v2685 = vmul.f32 %v2684, %v2684
        %v2686 = vmul.f32 %v2685, %v2685
        %v2687 = vmul.f32 %v2622, -0.9238795
        %v2688 = vadd.f32 %v2687, 1.0
        %v2689 = vadd.f32 %v2688, %v2666
        %v2690 = vmul.f32 %v2689, 0.5
        %v2691 = vmul.f32 %v2690, %v2690
        %v2692 = vmul.f32 %v2691, %v2691
        %v2693 = vmul.f32 %v2692, %v2692
        %v2694 = vmul.f32 %v2653, %v2671
        %v2695 = vmul.f32 %v2694, %v2658
        %v2696 = vmul.f32 %v2653, %v2679
        %v2697 = vmul.f32 %v2696, %v2658
        %v2698 = vmul.f32 %v2653, %v2686
        %v2699 = vmul.f32 %v2698, %v2658
        %v2700 = vmul.f32 %v2653, %v2693
        %v2701 = vmul.f32 %v2700, %v2658
        %v2702 = vmul.f32 %v2694, %v2663
        %v2703 = vmul.f32 %v2696, %v2663
        %v2704 = vmul.f32 %v2698, %v2663
        %v2705 = vmul.f32 %v2700, %v2663
        %v2707 = vsel %vm765, %v2695, 0
        %v2710 = vsel %vm765, %v2697, 0
        %v2713 = vsel %vm765, %v2699, 0
        %v2716 = vsel %vm765, %v2701, 0
        %v2719 = vsel %vm765, %v2702, 0
        %v2722 = vsel %vm765, %v2703, 0
        %v2725 = vsel %vm765, %v2704, 0
        %v2728 = vsel %vm765, %v2705, 0
        %2730 = vmatprep.subr.mxu0 0.0
        %2731 = vmatpush1.msra.mxu0 %v2597
        %2732 = vmatprep.subr.mxu0 0.0
        %2733 = vmatpush1.msra.mxu0 0.0
        %2734 = vmatprep.subr.mxu0 0.0
        %2735 = vmatpush1.msra.mxu0 0.0
        %2736 = vmatprep.subr.mxu0 0.0
        %2737 = vmatpush1.msra.mxu0 0.0
        %2738 = vmatprep.subr.mxu0 0.0
        %2739 = vmatpush1.msra.mxu0 0.0
        %2740 = vmatprep.subr.mxu0 0.0
        %2741 = vmatpush1.msra.mxu0 0.0
        %2742 = vmatprep.subr.mxu0 0.0
        %2743 = vmatpush1.msra.mxu0 0.0
        %2744 = vmatprep.subr.mxu0 0.0
        %2745 = vmatpush1.msra.mxu0 0.0
        %2746 = vmatprep.subr.mxu0 0.0
        %2747 = vmatpush1.msra.mxu0 0.0
        %2748 = vmatprep.subr.mxu0 0.0
        %2749 = vmatpush1.msra.mxu0 0.0
        %2750 = vmatprep.subr.mxu0 0.0
        %2751 = vmatpush1.msra.mxu0 0.0
        %2752 = vmatprep.subr.mxu0 0.0
        %2753 = vmatpush1.msra.mxu0 0.0
        %2754 = vmatprep.subr.mxu0 0.0
        %2755 = vmatpush1.msra.mxu0 0.0
        %2756 = vmatprep.subr.mxu0 0.0
        %2757 = vmatpush1.msra.mxu0 0.0
        %2758 = vmatprep.subr.mxu0 0.0
        %2759 = vmatpush1.msra.mxu0 0.0
        %2760 = vmatprep.subr.mxu0 0.0
        %2761 = vmatpush1.msra.mxu0 0.0
        %2762 = vmatprep.subr.mxu0 0.0
        %2763 = vmatpush1.msra.mxu0 0.0
        %2764 = vmatprep.subr.mxu0 0.0
        %2765 = vmatpush1.msra.mxu0 0.0
        %2766 = vmatprep.subr.mxu0 0.0
        %2767 = vmatpush1.msra.mxu0 0.0
        %2768 = vmatprep.subr.mxu0 0.0
        %2769 = vmatpush1.msra.mxu0 0.0
        %2770 = vmatprep.subr.mxu0 0.0
        %2771 = vmatpush1.msra.mxu0 0.0
        %2772 = vmatprep.subr.mxu0 0.0
        %2773 = vmatpush1.msra.mxu0 0.0
        %2774 = vmatprep.subr.mxu0 0.0
        %2775 = vmatpush1.msra.mxu0 0.0
        %2776 = vmatprep.subr.mxu0 0.0
        %2777 = vmatpush1.msra.mxu0 0.0
        %2778 = vmatprep.subr.mxu0 0.0
        %2779 = vmatpush1.msra.mxu0 0.0
        %2780 = vmatprep.subr.mxu0 0.0
        %2781 = vmatpush1.msra.mxu0 0.0
        %2782 = vmatprep.subr.mxu0 0.0
        %2783 = vmatpush1.msra.mxu0 0.0
        %2784 = vmatprep.subr.mxu0 0.0
        %2785 = vmatpush1.msra.mxu0 0.0
        %2786 = vmatprep.subr.mxu0 0.0
        %2787 = vmatpush1.msra.mxu0 0.0
        %2788 = vmatprep.subr.mxu0 0.0
        %2789 = vmatpush1.msra.mxu0 0.0
        %2790 = vmatprep.subr.mxu0 0.0
        %2791 = vmatpush1.msra.mxu0 0.0
        %2792 = vmatprep.subr.mxu0 0.0
        %2793 = vmatpush1.msra.mxu0 0.0
        %2794 = vmatprep.mubr.f32.mxu0 0.0
        %2795 = vmatmul.mubr.f32.gmra.mrb[0].mxu0 %v2707
        %v2796 = vpop.f32.mrb[0].mxu0
        %v2797 = vadd.f32 0.0, %v2796
        %v2798 = vpop.f32.mrb[0].mxu0
        %2799 = vmatprep.mubr.f32.mxu0 0.0
        %2800 = vmatmul.mubr.f32.gmra.mrb[0].mxu0 %v2710
        %v2801 = vpop.f32.mrb[0].mxu0
        %v2802 = vadd.f32 0.0, %v2801
        %v2803 = vpop.f32.mrb[0].mxu0
        %2804 = vmatprep.mubr.f32.mxu0 0.0
        %2805 = vmatmul.mubr.f32.gmra.mrb[0].mxu0 %v2713
        %v2806 = vpop.f32.mrb[0].mxu0
        %v2807 = vadd.f32 0.0, %v2806
        %v2808 = vpop.f32.mrb[0].mxu0
        %2809 = vmatprep.mubr.f32.mxu0 0.0
        %2810 = vmatmul.mubr.f32.gmra.mrb[0].mxu0 %v2716
        %v2811 = vpop.f32.mrb[0].mxu0
        %v2812 = vadd.f32 0.0, %v2811
        %v2813 = vpop.f32.mrb[0].mxu0
        %2814 = vmatprep.mubr.f32.mxu0 0.0
        %2815 = vmatmul.mubr.f32.gmra.mrb[0].mxu0 %v2719
        %v2816 = vpop.f32.mrb[0].mxu0
        %v2817 = vadd.f32 0.0, %v2816
        %v2818 = vpop.f32.mrb[0].mxu0
        %2819 = vmatprep.mubr.f32.mxu0 0.0
        %2820 = vmatmul.mubr.f32.gmra.mrb[0].mxu0 %v2722
        %v2821 = vpop.f32.mrb[0].mxu0
        %v2822 = vadd.f32 0.0, %v2821
        %v2823 = vpop.f32.mrb[0].mxu0
        %2824 = vmatprep.mubr.f32.mxu0 0.0
        %2825 = vmatmul.mubr.f32.gmra.mrb[0].mxu0 %v2725
        %v2826 = vpop.f32.mrb[0].mxu0
        %v2827 = vadd.f32 0.0, %v2826
        %v2828 = vpop.f32.mrb[0].mxu0
        %2829 = vmatprep.mubr.f32.mxu0 0.0
        %2830 = vmatmul.mubr.f32.gmra.mrb[0].mxu0 %v2728
        %v2831 = vpop.f32.mrb[0].mxu0
        %v2832 = vadd.f32 0.0, %v2831
        %v2833 = vpop.f32.mrb[0].mxu0
        %2834 = vdwg.mxu0
        %v2835 = vadd.f32 %v2509, %v2797
        %v2836 = vadd.f32 %v2510, %v2802
        %v2837 = vadd.f32 %v2511, %v2807
        %v2838 = vadd.f32 %v2512, %v2812
        %v2839 = vadd.f32 %v2513, %v2817
        %v2840 = vadd.f32 %v2514, %v2822
        %v2841 = vadd.f32 %v2515, %v2827
        %v2842 = vadd.f32 %v2516, %v2832
        %s2843 = sadd.s32 %s895, 6
        %s2844 = sld [smem:[#allocation3 + %s2843]]
        %p2845 = scmp.ge.s32.totalorder %s2844, 0
        %s2846 = scalar_select %p2845, 1, 0
        %s2847 = scvt.s32.f32 %s2846
        %p2848 = scmp.gt.s32.totalorder %s2844, 0
        %s2849 = scalar_select %p2848, %s2844, 0
        %s2850 = smul.u32 %s2849, 4
        %s2851 = scalar_lea.vmem %s3, %s2850
        %v2852 = vld [vmem:[%s2851] sm:$0xf]
        %v2854 = vsel %vm908, %v2852, 0
        %2856 = vmatprep.subr.mxu0 0.0
        %2857 = vmatpush1.msra.mxu0 %v2854
        %2858 = vmatprep.subr.mxu0 0.0
        %2859 = vmatpush1.msra.mxu0 0.0
        %2860 = vmatprep.subr.mxu0 0.0
        %2861 = vmatpush1.msra.mxu0 0.0
        %2862 = vmatprep.subr.mxu0 0.0
        %2863 = vmatpush1.msra.mxu0 0.0
        %2864 = vmatprep.subr.mxu0 0.0
        %2865 = vmatpush1.msra.mxu0 0.0
        %2866 = vmatprep.subr.mxu0 0.0
        %2867 = vmatpush1.msra.mxu0 0.0
        %2868 = vmatprep.subr.mxu0 0.0
        %2869 = vmatpush1.msra.mxu0 0.0
        %2870 = vmatprep.subr.mxu0 0.0
        %2871 = vmatpush1.msra.mxu0 0.0
        %2872 = vmatprep.subr.mxu0 0.0
        %2873 = vmatpush1.msra.mxu0 0.0
        %2874 = vmatprep.subr.mxu0 0.0
        %2875 = vmatpush1.msra.mxu0 0.0
        %2876 = vmatprep.subr.mxu0 0.0
        %2877 = vmatpush1.msra.mxu0 0.0
        %2878 = vmatprep.subr.mxu0 0.0
        %2879 = vmatpush1.msra.mxu0 0.0
        %2880 = vmatprep.subr.mxu0 0.0
        %2881 = vmatpush1.msra.mxu0 0.0
        %2882 = vmatprep.subr.mxu0 0.0
        %2883 = vmatpush1.msra.mxu0 0.0
        %2884 = vmatprep.subr.mxu0 0.0
        %2885 = vmatpush1.msra.mxu0 0.0
        %2886 = vmatprep.subr.mxu0 0.0
        %2887 = vmatpush1.msra.mxu0 0.0
        %2888 = vmatprep.subr.mxu0 0.0
        %2889 = vmatpush1.msra.mxu0 0.0
        %2890 = vmatprep.subr.mxu0 0.0
        %2891 = vmatpush1.msra.mxu0 0.0
        %2892 = vmatprep.subr.mxu0 0.0
        %2893 = vmatpush1.msra.mxu0 0.0
        %2894 = vmatprep.subr.mxu0 0.0
        %2895 = vmatpush1.msra.mxu0 0.0
        %2896 = vmatprep.subr.mxu0 0.0
        %2897 = vmatpush1.msra.mxu0 0.0
        %2898 = vmatprep.subr.mxu0 0.0
        %2899 = vmatpush1.msra.mxu0 0.0
        %2900 = vmatprep.subr.mxu0 0.0
        %2901 = vmatpush1.msra.mxu0 0.0
        %2902 = vmatprep.subr.mxu0 0.0
        %2903 = vmatpush1.msra.mxu0 0.0
        %2904 = vmatprep.subr.mxu0 0.0
        %2905 = vmatpush1.msra.mxu0 0.0
        %2906 = vmatprep.subr.mxu0 0.0
        %2907 = vmatpush1.msra.mxu0 0.0
        %2908 = vmatprep.subr.mxu0 0.0
        %2909 = vmatpush1.msra.mxu0 0.0
        %2910 = vmatprep.subr.mxu0 0.0
        %2911 = vmatpush1.msra.mxu0 0.0
        %2912 = vmatprep.subr.mxu0 0.0
        %2913 = vmatpush1.msra.mxu0 0.0
        %2914 = vmatprep.subr.mxu0 0.0
        %2915 = vmatpush1.msra.mxu0 0.0
        %2916 = vmatprep.subr.mxu0 0.0
        %2917 = vmatpush1.msra.mxu0 0.0
        %2918 = vmatprep.subr.mxu0 0.0
        %2919 = vmatpush1.msra.mxu0 0.0
        %2920 = vmatprep.mubr.f32.mxu0 0.0
        %2921 = vmatmul.mubr.f32.gmra.mrb[0].mxu0 %v906
        %v2922 = vpop.f32.mrb[0].mxu0
        %v2923 = vadd.f32 0.0, %v2922
        %v2924 = vpop.f32.mrb[0].mxu0
        %2925 = vdwg.mxu0
        %2926 = vset.pattern.permute.xlu0 6
        %2927 = vperm.xlu0 %2926, %v578
        %v2928 = vpop.permute.xlu0 %2927
        %v2930 = vadd.f32 %v578, %v2928
        %v2931 = vlaneseq
        %v2932 = vshrl.u32 %v2931, 7
        %v2933 = vsub.s32 6, %v2932
        %v2934 = vrot.slane %v578, %v2933
        %v2935 = vsub.f32 %v2930, %v2934
        %v2936 = vmul.f32 %v2935, 0.5
        %2937 = vset.pattern.permute.xlu0 6
        %2938 = vperm.xlu0 %2937, %v585
        %v2939 = vpop.permute.xlu0 %2938
        %v2941 = vmul.f32 %v585, %v2939
        %v2942 = vadd.f32 %v2941, 1e-10
        %v2943 = vrcp.pop %v2942
        %v2944 = vmul.f32 %v2942, %v2943
        %v2945 = vsub.f32 2.0, %v2944
        %v2946 = vmul.f32 %v2943, %v2945
        %v2947 = vmul.f32 %v2936, 0.95
        %v2948 = vmul.f32 %v2947, %v2946
        %v2949 = vmul.f32 %v2948, %v2948
        %v2950 = vsub.f32 1.0, %v2949
        %v2951 = vmax.f32 %v2950, 0.0
        %v2952 = vrsqrt.pop %v2951
        %v2953 = vmul.f32 %v2951, %v2952
        %vm2954 = vcmp.eq.f32.partialorder %v2951, inf
        %v2955 = vsel %vm2954, %v2951, %v2953
        %vm2956 = vcmp.eq.f32.partialorder %v2951, 0.0
        %v2957 = vand.u32 %v2951, 2147483648
        %v2958 = vsel %vm2956, %v2957, %v2955
        %v2959 = vadd.f32 %v585, %v2939
        %v2960 = vmul.f32 %v2959, 0.5
        %2961 = vset.pattern.permute.xlu0 6
        %2962 = vperm.xlu0 %2961, %v592
        %v2963 = vpop.permute.xlu0 %2962
        %v2965 = vmul.f32 %v670, %v2963
        %v2966 = vlaneseq
        %v2967 = vshrl.u32 %v2966, 7
        %v2968 = vsub.s32 6, %v2967
        %v2969 = vrot.slane %v592, %v2968
        %v2970 = vmul.f32 %v2965, %v2969
        %v2971 = vstv %s2847
        %v2972 = vmul.f32 %v2970, %v2971
        %2973 = vset.pattern.permute.xlu0 6
        %2974 = vperm.xlu0 %2973, %v714
        %v2975 = vpop.permute.xlu0 %2974
        %v2977 = vmul.f32 %v714, %v2975
        %v2978 = vmul.f32 %v2977, 2.0
        %v2979 = vmul.f32 %v2978, %v2972
        %v2980 = vsub.f32 %v2960, 0.9
        %v2981 = vmul.f32 %v2980, %v2980
        %v2982 = vmul.f32 %v2981, -8.0
        %v2983 = vmul.f32 %v2982, 1.442695
        %v2984 = vpow.pop %v2983
        %v2985 = vsub.f32 %v2960, 2.2
        %v2986 = vmul.f32 %v2985, %v2985
        %v2987 = vmul.f32 %v2986, -8.0
        %v2988 = vmul.f32 %v2987, 1.442695
        %v2989 = vpow.pop %v2988
        %v2990 = vmul.f32 %v2948, 0.9238795
        %v2991 = vadd.f32 %v2990, 1.0
        %v2992 = vmul.f32 %v2958, 0.38268343
        %v2993 = vadd.f32 %v2991, %v2992
        %v2994 = vmul.f32 %v2993, 0.5
        %v2995 = vmul.f32 %v2994, %v2994
        %v2996 = vmul.f32 %v2995, %v2995
        %v2997 = vmul.f32 %v2996, %v2996
        %v2998 = vmul.f32 %v2948, 0.38268343
        %v2999 = vadd.f32 %v2998, 1.0
        %v3000 = vmul.f32 %v2958, 0.9238795
        %v3001 = vadd.f32 %v2999, %v3000
        %v3002 = vmul.f32 %v3001, 0.5
        %v3003 = vmul.f32 %v3002, %v3002
        %v3004 = vmul.f32 %v3003, %v3003
        %v3005 = vmul.f32 %v3004, %v3004
        %v3006 = vmul.f32 %v2948, -0.38268343
        %v3007 = vadd.f32 %v3006, 1.0
        %v3008 = vadd.f32 %v3007, %v3000
        %v3009 = vmul.f32 %v3008, 0.5
        %v3010 = vmul.f32 %v3009, %v3009
        %v3011 = vmul.f32 %v3010, %v3010
        %v3012 = vmul.f32 %v3011, %v3011
        %v3013 = vmul.f32 %v2948, -0.9238795
        %v3014 = vadd.f32 %v3013, 1.0
        %v3015 = vadd.f32 %v3014, %v2992
        %v3016 = vmul.f32 %v3015, 0.5
        %v3017 = vmul.f32 %v3016, %v3016
        %v3018 = vmul.f32 %v3017, %v3017
        %v3019 = vmul.f32 %v3018, %v3018
        %v3020 = vmul.f32 %v2979, %v2997
        %v3021 = vmul.f32 %v3020, %v2984
        %v3022 = vmul.f32 %v2979, %v3005
        %v3023 = vmul.f32 %v3022, %v2984
        %v3024 = vmul.f32 %v2979, %v3012
        %v3025 = vmul.f32 %v3024, %v2984
        %v3026 = vmul.f32 %v2979, %v3019
        %v3027 = vmul.f32 %v3026, %v2984
        %v3028 = vmul.f32 %v3020, %v2989
        %v3029 = vmul.f32 %v3022, %v2989
        %v3030 = vmul.f32 %v3024, %v2989
        %v3031 = vmul.f32 %v3026, %v2989
        %v3033 = vsel %vm765, %v3021, 0
        %v3036 = vsel %vm765, %v3023, 0
        %v3039 = vsel %vm765, %v3025, 0
        %v3042 = vsel %vm765, %v3027, 0
        %v3045 = vsel %vm765, %v3028, 0
        %v3048 = vsel %vm765, %v3029, 0
        %v3051 = vsel %vm765, %v3030, 0
        %v3054 = vsel %vm765, %v3031, 0
        %3056 = vmatprep.subr.mxu0 0.0
        %3057 = vmatpush1.msra.mxu0 %v2923
        %3058 = vmatprep.subr.mxu0 0.0
        %3059 = vmatpush1.msra.mxu0 0.0
        %3060 = vmatprep.subr.mxu0 0.0
        %3061 = vmatpush1.msra.mxu0 0.0
        %3062 = vmatprep.subr.mxu0 0.0
        %3063 = vmatpush1.msra.mxu0 0.0
        %3064 = vmatprep.subr.mxu0 0.0
        %3065 = vmatpush1.msra.mxu0 0.0
        %3066 = vmatprep.subr.mxu0 0.0
        %3067 = vmatpush1.msra.mxu0 0.0
        %3068 = vmatprep.subr.mxu0 0.0
        %3069 = vmatpush1.msra.mxu0 0.0
        %3070 = vmatprep.subr.mxu0 0.0
        %3071 = vmatpush1.msra.mxu0 0.0
        %3072 = vmatprep.subr.mxu0 0.0
        %3073 = vmatpush1.msra.mxu0 0.0
        %3074 = vmatprep.subr.mxu0 0.0
        %3075 = vmatpush1.msra.mxu0 0.0
        %3076 = vmatprep.subr.mxu0 0.0
        %3077 = vmatpush1.msra.mxu0 0.0
        %3078 = vmatprep.subr.mxu0 0.0
        %3079 = vmatpush1.msra.mxu0 0.0
        %3080 = vmatprep.subr.mxu0 0.0
        %3081 = vmatpush1.msra.mxu0 0.0
        %3082 = vmatprep.subr.mxu0 0.0
        %3083 = vmatpush1.msra.mxu0 0.0
        %3084 = vmatprep.subr.mxu0 0.0
        %3085 = vmatpush1.msra.mxu0 0.0
        %3086 = vmatprep.subr.mxu0 0.0
        %3087 = vmatpush1.msra.mxu0 0.0
        %3088 = vmatprep.subr.mxu0 0.0
        %3089 = vmatpush1.msra.mxu0 0.0
        %3090 = vmatprep.subr.mxu0 0.0
        %3091 = vmatpush1.msra.mxu0 0.0
        %3092 = vmatprep.subr.mxu0 0.0
        %3093 = vmatpush1.msra.mxu0 0.0
        %3094 = vmatprep.subr.mxu0 0.0
        %3095 = vmatpush1.msra.mxu0 0.0
        %3096 = vmatprep.subr.mxu0 0.0
        %3097 = vmatpush1.msra.mxu0 0.0
        %3098 = vmatprep.subr.mxu0 0.0
        %3099 = vmatpush1.msra.mxu0 0.0
        %3100 = vmatprep.subr.mxu0 0.0
        %3101 = vmatpush1.msra.mxu0 0.0
        %3102 = vmatprep.subr.mxu0 0.0
        %3103 = vmatpush1.msra.mxu0 0.0
        %3104 = vmatprep.subr.mxu0 0.0
        %3105 = vmatpush1.msra.mxu0 0.0
        %3106 = vmatprep.subr.mxu0 0.0
        %3107 = vmatpush1.msra.mxu0 0.0
        %3108 = vmatprep.subr.mxu0 0.0
        %3109 = vmatpush1.msra.mxu0 0.0
        %3110 = vmatprep.subr.mxu0 0.0
        %3111 = vmatpush1.msra.mxu0 0.0
        %3112 = vmatprep.subr.mxu0 0.0
        %3113 = vmatpush1.msra.mxu0 0.0
        %3114 = vmatprep.subr.mxu0 0.0
        %3115 = vmatpush1.msra.mxu0 0.0
        %3116 = vmatprep.subr.mxu0 0.0
        %3117 = vmatpush1.msra.mxu0 0.0
        %3118 = vmatprep.subr.mxu0 0.0
        %3119 = vmatpush1.msra.mxu0 0.0
        %3120 = vmatprep.mubr.f32.mxu0 0.0
        %3121 = vmatmul.mubr.f32.gmra.mrb[0].mxu0 %v3033
        %v3122 = vpop.f32.mrb[0].mxu0
        %v3123 = vadd.f32 0.0, %v3122
        %v3124 = vpop.f32.mrb[0].mxu0
        %3125 = vmatprep.mubr.f32.mxu0 0.0
        %3126 = vmatmul.mubr.f32.gmra.mrb[0].mxu0 %v3036
        %v3127 = vpop.f32.mrb[0].mxu0
        %v3128 = vadd.f32 0.0, %v3127
        %v3129 = vpop.f32.mrb[0].mxu0
        %3130 = vmatprep.mubr.f32.mxu0 0.0
        %3131 = vmatmul.mubr.f32.gmra.mrb[0].mxu0 %v3039
        %v3132 = vpop.f32.mrb[0].mxu0
        %v3133 = vadd.f32 0.0, %v3132
        %v3134 = vpop.f32.mrb[0].mxu0
        %3135 = vmatprep.mubr.f32.mxu0 0.0
        %3136 = vmatmul.mubr.f32.gmra.mrb[0].mxu0 %v3042
        %v3137 = vpop.f32.mrb[0].mxu0
        %v3138 = vadd.f32 0.0, %v3137
        %v3139 = vpop.f32.mrb[0].mxu0
        %3140 = vmatprep.mubr.f32.mxu0 0.0
        %3141 = vmatmul.mubr.f32.gmra.mrb[0].mxu0 %v3045
        %v3142 = vpop.f32.mrb[0].mxu0
        %v3143 = vadd.f32 0.0, %v3142
        %v3144 = vpop.f32.mrb[0].mxu0
        %3145 = vmatprep.mubr.f32.mxu0 0.0
        %3146 = vmatmul.mubr.f32.gmra.mrb[0].mxu0 %v3048
        %v3147 = vpop.f32.mrb[0].mxu0
        %v3148 = vadd.f32 0.0, %v3147
        %v3149 = vpop.f32.mrb[0].mxu0
        %3150 = vmatprep.mubr.f32.mxu0 0.0
        %3151 = vmatmul.mubr.f32.gmra.mrb[0].mxu0 %v3051
        %v3152 = vpop.f32.mrb[0].mxu0
        %v3153 = vadd.f32 0.0, %v3152
        %v3154 = vpop.f32.mrb[0].mxu0
        %3155 = vmatprep.mubr.f32.mxu0 0.0
        %3156 = vmatmul.mubr.f32.gmra.mrb[0].mxu0 %v3054
        %v3157 = vpop.f32.mrb[0].mxu0
        %v3158 = vadd.f32 0.0, %v3157
        %v3159 = vpop.f32.mrb[0].mxu0
        %3160 = vdwg.mxu0
        %v3161 = vadd.f32 %v2835, %v3123
        %v3162 = vadd.f32 %v2836, %v3128
        %v3163 = vadd.f32 %v2837, %v3133
        %v3164 = vadd.f32 %v2838, %v3138
        %v3165 = vadd.f32 %v2839, %v3143
        %v3166 = vadd.f32 %v2840, %v3148
        %v3167 = vadd.f32 %v2841, %v3153
        %v3168 = vadd.f32 %v2842, %v3158
        %s3169 = sadd.s32 %s895, 7
        %s3170 = sld [smem:[#allocation3 + %s3169]]
        %p3171 = scmp.ge.s32.totalorder %s3170, 0
        %s3172 = scalar_select %p3171, 1, 0
        %s3173 = scvt.s32.f32 %s3172
        %p3174 = scmp.gt.s32.totalorder %s3170, 0
        %s3175 = scalar_select %p3174, %s3170, 0
        %s3176 = smul.u32 %s3175, 4
        %s3177 = scalar_lea.vmem %s3, %s3176
        %v3178 = vld [vmem:[%s3177] sm:$0xf]
        %v3180 = vsel %vm908, %v3178, 0
        %3182 = vmatprep.subr.mxu0 0.0
        %3183 = vmatpush1.msra.mxu0 %v3180
        %3184 = vmatprep.subr.mxu0 0.0
        %3185 = vmatpush1.msra.mxu0 0.0
        %3186 = vmatprep.subr.mxu0 0.0
        %3187 = vmatpush1.msra.mxu0 0.0
        %3188 = vmatprep.subr.mxu0 0.0
        %3189 = vmatpush1.msra.mxu0 0.0
        %3190 = vmatprep.subr.mxu0 0.0
        %3191 = vmatpush1.msra.mxu0 0.0
        %3192 = vmatprep.subr.mxu0 0.0
        %3193 = vmatpush1.msra.mxu0 0.0
        %3194 = vmatprep.subr.mxu0 0.0
        %3195 = vmatpush1.msra.mxu0 0.0
        %3196 = vmatprep.subr.mxu0 0.0
        %3197 = vmatpush1.msra.mxu0 0.0
        %3198 = vmatprep.subr.mxu0 0.0
        %3199 = vmatpush1.msra.mxu0 0.0
        %3200 = vmatprep.subr.mxu0 0.0
        %3201 = vmatpush1.msra.mxu0 0.0
        %3202 = vmatprep.subr.mxu0 0.0
        %3203 = vmatpush1.msra.mxu0 0.0
        %3204 = vmatprep.subr.mxu0 0.0
        %3205 = vmatpush1.msra.mxu0 0.0
        %3206 = vmatprep.subr.mxu0 0.0
        %3207 = vmatpush1.msra.mxu0 0.0
        %3208 = vmatprep.subr.mxu0 0.0
        %3209 = vmatpush1.msra.mxu0 0.0
        %3210 = vmatprep.subr.mxu0 0.0
        %3211 = vmatpush1.msra.mxu0 0.0
        %3212 = vmatprep.subr.mxu0 0.0
        %3213 = vmatpush1.msra.mxu0 0.0
        %3214 = vmatprep.subr.mxu0 0.0
        %3215 = vmatpush1.msra.mxu0 0.0
        %3216 = vmatprep.subr.mxu0 0.0
        %3217 = vmatpush1.msra.mxu0 0.0
        %3218 = vmatprep.subr.mxu0 0.0
        %3219 = vmatpush1.msra.mxu0 0.0
        %3220 = vmatprep.subr.mxu0 0.0
        %3221 = vmatpush1.msra.mxu0 0.0
        %3222 = vmatprep.subr.mxu0 0.0
        %3223 = vmatpush1.msra.mxu0 0.0
        %3224 = vmatprep.subr.mxu0 0.0
        %3225 = vmatpush1.msra.mxu0 0.0
        %3226 = vmatprep.subr.mxu0 0.0
        %3227 = vmatpush1.msra.mxu0 0.0
        %3228 = vmatprep.subr.mxu0 0.0
        %3229 = vmatpush1.msra.mxu0 0.0
        %3230 = vmatprep.subr.mxu0 0.0
        %3231 = vmatpush1.msra.mxu0 0.0
        %3232 = vmatprep.subr.mxu0 0.0
        %3233 = vmatpush1.msra.mxu0 0.0
        %3234 = vmatprep.subr.mxu0 0.0
        %3235 = vmatpush1.msra.mxu0 0.0
        %3236 = vmatprep.subr.mxu0 0.0
        %3237 = vmatpush1.msra.mxu0 0.0
        %3238 = vmatprep.subr.mxu0 0.0
        %3239 = vmatpush1.msra.mxu0 0.0
        %3240 = vmatprep.subr.mxu0 0.0
        %3241 = vmatpush1.msra.mxu0 0.0
        %3242 = vmatprep.subr.mxu0 0.0
        %3243 = vmatpush1.msra.mxu0 0.0
        %3244 = vmatprep.subr.mxu0 0.0
        %3245 = vmatpush1.msra.mxu0 0.0
        %3246 = vmatprep.mubr.f32.mxu0 0.0
        %3247 = vmatmul.mubr.f32.gmra.mrb[0].mxu0 %v906
        %v3248 = vpop.f32.mrb[0].mxu0
        %v3249 = vadd.f32 0.0, %v3248
        %v3250 = vpop.f32.mrb[0].mxu0
        %3251 = vdwg.mxu0
        %3252 = vset.pattern.permute.xlu0 7
        %3253 = vperm.xlu0 %3252, %v578
        %v3254 = vpop.permute.xlu0 %3253
        %v3256 = vadd.f32 %v578, %v3254
        %v3257 = vlaneseq
        %v3258 = vshrl.u32 %v3257, 7
        %v3259 = vsub.s32 7, %v3258
        %v3260 = vrot.slane %v578, %v3259
        %v3261 = vsub.f32 %v3256, %v3260
        %v3262 = vmul.f32 %v3261, 0.5
        %3263 = vset.pattern.permute.xlu0 7
        %3264 = vperm.xlu0 %3263, %v585
        %v3265 = vpop.permute.xlu0 %3264
        %v3267 = vmul.f32 %v585, %v3265
        %v3268 = vadd.f32 %v3267, 1e-10
        %v3269 = vrcp.pop %v3268
        %v3270 = vmul.f32 %v3268, %v3269
        %v3271 = vsub.f32 2.0, %v3270
        %v3272 = vmul.f32 %v3269, %v3271
        %v3273 = vmul.f32 %v3262, 0.95
        %v3274 = vmul.f32 %v3273, %v3272
        %v3275 = vmul.f32 %v3274, %v3274
        %v3276 = vsub.f32 1.0, %v3275
        %v3277 = vmax.f32 %v3276, 0.0
        %v3278 = vrsqrt.pop %v3277
        %v3279 = vmul.f32 %v3277, %v3278
        %vm3280 = vcmp.eq.f32.partialorder %v3277, inf
        %v3281 = vsel %vm3280, %v3277, %v3279
        %vm3282 = vcmp.eq.f32.partialorder %v3277, 0.0
        %v3283 = vand.u32 %v3277, 2147483648
        %v3284 = vsel %vm3282, %v3283, %v3281
        %v3285 = vadd.f32 %v585, %v3265
        %v3286 = vmul.f32 %v3285, 0.5
        %3287 = vset.pattern.permute.xlu0 7
        %3288 = vperm.xlu0 %3287, %v592
        %v3289 = vpop.permute.xlu0 %3288
        %v3291 = vmul.f32 %v670, %v3289
        %v3292 = vlaneseq
        %v3293 = vshrl.u32 %v3292, 7
        %v3294 = vsub.s32 7, %v3293
        %v3295 = vrot.slane %v592, %v3294
        %v3296 = vmul.f32 %v3291, %v3295
        %v3297 = vstv %s3173
        %v3298 = vmul.f32 %v3296, %v3297
        %3299 = vset.pattern.permute.xlu0 7
        %3300 = vperm.xlu0 %3299, %v714
        %v3301 = vpop.permute.xlu0 %3300
        %v3303 = vmul.f32 %v714, %v3301
        %v3304 = vmul.f32 %v3303, 2.0
        %v3305 = vmul.f32 %v3304, %v3298
        %v3306 = vsub.f32 %v3286, 0.9
        %v3307 = vmul.f32 %v3306, %v3306
        %v3308 = vmul.f32 %v3307, -8.0
        %v3309 = vmul.f32 %v3308, 1.442695
        %v3310 = vpow.pop %v3309
        %v3311 = vsub.f32 %v3286, 2.2
        %v3312 = vmul.f32 %v3311, %v3311
        %v3313 = vmul.f32 %v3312, -8.0
        %v3314 = vmul.f32 %v3313, 1.442695
        %v3315 = vpow.pop %v3314
        %v3316 = vmul.f32 %v3274, 0.9238795
        %v3317 = vadd.f32 %v3316, 1.0
        %v3318 = vmul.f32 %v3284, 0.38268343
        %v3319 = vadd.f32 %v3317, %v3318
        %v3320 = vmul.f32 %v3319, 0.5
        %v3321 = vmul.f32 %v3320, %v3320
        %v3322 = vmul.f32 %v3321, %v3321
        %v3323 = vmul.f32 %v3322, %v3322
        %v3324 = vmul.f32 %v3274, 0.38268343
        %v3325 = vadd.f32 %v3324, 1.0
        %v3326 = vmul.f32 %v3284, 0.9238795
        %v3327 = vadd.f32 %v3325, %v3326
        %v3328 = vmul.f32 %v3327, 0.5
        %v3329 = vmul.f32 %v3328, %v3328
        %v3330 = vmul.f32 %v3329, %v3329
        %v3331 = vmul.f32 %v3330, %v3330
        %v3332 = vmul.f32 %v3274, -0.38268343
        %v3333 = vadd.f32 %v3332, 1.0
        %v3334 = vadd.f32 %v3333, %v3326
        %v3335 = vmul.f32 %v3334, 0.5
        %v3336 = vmul.f32 %v3335, %v3335
        %v3337 = vmul.f32 %v3336, %v3336
        %v3338 = vmul.f32 %v3337, %v3337
        %v3339 = vmul.f32 %v3274, -0.9238795
        %v3340 = vadd.f32 %v3339, 1.0
        %v3341 = vadd.f32 %v3340, %v3318
        %v3342 = vmul.f32 %v3341, 0.5
        %v3343 = vmul.f32 %v3342, %v3342
        %v3344 = vmul.f32 %v3343, %v3343
        %v3345 = vmul.f32 %v3344, %v3344
        %v3346 = vmul.f32 %v3305, %v3323
        %v3347 = vmul.f32 %v3346, %v3310
        %v3348 = vmul.f32 %v3305, %v3331
        %v3349 = vmul.f32 %v3348, %v3310
        %v3350 = vmul.f32 %v3305, %v3338
        %v3351 = vmul.f32 %v3350, %v3310
        %v3352 = vmul.f32 %v3305, %v3345
        %v3353 = vmul.f32 %v3352, %v3310
        %v3354 = vmul.f32 %v3346, %v3315
        %v3355 = vmul.f32 %v3348, %v3315
        %v3356 = vmul.f32 %v3350, %v3315
        %v3357 = vmul.f32 %v3352, %v3315
        %v3359 = vsel %vm765, %v3347, 0
        %v3362 = vsel %vm765, %v3349, 0
        %v3365 = vsel %vm765, %v3351, 0
        %v3368 = vsel %vm765, %v3353, 0
        %v3371 = vsel %vm765, %v3354, 0
        %v3374 = vsel %vm765, %v3355, 0
        %v3377 = vsel %vm765, %v3356, 0
        %v3380 = vsel %vm765, %v3357, 0
        %3382 = vmatprep.subr.mxu0 0.0
        %3383 = vmatpush1.msra.mxu0 %v3249
        %3384 = vmatprep.subr.mxu0 0.0
        %3385 = vmatpush1.msra.mxu0 0.0
        %3386 = vmatprep.subr.mxu0 0.0
        %3387 = vmatpush1.msra.mxu0 0.0
        %3388 = vmatprep.subr.mxu0 0.0
        %3389 = vmatpush1.msra.mxu0 0.0
        %3390 = vmatprep.subr.mxu0 0.0
        %3391 = vmatpush1.msra.mxu0 0.0
        %3392 = vmatprep.subr.mxu0 0.0
        %3393 = vmatpush1.msra.mxu0 0.0
        %3394 = vmatprep.subr.mxu0 0.0
        %3395 = vmatpush1.msra.mxu0 0.0
        %3396 = vmatprep.subr.mxu0 0.0
        %3397 = vmatpush1.msra.mxu0 0.0
        %3398 = vmatprep.subr.mxu0 0.0
        %3399 = vmatpush1.msra.mxu0 0.0
        %3400 = vmatprep.subr.mxu0 0.0
        %3401 = vmatpush1.msra.mxu0 0.0
        %3402 = vmatprep.subr.mxu0 0.0
        %3403 = vmatpush1.msra.mxu0 0.0
        %3404 = vmatprep.subr.mxu0 0.0
        %3405 = vmatpush1.msra.mxu0 0.0
        %3406 = vmatprep.subr.mxu0 0.0
        %3407 = vmatpush1.msra.mxu0 0.0
        %3408 = vmatprep.subr.mxu0 0.0
        %3409 = vmatpush1.msra.mxu0 0.0
        %3410 = vmatprep.subr.mxu0 0.0
        %3411 = vmatpush1.msra.mxu0 0.0
        %3412 = vmatprep.subr.mxu0 0.0
        %3413 = vmatpush1.msra.mxu0 0.0
        %3414 = vmatprep.subr.mxu0 0.0
        %3415 = vmatpush1.msra.mxu0 0.0
        %3416 = vmatprep.subr.mxu0 0.0
        %3417 = vmatpush1.msra.mxu0 0.0
        %3418 = vmatprep.subr.mxu0 0.0
        %3419 = vmatpush1.msra.mxu0 0.0
        %3420 = vmatprep.subr.mxu0 0.0
        %3421 = vmatpush1.msra.mxu0 0.0
        %3422 = vmatprep.subr.mxu0 0.0
        %3423 = vmatpush1.msra.mxu0 0.0
        %3424 = vmatprep.subr.mxu0 0.0
        %3425 = vmatpush1.msra.mxu0 0.0
        %3426 = vmatprep.subr.mxu0 0.0
        %3427 = vmatpush1.msra.mxu0 0.0
        %3428 = vmatprep.subr.mxu0 0.0
        %3429 = vmatpush1.msra.mxu0 0.0
        %3430 = vmatprep.subr.mxu0 0.0
        %3431 = vmatpush1.msra.mxu0 0.0
        %3432 = vmatprep.subr.mxu0 0.0
        %3433 = vmatpush1.msra.mxu0 0.0
        %3434 = vmatprep.subr.mxu0 0.0
        %3435 = vmatpush1.msra.mxu0 0.0
        %3436 = vmatprep.subr.mxu0 0.0
        %3437 = vmatpush1.msra.mxu0 0.0
        %3438 = vmatprep.subr.mxu0 0.0
        %3439 = vmatpush1.msra.mxu0 0.0
        %3440 = vmatprep.subr.mxu0 0.0
        %3441 = vmatpush1.msra.mxu0 0.0
        %3442 = vmatprep.subr.mxu0 0.0
        %3443 = vmatpush1.msra.mxu0 0.0
        %3444 = vmatprep.subr.mxu0 0.0
        %3445 = vmatpush1.msra.mxu0 0.0
        %3446 = vmatprep.mubr.f32.mxu0 0.0
        %3447 = vmatmul.mubr.f32.gmra.mrb[0].mxu0 %v3359
        %v3448 = vpop.f32.mrb[0].mxu0
        %v3449 = vadd.f32 0.0, %v3448
        %v3450 = vpop.f32.mrb[0].mxu0
        %3451 = vmatprep.mubr.f32.mxu0 0.0
        %3452 = vmatmul.mubr.f32.gmra.mrb[0].mxu0 %v3362
        %v3453 = vpop.f32.mrb[0].mxu0
        %v3454 = vadd.f32 0.0, %v3453
        %v3455 = vpop.f32.mrb[0].mxu0
        %3456 = vmatprep.mubr.f32.mxu0 0.0
        %3457 = vmatmul.mubr.f32.gmra.mrb[0].mxu0 %v3365
        %v3458 = vpop.f32.mrb[0].mxu0
        %v3459 = vadd.f32 0.0, %v3458
        %v3460 = vpop.f32.mrb[0].mxu0
        %3461 = vmatprep.mubr.f32.mxu0 0.0
        %3462 = vmatmul.mubr.f32.gmra.mrb[0].mxu0 %v3368
        %v3463 = vpop.f32.mrb[0].mxu0
        %v3464 = vadd.f32 0.0, %v3463
        %v3465 = vpop.f32.mrb[0].mxu0
        %3466 = vmatprep.mubr.f32.mxu0 0.0
        %3467 = vmatmul.mubr.f32.gmra.mrb[0].mxu0 %v3371
        %v3468 = vpop.f32.mrb[0].mxu0
        %v3469 = vadd.f32 0.0, %v3468
        %v3470 = vpop.f32.mrb[0].mxu0
        %3471 = vmatprep.mubr.f32.mxu0 0.0
        %3472 = vmatmul.mubr.f32.gmra.mrb[0].mxu0 %v3374
        %v3473 = vpop.f32.mrb[0].mxu0
        %v3474 = vadd.f32 0.0, %v3473
        %v3475 = vpop.f32.mrb[0].mxu0
        %3476 = vmatprep.mubr.f32.mxu0 0.0
        %3477 = vmatmul.mubr.f32.gmra.mrb[0].mxu0 %v3377
        %v3478 = vpop.f32.mrb[0].mxu0
        %v3479 = vadd.f32 0.0, %v3478
        %v3480 = vpop.f32.mrb[0].mxu0
        %3481 = vmatprep.mubr.f32.mxu0 0.0
        %3482 = vmatmul.mubr.f32.gmra.mrb[0].mxu0 %v3380
        %v3483 = vpop.f32.mrb[0].mxu0
        %v3484 = vadd.f32 0.0, %v3483
        %v3485 = vpop.f32.mrb[0].mxu0
        %3486 = vdwg.mxu0
        %v3487 = vadd.f32 %v3161, %v3449
        %v3488 = vadd.f32 %v3162, %v3454
        %v3489 = vadd.f32 %v3163, %v3459
        %v3490 = vadd.f32 %v3164, %v3464
        %v3491 = vadd.f32 %v3165, %v3469
        %v3492 = vadd.f32 %v3166, %v3474
        %v3493 = vadd.f32 %v3167, %v3479
        %v3494 = vadd.f32 %v3168, %v3484
        %3496 = vrot.lane.b32.xlu0 %v862, 4
        %v3497 = vpop.permute.xlu0 %3496
        %3500 = vrot.lane.b32.xlu0 %v867, 8
        %v3501 = vpop.permute.xlu0 %3500
        %3504 = vrot.lane.b32.xlu0 %v872, 12
        %v3505 = vpop.permute.xlu0 %3504
        %3508 = vrot.lane.b32.xlu0 %v877, 16
        %v3509 = vpop.permute.xlu0 %3508
        %3512 = vrot.lane.b32.xlu0 %v882, 20
        %v3513 = vpop.permute.xlu0 %3512
        %3516 = vrot.lane.b32.xlu0 %v887, 24
        %v3517 = vpop.permute.xlu0 %3516
        %3520 = vrot.lane.b32.xlu0 %v892, 28
        %v3521 = vpop.permute.xlu0 %3520
        %3524 = vrot.lane.b32.xlu0 %v3487, 32
        %v3525 = vpop.permute.xlu0 %3524
        %3528 = vrot.lane.b32.xlu0 %v3488, 42
        %v3529 = vpop.permute.xlu0 %3528
        %3532 = vrot.lane.b32.xlu0 %v3489, 52
        %v3533 = vpop.permute.xlu0 %3532
        %3536 = vrot.lane.b32.xlu0 %v3490, 62
        %v3537 = vpop.permute.xlu0 %3536
        %3540 = vrot.lane.b32.xlu0 %v3491, 72
        %v3541 = vpop.permute.xlu0 %3540
        %3544 = vrot.lane.b32.xlu0 %v3492, 82
        %v3545 = vpop.permute.xlu0 %3544
        %3548 = vrot.lane.b32.xlu0 %v3493, 92
        %v3549 = vpop.permute.xlu0 %3548
        %3552 = vrot.lane.b32.xlu0 %v3494, 102
        %v3553 = vpop.permute.xlu0 %3552
        %v3555 = vsel %vm593, %v857, %v3497
        %v3556 = vsel %vm765, %v3555, %v3501
        %vm3557 = vcmask 97280
        %v3558 = vsel %vm3557, %v3556, %v3505
        %vm3559 = vcmask 130048
        %v3560 = vsel %vm3559, %v3558, %v3509
        %vm3561 = vcmask 162816
        %v3562 = vsel %vm3561, %v3560, %v3513
        %vm3563 = vcmask 195584
        %v3564 = vsel %vm3563, %v3562, %v3517
        %vm3565 = vcmask 228352
        %v3566 = vsel %vm3565, %v3564, %v3521
        %vm3567 = vcmask 261120
        %v3568 = vsel %vm3567, %v3566, %v3525
        %vm3569 = vcmask 343040
        %v3570 = vsel %vm3569, %v3568, %v3529
        %vm3571 = vcmask 424960
        %v3572 = vsel %vm3571, %v3570, %v3533
        %vm3573 = vcmask 506880
        %v3574 = vsel %vm3573, %v3572, %v3537
        %vm3575 = vcmask 588800
        %v3576 = vsel %vm3575, %v3574, %v3541
        %vm3577 = vcmask 670720
        %v3578 = vsel %vm3577, %v3576, %v3545
        %vm3579 = vcmask 752640
        %v3580 = vsel %vm3579, %v3578, %v3549
        %vm3581 = vcmask 834560
        %v3582 = vsel %vm3581, %v3580, %v3553
        %vm3583 = vcmask 916480
        %v3584 = vsel %vm3583, %v3582, 0.0
        %3585 = vst [vmem:[%s401] sm:$0xff] %v3584
        %v3586 = vld [vmem:[#allocation4] sm:$0xff]
        %v3587 = vld [vmem:[#allocation4 + $0x8] sm:$0xff]
        %v3588 = vld [vmem:[#allocation4 + $0x10] sm:$0xff]
        %v3589 = vld [vmem:[#allocation4 + $0x18] sm:$0xff]
        %v3590 = vld [vmem:[#allocation4 + $0x20] sm:$0xff]
        %v3591 = vld [vmem:[#allocation4 + $0x28] sm:$0xff]
        %v3592 = vld [vmem:[#allocation4 + $0x30] sm:$0xff]
        %v3593 = vld [vmem:[#allocation4 + $0x38] sm:$0xff]
        %v3594 = vld [vmem:[#allocation4 + $0x40] sm:$0xff]
        %v3595 = vld [vmem:[#allocation4 + $0x48] sm:$0xff]
        %v3596 = vld [vmem:[#allocation4 + $0x50] sm:$0xff]
        %v3597 = vld [vmem:[#allocation4 + $0x58] sm:$0xff]
        %v3598 = vld [vmem:[#allocation4 + $0x60] sm:$0xff]
        %v3599 = vld [vmem:[#allocation4 + $0x68] sm:$0xff]
        %v3600 = vld [vmem:[#allocation4 + $0x70] sm:$0xff]
        %v3601 = vld [vmem:[#allocation4 + $0x78] sm:$0xff]
        %v3602 = vld [vmem:[#allocation4 + $0x80] sm:$0xff]
        %v3603 = vld [vmem:[#allocation4 + $0x88] sm:$0xff]
        %v3604 = vld [vmem:[#allocation4 + $0x90] sm:$0xff]
        %v3605 = vld [vmem:[#allocation4 + $0x98] sm:$0xff]
        %v3606 = vld [vmem:[#allocation4 + $0xa0] sm:$0xff]
        %v3607 = vld [vmem:[#allocation4 + $0xa8] sm:$0xff]
        %v3608 = vld [vmem:[#allocation4 + $0xb0] sm:$0xff]
        %v3609 = vld [vmem:[#allocation4 + $0xb8] sm:$0xff]
        %v3610 = vld [vmem:[#allocation4 + $0xc0] sm:$0xff]
        %v3611 = vld [vmem:[#allocation4 + $0xc8] sm:$0xff]
        %v3612 = vld [vmem:[#allocation4 + $0xd0] sm:$0xff]
        %v3613 = vld [vmem:[#allocation4 + $0xd8] sm:$0xff]
        %v3614 = vld [vmem:[#allocation4 + $0xe0] sm:$0xff]
        %v3615 = vld [vmem:[#allocation4 + $0xe8] sm:$0xff]
        %v3616 = vld [vmem:[#allocation4 + $0xf0] sm:$0xff]
        %v3617 = vld [vmem:[#allocation4 + $0xf8] sm:$0xff]
        %v3618 = vld [vmem:[%s5] sm:$0x3]
        %v3620 = vlaneseq
        %v3621 = vshrl.u32 %v3620, 7
        %v3622 = vsub.s32 0, %v3621
        %v3623 = vrot.slane %v3618, %v3622
        %v3624 = vlaneseq
        %v3625 = vshrl.u32 %v3624, 7
        %v3626 = vsub.s32 1, %v3625
        %v3627 = vrot.slane %v3618, %v3626
        %3630 = vmatprep.subr.mxu0 %v3587
        %3631 = vmatpush1.msra.mxu0 %v3586
        %3632 = vmatprep.subr.mxu0 %v3589
        %3633 = vmatpush1.msra.mxu0 %v3588
        %3634 = vmatprep.subr.mxu0 %v3591
        %3635 = vmatpush1.msra.mxu0 %v3590
        %3636 = vmatprep.subr.mxu0 %v3593
        %3637 = vmatpush1.msra.mxu0 %v3592
        %3638 = vmatprep.subr.mxu0 %v3595
        %3639 = vmatpush1.msra.mxu0 %v3594
        %3640 = vmatprep.subr.mxu0 %v3597
        %3641 = vmatpush1.msra.mxu0 %v3596
        %3642 = vmatprep.subr.mxu0 %v3599
        %3643 = vmatpush1.msra.mxu0 %v3598
        %3644 = vmatprep.subr.mxu0 %v3601
        %3645 = vmatpush1.msra.mxu0 %v3600
        %3646 = vmatprep.subr.mxu0 %v3603
        %3647 = vmatpush1.msra.mxu0 %v3602
        %3648 = vmatprep.subr.mxu0 %v3605
        %3649 = vmatpush1.msra.mxu0 %v3604
        %3650 = vmatprep.subr.mxu0 %v3607
        %3651 = vmatpush1.msra.mxu0 %v3606
        %3652 = vmatprep.subr.mxu0 %v3609
        %3653 = vmatpush1.msra.mxu0 %v3608
        %3654 = vmatprep.subr.mxu0 %v3611
        %3655 = vmatpush1.msra.mxu0 %v3610
        %3656 = vmatprep.subr.mxu0 %v3613
        %3657 = vmatpush1.msra.mxu0 %v3612
        %3658 = vmatprep.subr.mxu0 %v3615
        %3659 = vmatpush1.msra.mxu0 %v3614
        %3660 = vmatprep.subr.mxu0 %v3617
        %3661 = vmatpush1.msra.mxu0 %v3616
        %3662 = vmatprep.subr.mxu0 0.0
        %3663 = vmatpush1.msra.mxu0 0.0
        %3664 = vmatprep.subr.mxu0 0.0
        %3665 = vmatpush1.msra.mxu0 0.0
        %3666 = vmatprep.subr.mxu0 0.0
        %3667 = vmatpush1.msra.mxu0 0.0
        %3668 = vmatprep.subr.mxu0 0.0
        %3669 = vmatpush1.msra.mxu0 0.0
        %3670 = vmatprep.subr.mxu0 0.0
        %3671 = vmatpush1.msra.mxu0 0.0
        %3672 = vmatprep.subr.mxu0 0.0
        %3673 = vmatpush1.msra.mxu0 0.0
        %3674 = vmatprep.subr.mxu0 0.0
        %3675 = vmatpush1.msra.mxu0 0.0
        %3676 = vmatprep.subr.mxu0 0.0
        %3677 = vmatpush1.msra.mxu0 0.0
        %3678 = vmatprep.subr.mxu0 0.0
        %3679 = vmatpush1.msra.mxu0 0.0
        %3680 = vmatprep.subr.mxu0 0.0
        %3681 = vmatpush1.msra.mxu0 0.0
        %3682 = vmatprep.subr.mxu0 0.0
        %3683 = vmatpush1.msra.mxu0 0.0
        %3684 = vmatprep.subr.mxu0 0.0
        %3685 = vmatpush1.msra.mxu0 0.0
        %3686 = vmatprep.subr.mxu0 0.0
        %3687 = vmatpush1.msra.mxu0 0.0
        %3688 = vmatprep.subr.mxu0 0.0
        %3689 = vmatpush1.msra.mxu0 0.0
        %3690 = vmatprep.subr.mxu0 0.0
        %3691 = vmatpush1.msra.mxu0 0.0
        %3692 = vmatprep.subr.mxu0 0.0
        %3693 = vmatpush1.msra.mxu0 0.0
        %3694 = vmatprep.mubr.f32.mxu0 0.0
        %3695 = vmatmul.mubr.f32.gmra.mrb[0].mxu0 %v3584
        %v3696 = vpop.f32.mrb[0].mxu0
        %v3697 = vadd.f32 %v3623, %v3696
        %v3698 = vpop.f32.mrb[0].mxu0
        %v3699 = vadd.f32 %v3627, %v3698
        %3700 = vdwg.mxu0
        %v3701 = vmax.f32 %v3697, 0.0
        %v3702 = vmax.f32 %v3699, 0.0
        %v3703 = vmin.f32 %v3697, 0.0
        %v3704 = vmin.f32 %v3699, 0.0
        %v3705 = vrcp.pop 0.1
        %v3706 = vmul.f32 %v3703, %v3705
        %v3707 = vmul.f32 %v3704, %v3705
        %v3708 = vmul.f32 %v3706, 1.442695
        %v3709 = vpow.pop %v3708
        %v3710 = vmul.f32 %v3707, 1.442695
        %v3711 = vpow.pop %v3710
        %v3712 = vsub.f32 %v3709, 1.0
        %v3713 = vsub.f32 %v3711, 1.0
        %v3714 = vmul.f32 %v3712, 0.1
        %v3715 = vmul.f32 %v3713, 0.1
        %v3716 = vadd.f32 %v3701, %v3714
        %v3717 = vadd.f32 %v3702, %v3715
        %v3718 = vld [vmem:[#allocation7] sm:$0xff]
        %v3719 = vld [vmem:[#allocation7 + $0x8] sm:$0xff]
        %v3720 = vld [vmem:[#allocation7 + $0x10] sm:$0xff]
        %v3721 = vld [vmem:[#allocation7 + $0x18] sm:$0xff]
        %v3722 = vld [vmem:[#allocation7 + $0x20] sm:$0xff]
        %v3723 = vld [vmem:[#allocation7 + $0x28] sm:$0xff]
        %v3724 = vld [vmem:[#allocation7 + $0x30] sm:$0xff]
        %v3725 = vld [vmem:[#allocation7 + $0x38] sm:$0xff]
        %v3726 = vld [vmem:[#allocation7 + $0x40] sm:$0xff]
        %v3727 = vld [vmem:[#allocation7 + $0x48] sm:$0xff]
        %v3728 = vld [vmem:[#allocation7 + $0x50] sm:$0xff]
        %v3729 = vld [vmem:[#allocation7 + $0x58] sm:$0xff]
        %v3730 = vld [vmem:[#allocation7 + $0x60] sm:$0xff]
        %v3731 = vld [vmem:[#allocation7 + $0x68] sm:$0xff]
        %v3732 = vld [vmem:[#allocation7 + $0x70] sm:$0xff]
        %v3733 = vld [vmem:[#allocation7 + $0x78] sm:$0xff]
        %v3734 = vld [vmem:[#allocation7 + $0x80] sm:$0xff]
        %v3735 = vld [vmem:[#allocation7 + $0x88] sm:$0xff]
        %v3736 = vld [vmem:[#allocation7 + $0x90] sm:$0xff]
        %v3737 = vld [vmem:[#allocation7 + $0x98] sm:$0xff]
        %v3738 = vld [vmem:[#allocation7 + $0xa0] sm:$0xff]
        %v3739 = vld [vmem:[#allocation7 + $0xa8] sm:$0xff]
        %v3740 = vld [vmem:[#allocation7 + $0xb0] sm:$0xff]
        %v3741 = vld [vmem:[#allocation7 + $0xb8] sm:$0xff]
        %v3742 = vld [vmem:[#allocation7 + $0xc0] sm:$0xff]
        %v3743 = vld [vmem:[#allocation7 + $0xc8] sm:$0xff]
        %v3744 = vld [vmem:[#allocation7 + $0xd0] sm:$0xff]
        %v3745 = vld [vmem:[#allocation7 + $0xd8] sm:$0xff]
        %v3746 = vld [vmem:[#allocation7 + $0xe0] sm:$0xff]
        %v3747 = vld [vmem:[#allocation7 + $0xe8] sm:$0xff]
        %v3748 = vld [vmem:[#allocation7 + $0xf0] sm:$0xff]
        %v3749 = vld [vmem:[#allocation7 + $0xf8] sm:$0xff]
        %v3750 = vld [vmem:[%s7] sm:$0x1]
        %v3752 = vlaneseq
        %v3753 = vshrl.u32 %v3752, 7
        %v3754 = vsub.s32 0, %v3753
        %v3755 = vrot.slane %v3750, %v3754
        %3757 = vmatprep.subr.mxu0 0.0
        %3758 = vmatpush1.msra.mxu0 %v3718
        %3759 = vmatprep.subr.mxu0 0.0
        %3760 = vmatpush1.msra.mxu0 %v3719
        %3761 = vmatprep.subr.mxu0 0.0
        %3762 = vmatpush1.msra.mxu0 %v3720
        %3763 = vmatprep.subr.mxu0 0.0
        %3764 = vmatpush1.msra.mxu0 %v3721
        %3765 = vmatprep.subr.mxu0 0.0
        %3766 = vmatpush1.msra.mxu0 %v3722
        %3767 = vmatprep.subr.mxu0 0.0
        %3768 = vmatpush1.msra.mxu0 %v3723
        %3769 = vmatprep.subr.mxu0 0.0
        %3770 = vmatpush1.msra.mxu0 %v3724
        %3771 = vmatprep.subr.mxu0 0.0
        %3772 = vmatpush1.msra.mxu0 %v3725
        %3773 = vmatprep.subr.mxu0 0.0
        %3774 = vmatpush1.msra.mxu0 %v3726
        %3775 = vmatprep.subr.mxu0 0.0
        %3776 = vmatpush1.msra.mxu0 %v3727
        %3777 = vmatprep.subr.mxu0 0.0
        %3778 = vmatpush1.msra.mxu0 %v3728
        %3779 = vmatprep.subr.mxu0 0.0
        %3780 = vmatpush1.msra.mxu0 %v3729
        %3781 = vmatprep.subr.mxu0 0.0
        %3782 = vmatpush1.msra.mxu0 %v3730
        %3783 = vmatprep.subr.mxu0 0.0
        %3784 = vmatpush1.msra.mxu0 %v3731
        %3785 = vmatprep.subr.mxu0 0.0
        %3786 = vmatpush1.msra.mxu0 %v3732
        %3787 = vmatprep.subr.mxu0 0.0
        %3788 = vmatpush1.msra.mxu0 %v3733
        %3789 = vmatprep.subr.mxu0 0.0
        %3790 = vmatpush1.msra.mxu0 %v3734
        %3791 = vmatprep.subr.mxu0 0.0
        %3792 = vmatpush1.msra.mxu0 %v3735
        %3793 = vmatprep.subr.mxu0 0.0
        %3794 = vmatpush1.msra.mxu0 %v3736
        %3795 = vmatprep.subr.mxu0 0.0
        %3796 = vmatpush1.msra.mxu0 %v3737
        %3797 = vmatprep.subr.mxu0 0.0
        %3798 = vmatpush1.msra.mxu0 %v3738
        %3799 = vmatprep.subr.mxu0 0.0
        %3800 = vmatpush1.msra.mxu0 %v3739
        %3801 = vmatprep.subr.mxu0 0.0
        %3802 = vmatpush1.msra.mxu0 %v3740
        %3803 = vmatprep.subr.mxu0 0.0
        %3804 = vmatpush1.msra.mxu0 %v3741
        %3805 = vmatprep.subr.mxu0 0.0
        %3806 = vmatpush1.msra.mxu0 %v3742
        %3807 = vmatprep.subr.mxu0 0.0
        %3808 = vmatpush1.msra.mxu0 %v3743
        %3809 = vmatprep.subr.mxu0 0.0
        %3810 = vmatpush1.msra.mxu0 %v3744
        %3811 = vmatprep.subr.mxu0 0.0
        %3812 = vmatpush1.msra.mxu0 %v3745
        %3813 = vmatprep.subr.mxu0 0.0
        %3814 = vmatpush1.msra.mxu0 %v3746
        %3815 = vmatprep.subr.mxu0 0.0
        %3816 = vmatpush1.msra.mxu0 %v3747
        %3817 = vmatprep.subr.mxu0 0.0
        %3818 = vmatpush1.msra.mxu0 %v3748
        %3819 = vmatprep.subr.mxu0 0.0
        %3820 = vmatpush1.msra.mxu0 %v3749
        %3821 = vmatprep.mubr.f32.mxu0 %v3717
        %3822 = vmatmul.mubr.f32.gmra.mrb[0].mxu0 %v3716
        %v3823 = vpop.f32.mrb[0].mxu0
        %v3824 = vadd.f32 %v3755, %v3823
        %v3825 = vpop.f32.mrb[0].mxu0
        %3826 = vdwg.mxu0
        %v3827 = vmax.f32 %v3824, 0.0
        %v3828 = vmin.f32 %v3824, 0.0
        %v3829 = vmul.f32 %v3828, %v3705
        %v3830 = vmul.f32 %v3829, 1.442695
        %v3831 = vpow.pop %v3830
        %v3832 = vsub.f32 %v3831, 1.0
        %v3833 = vmul.f32 %v3832, 0.1
        %v3834 = vadd.f32 %v3827, %v3833
        %v3835 = vld [vmem:[%s8] sm:$0xff]
        %v3836 = vld [vmem:[%s8 + $0x8] sm:$0xff]
        %v3837 = vld [vmem:[%s8 + $0x10] sm:$0xff]
        %v3838 = vld [vmem:[%s8 + $0x18] sm:$0xff]
        %v3839 = vld [vmem:[%s8 + $0x20] sm:$0xff]
        %v3840 = vld [vmem:[%s8 + $0x28] sm:$0xff]
        %v3841 = vld [vmem:[%s8 + $0x30] sm:$0xff]
        %v3842 = vld [vmem:[%s8 + $0x38] sm:$0xff]
        %v3843 = vld [vmem:[%s8 + $0x40] sm:$0xff]
        %v3844 = vld [vmem:[%s8 + $0x48] sm:$0xff]
        %v3845 = vld [vmem:[%s8 + $0x50] sm:$0xff]
        %v3846 = vld [vmem:[%s8 + $0x58] sm:$0xff]
        %v3847 = vld [vmem:[%s8 + $0x60] sm:$0xff]
        %v3848 = vld [vmem:[%s8 + $0x68] sm:$0xff]
        %v3849 = vld [vmem:[%s8 + $0x70] sm:$0xff]
        %v3850 = vld [vmem:[%s8 + $0x78] sm:$0xff]
        %v3851 = vld [vmem:[%s9] sm:$0x1]
        %v3853 = vlaneseq
        %v3854 = vshrl.u32 %v3853, 7
        %v3855 = vsub.s32 0, %v3854
        %v3856 = vrot.slane %v3851, %v3855
        %3858 = vmatprep.subr.mxu0 0.0
        %3859 = vmatpush1.msra.mxu0 %v3835
        %3860 = vmatprep.subr.mxu0 0.0
        %3861 = vmatpush1.msra.mxu0 %v3836
        %3862 = vmatprep.subr.mxu0 0.0
        %3863 = vmatpush1.msra.mxu0 %v3837
        %3864 = vmatprep.subr.mxu0 0.0
        %3865 = vmatpush1.msra.mxu0 %v3838
        %3866 = vmatprep.subr.mxu0 0.0
        %3867 = vmatpush1.msra.mxu0 %v3839
        %3868 = vmatprep.subr.mxu0 0.0
        %3869 = vmatpush1.msra.mxu0 %v3840
        %3870 = vmatprep.subr.mxu0 0.0
        %3871 = vmatpush1.msra.mxu0 %v3841
        %3872 = vmatprep.subr.mxu0 0.0
        %3873 = vmatpush1.msra.mxu0 %v3842
        %3874 = vmatprep.subr.mxu0 0.0
        %3875 = vmatpush1.msra.mxu0 %v3843
        %3876 = vmatprep.subr.mxu0 0.0
        %3877 = vmatpush1.msra.mxu0 %v3844
        %3878 = vmatprep.subr.mxu0 0.0
        %3879 = vmatpush1.msra.mxu0 %v3845
        %3880 = vmatprep.subr.mxu0 0.0
        %3881 = vmatpush1.msra.mxu0 %v3846
        %3882 = vmatprep.subr.mxu0 0.0
        %3883 = vmatpush1.msra.mxu0 %v3847
        %3884 = vmatprep.subr.mxu0 0.0
        %3885 = vmatpush1.msra.mxu0 %v3848
        %3886 = vmatprep.subr.mxu0 0.0
        %3887 = vmatpush1.msra.mxu0 %v3849
        %3888 = vmatprep.subr.mxu0 0.0
        %3889 = vmatpush1.msra.mxu0 %v3850
        %3890 = vmatprep.subr.mxu0 0.0
        %3891 = vmatpush1.msra.mxu0 0.0
        %3892 = vmatprep.subr.mxu0 0.0
        %3893 = vmatpush1.msra.mxu0 0.0
        %3894 = vmatprep.subr.mxu0 0.0
        %3895 = vmatpush1.msra.mxu0 0.0
        %3896 = vmatprep.subr.mxu0 0.0
        %3897 = vmatpush1.msra.mxu0 0.0
        %3898 = vmatprep.subr.mxu0 0.0
        %3899 = vmatpush1.msra.mxu0 0.0
        %3900 = vmatprep.subr.mxu0 0.0
        %3901 = vmatpush1.msra.mxu0 0.0
        %3902 = vmatprep.subr.mxu0 0.0
        %3903 = vmatpush1.msra.mxu0 0.0
        %3904 = vmatprep.subr.mxu0 0.0
        %3905 = vmatpush1.msra.mxu0 0.0
        %3906 = vmatprep.subr.mxu0 0.0
        %3907 = vmatpush1.msra.mxu0 0.0
        %3908 = vmatprep.subr.mxu0 0.0
        %3909 = vmatpush1.msra.mxu0 0.0
        %3910 = vmatprep.subr.mxu0 0.0
        %3911 = vmatpush1.msra.mxu0 0.0
        %3912 = vmatprep.subr.mxu0 0.0
        %3913 = vmatpush1.msra.mxu0 0.0
        %3914 = vmatprep.subr.mxu0 0.0
        %3915 = vmatpush1.msra.mxu0 0.0
        %3916 = vmatprep.subr.mxu0 0.0
        %3917 = vmatpush1.msra.mxu0 0.0
        %3918 = vmatprep.subr.mxu0 0.0
        %3919 = vmatpush1.msra.mxu0 0.0
        %3920 = vmatprep.subr.mxu0 0.0
        %3921 = vmatpush1.msra.mxu0 0.0
        %3922 = vmatprep.mubr.f32.mxu0 0.0
        %3923 = vmatmul.mubr.f32.gmra.mrb[0].mxu0 %v3834
        %v3924 = vpop.f32.mrb[0].mxu0
        %v3925 = vadd.f32 %v3856, %v3924
        %v3926 = vpop.f32.mrb[0].mxu0
        %3927 = vdwg.mxu0
        %v3928 = vmul.f32 %v3925, %v419
        %v3929 = vsel %vm593, %v3928, 0.0
        %3930 = vadd.xlane.f32.xlu0 %v3929
        %v3931 = vpop.xlane.xlu0 %3930
        %v3932 = vrot.slane %v3931, 4
        %v3933 = vadd.f32 %v3931, %v3932
        %v3934 = vrot.slane %v3933, 2
        %v3935 = vadd.f32 %v3933, %v3934
        %v3936 = vrot.slane %v3935, 1
        %v3937 = vadd.f32 %v3935, %v3936
        %vm3938 = vcmask 0
        %3939 = vst.msk [vmem:[%s417] sm:$0x1] %vm3938, %v3937
        %s3940 = sand.u32 %s241, 1
        %s3941 = scalar_lea.sflag [#allocation6], %s3940
        %s3942 = sand.u32 %s241, 1
        %s3943 = smul.addr %s3942, 8
        %s3944 = scalar_lea.vmem [#allocation9], %s3943
        %p3945 = scmp.lt.s32.totalorder %s34, 1
        %s3946 = scalar_select %p3945, %s34, 1
        %s3947 = scalar_lea.vmem %s11, %s3946
        // Predicated region
        $region65: #{tpu_custom_call.1} parent=55 // pred_check
          %p3948 = pneg %p251
        $region66: #{tpu_custom_call.1} parent=55 // pred_check_branch
          %3950 = sbr.rel (%p3948) target = $region68
        $region67: #{tpu_custom_call.1} parent=55 // pred_region
          %s3952 = ssub.s32 128, 128
          %3953 = vsyncadd %s3941, %s3952
          %s3954 = smul.addr %s34, 128
          %s3955 = scalar_lea.hbm %s10, %s3954
          %s3957 = sshll.u32 %s3944, 4
          %s3958 = int_to_ptr.vmem [resolvable:$true] %s3957
          %3960 = dma.vmem_to_hbm [thread:$0]  %s3958, 128, %s3955, %s3941
        $region68: #{tpu_custom_call.1} parent=55 // pred_fallthru
          _
        // Predicated region
        $region69: #{tpu_custom_call.1} parent=55 // pred_check
          %p3961 = pneg %p277
        $region70: #{tpu_custom_call.1} parent=55 // pred_check_branch
          %3963 = sbr.rel (%p3961) target = $region72
        $region71: #{tpu_custom_call.1} parent=55 // pred_region
          _
        $region72: #{tpu_custom_call.1} parent=55 // pred_fallthru
          _
      $region56: #{tpu_custom_call.1} parent=5 // pred_fallthru
        _
      %p3964 = scmp.le.s32.totalorder 2, %s29
      // Predicated region
      $region73: #{tpu_custom_call.1} parent=5 // pred_check
        %p3965 = pneg %p3964
      $region74: #{tpu_custom_call.1} parent=5 // pred_check_branch
        %3967 = sbr.rel (%p3965) target = $region76
      $region75: #{tpu_custom_call.1} parent=5 // pred_region
        %s3968 = ssub.s32 %s29, 2
        // Predicated region
        $region77: #{tpu_custom_call.1} parent=75 // pred_check
          %p3969 = pneg %p257
        $region78: #{tpu_custom_call.1} parent=75 // pred_check_branch
          %3971 = sbr.rel (%p3969) target = $region80
        $region79: #{tpu_custom_call.1} parent=75 // pred_region
          %s3972 = sand.u32 %s242, 1
          %s3973 = scalar_lea.sflag [#allocation6], %s3972
          %s3974 = sand.u32 %s242, 1
          %s3975 = smul.addr %s3974, 8
          %s3976 = scalar_lea.vmem [#allocation9], %s3975
          %3977 = dma.done %s3973, 128
        $region80: #{tpu_custom_call.1} parent=75 // pred_fallthru
          _
        // Predicated region
        $region81: #{tpu_custom_call.1} parent=75 // pred_check
          %p3978 = pneg %p283
        $region82: #{tpu_custom_call.1} parent=75 // pred_check_branch
          %3980 = sbr.rel (%p3978) target = $region84
        $region83: #{tpu_custom_call.1} parent=75 // pred_region
          %p3981 = scmp.lt.s32.totalorder %s35, 1
          %s3982 = scalar_select %p3981, %s35, 1
          %s3983 = scalar_lea.vmem %s11, %s3982
        $region84: #{tpu_custom_call.1} parent=75 // pred_fallthru
          _
      $region76: #{tpu_custom_call.1} parent=5 // pred_fallthru
        _
    $region6: #{tpu_custom_call.1} parent=1 // loop_footer
      %s33 = sadd.s32 1, %s29
    $region7: #{tpu_custom_call.1} parent=1 // loop_footer_branch
      %28 = sbr.rel target = $region3
    $region8: #{tpu_custom_call.1} parent=1 // loop_exit
      _
    %3984 = vsyncpa [#allocation5], 1
    %s3985 = scalar_lea.sflag [#allocation5], 1
    %3986 = vsyncpa %s3985, 1
    %3987 = vsyncpa [#allocation8], 1
    %3988 = vsyncpa [#allocation6], 1
    %s3989 = scalar_lea.sflag [#allocation6], 1
    %3990 = vsyncpa %s3989, 1

</llo_original>
